<compile_context>
chip_gen: v7x
topology: tpu7x:2x2x1
jax: 0.10.0
libtpu: 0.0.40
codegen_flags: <defaults>
</compile_context>

<pallas_src>
import jax
import jax.numpy as jnp
from jax import lax
from jax.experimental import pallas as pl
from jax.experimental.pallas import tpu as pltpu

# ---------------------------------------------------------------------------
# Static LeNet dimensions (32x32 single-channel input, as the 400-d fc1 implies)
# ---------------------------------------------------------------------------
_H0 = 32                              # input H = W
_K = 5                                # conv kernel size
_OC1, _OH1 = 6, _H0 - _K + 1          # 6, 28
_PH1 = _OH1 // 2                      # 14
_P1ROWS = 16                          # per-image row pad after pool1 (>=14, %8==0)
_OC2, _OH2 = 16, _PH1 - _K + 1        # 16, 10
_PH2 = _OH2 // 2                      # 5
_FC1, _FC2, _NCLS = 120, 84, 10


# ---------------------------------------------------------------------------
# Fused kernel: one grid step == TB images; everything stays in VMEM/vregs.
# ---------------------------------------------------------------------------
def _lenet_kernel(x_ref, m1_ref, b1_ref, m2_ref, b2_ref,
                  r1_ref, c1_ref, r2_ref, c2_ref,
                  wf1_ref, bf1_ref, wf2_ref, bf2_ref, wf3_ref, bf3_ref,
                  out_ref):
    f32, bf16 = jnp.float32, jnp.bfloat16
    tb = out_ref.shape[0]                                   # batch tile (static)

    def shift_up(a, k):
        # rows shifted up by k within the merged (image-block, row) layout;
        # wrapped tail rows are junk that the pool row-selectors later drop.
        if k == 0:
            return a
        return jnp.concatenate([a[k:, :], a[:k, :]], axis=0)

    # ---- conv1 + bias + relu  (single fused K=160 matmul) -----------------
    # x rows: b*32 + h, lane = w.  lhs1[b*32+oh, kh*32+w] = x[b, oh+kh, w]
    x = x_ref[...]                                           # (tb*32, 32) f32
    lhs1 = jnp.concatenate([shift_up(x, kh) for kh in range(_K)], axis=-1)
    y1 = jnp.dot(lhs1.astype(bf16), m1_ref[...],
                 preferred_element_type=f32)                 # (tb*32, 168)
    y1 = jnp.maximum(y1 + b1_ref[...], 0.0).astype(bf16)     # lane = oc*28 + ow

    # ---- pool1 (exact 0/1 selection matmuls; selectors precomputed) -------
    # rows: b*32+2ph / +1  ->  b*16+ph (ph<14, rows 14..15 zero-padded)
    rm = jnp.maximum(jnp.dot(r1_ref[0], y1, preferred_element_type=f32),
                     jnp.dot(r1_ref[1], y1, preferred_element_type=f32)).astype(bf16)
    p1 = jnp.maximum(jnp.dot(rm, c1_ref[0], preferred_element_type=f32),
                     jnp.dot(rm, c1_ref[1], preferred_element_type=f32))
    # p1: (tb*16, 84) f32, lane = c*14 + w

    # ---- conv2 + bias + relu  (single fused K=420 matmul) -----------------
    lhs2 = jnp.concatenate([shift_up(p1, kh) for kh in range(_K)], axis=-1)
    y2 = jnp.dot(lhs2.astype(bf16), m2_ref[...],
                 preferred_element_type=f32)                 # (tb*16, 160)
    y2 = jnp.maximum(y2 + b2_ref[...], 0.0).astype(bf16)     # lane = oc*10 + ow

    # ---- pool2 (row selectors emit ph-major rows: row = ph*tb + b) --------
    rm = jnp.maximum(jnp.dot(r2_ref[0], y2, preferred_element_type=f32),
                     jnp.dot(r2_ref[1], y2, preferred_element_type=f32)).astype(bf16)
    p2 = jnp.maximum(jnp.dot(rm, c2_ref[0], preferred_element_type=f32),
                     jnp.dot(rm, c2_ref[1], preferred_element_type=f32)).astype(bf16)
    # p2: (5*tb, 80), row = ph*tb + b, lane = oc*5 + pw

    # ---- fc1: accumulate over ph with M=tb matmuls (aligned row slices) ----
    h = jnp.dot(p2[0:tb, :], wf1_ref[0], preferred_element_type=f32)
    for ph in range(1, _PH2):
        h = h + jnp.dot(p2[ph * tb:(ph + 1) * tb, :], wf1_ref[ph],
                        preferred_element_type=f32)
    h = jnp.maximum(h + bf1_ref[...], 0.0).astype(bf16)      # (tb, 120)

    # ---- fc2 + relu, fc3 ---------------------------------------------------
    h = jnp.maximum(jnp.dot(h, wf2_ref[...], preferred_element_type=f32)
                    + bf2_ref[...], 0.0).astype(bf16)         # (tb, 84)
    logits = jnp.dot(h, wf3_ref[...], preferred_element_type=f32) + bf3_ref[...]

    # ---- softmax over the 10 real lanes ------------------------------------
    m = jnp.max(logits, axis=-1, keepdims=True)
    e = jnp.exp(logits - m)
    s = jnp.sum(e, axis=-1, keepdims=True)
    out_ref[...] = (e * pl.reciprocal(s, approx=False)).astype(out_ref.dtype)


# ---------------------------------------------------------------------------
# Forward pass (single fused, batch-tiled pallas_call)
# ---------------------------------------------------------------------------
def lenet_forward(kparams, x):
    """x: (B, 1, 32, 32) float32 NCHW -> (B, 10) softmax probabilities.
    `kparams` must come from prepare_params() (which fixes the batch tile)."""
    B, C, H, W = x.shape
    assert (C, H, W) == (1, _H0, _H0)
    kp = kparams
    tb = kp["r1"].shape[1] // _P1ROWS                 # batch tile baked into selectors
    b_pad = ((B + tb - 1) // tb) * tb
    if b_pad != B:
        x = jnp.pad(x, ((0, b_pad - B), (0, 0), (0, 0), (0, 0)))
    # Free XLA-side flatten: rows b*32 + h, lane = w -> contiguous input blocks.
    x2 = x.reshape(b_pad * _H0, _H0)

    out = pl.pallas_call(
        _lenet_kernel,
        out_shape=jax.ShapeDtypeStruct((b_pad, _NCLS), jnp.float32),
        grid=(b_pad // tb,),
        in_specs=[
            pl.BlockSpec((tb * _H0, _H0), lambda b: (b, 0)),           # x tile
            pl.BlockSpec(kp["m1"].shape, lambda b: (0, 0)),            # (160, 168)
            pl.BlockSpec(kp["b1"].shape, lambda b: (0, 0)),            # (1, 168)
            pl.BlockSpec(kp["m2"].shape, lambda b: (0, 0)),            # (420, 160)
            pl.BlockSpec(kp["b2"].shape, lambda b: (0, 0)),            # (1, 160)
            pl.BlockSpec(kp["r1"].shape, lambda b: (0, 0, 0)),         # (2, 16tb, 32tb)
            pl.BlockSpec(kp["c1"].shape, lambda b: (0, 0, 0)),         # (2, 168, 84)
            pl.BlockSpec(kp["r2"].shape, lambda b: (0, 0, 0)),         # (2, 5tb, 16tb)
            pl.BlockSpec(kp["c2"].shape, lambda b: (0, 0, 0)),         # (2, 160, 80)
            pl.BlockSpec(kp["wf1"].shape, lambda b: (0, 0, 0)),        # (5, 80, 120)
            pl.BlockSpec(kp["bf1"].shape, lambda b: (0, 0)),           # (1, 120)
            pl.BlockSpec(kp["wf2"].shape, lambda b: (0, 0)),           # (120, 84)
            pl.BlockSpec(kp["bf2"].shape, lambda b: (0, 0)),           # (1, 84)
            pl.BlockSpec(kp["wf3"].shape, lambda b: (0, 0)),           # (84, 10)
            pl.BlockSpec(kp["bf3"].shape, lambda b: (0, 0)),           # (1, 10)
        ],
        out_specs=pl.BlockSpec((tb, _NCLS), lambda b: (b, 0)),
        compiler_params=pltpu.CompilerParams(
            dimension_semantics=("parallel",)),
    )(x2, kp["m1"], kp["b1"], kp["m2"], kp["b2"],
      kp["r1"], kp["c1"], kp["r2"], kp["c2"],
      kp["wf1"], kp["bf1"], kp["wf2"], kp["bf2"], kp["wf3"], kp["bf3"])
    return out[:B]


# ---------------------------------------------------------------------------
# One-time parameter / selector preparation (torch layout -> kernel layout)
# ---------------------------------------------------------------------------
def _conv_band_matrices(w, w_in):
    """w: (OC, C, KH, KW) -> (KH, C*w_in, OC*OW) band matrices with
    M[kh, c*w_in + wt, oc*OW + ow] = w[oc, c, kh, wt - ow] (0 out of range)."""
    OC, C, KH, KW = w.shape
    OW = w_in - KW + 1
    wt = jnp.arange(w_in)
    kw = jnp.arange(KW)
    ow = jnp.arange(OW)
    sel = (wt[:, None, None] == ow[None, None, :] + kw[None, :, None]).astype(w.dtype)
    m = jnp.einsum("ochk,tku->hctou", w, sel,
                   precision=jax.lax.Precision.HIGHEST)      # (KH, C, w_in, OC, OW)
    return m.reshape(KH, C * w_in, OC * OW)


def _lane_selectors(n_in):
    """(2, n_in, n_in//2) with even[l, j] = (l == 2j), odd[l, j] = (l == 2j+1)."""
    l = jnp.arange(n_in)[:, None]
    j = jnp.arange(n_in // 2)[None, :]
    return jnp.stack([(l == 2 * j), (l == 2 * j + 1)]).astype(jnp.bfloat16)


def _pool1_row_selectors(tb):
    """(2, 16*tb, 32*tb): out row b*16+ph <- in rows b*32+2ph / +1 (ph<14)."""
    out_idx = jnp.arange(_P1ROWS * tb)
    b, ph = out_idx // _P1ROWS, out_idx % _P1ROWS
    valid = ph < _PH1
    src = b * _H0 + 2 * ph
    cols = jnp.arange(_H0 * tb)[None, :]
    even = (cols == src[:, None]) & valid[:, None]
    odd = (cols == (src + 1)[:, None]) & valid[:, None]
    return jnp.stack([even, odd]).astype(jnp.bfloat16)


def _pool2_row_selectors(tb):
    """(2, 5*tb, 16*tb): out row ph*tb+b (ph-major) <- in rows b*16+2ph / +1."""
    out_idx = jnp.arange(_PH2 * tb)
    ph, b = out_idx // tb, out_idx % tb
    src = b * _P1ROWS + 2 * ph
    cols = jnp.arange(_P1ROWS * tb)[None, :]
    even = (cols == src[:, None])
    odd = (cols == (src + 1)[:, None])
    return jnp.stack([even, odd]).astype(jnp.bfloat16)


def prepare_params(params, tb=8):
    """Run once at init: builds bf16 weight/selector layouts the kernel consumes.
    `tb` is the batch tile (multiple of 8); it is baked into the pool selectors."""
    assert tb % 8 == 0 and tb >= 8
    p = params
    bf16, f32 = jnp.bfloat16, jnp.float32
    m1 = _conv_band_matrices(p["conv1_w"], _H0).reshape(_K * _H0, _OC1 * _OH1)
    m2 = _conv_band_matrices(p["conv2_w"], _PH1).reshape(
        _K * _OC1 * _PH1, _OC2 * _OH2)
    wf1 = (p["fc1_w"].reshape(_FC1, _OC2, _PH2, _PH2)
           .transpose(2, 1, 3, 0)                            # (ph, oc, pw, n)
           .reshape(_PH2, _OC2 * _PH2, _FC1))                # (5, 80, 120)
    return {
        "m1": m1.astype(bf16),                               # (160, 168)
        "b1": jnp.repeat(p["conv1_b"], _OH1)[None, :].astype(f32),
        "m2": m2.astype(bf16),                               # (420, 160)
        "b2": jnp.repeat(p["conv2_b"], _OH2)[None, :].astype(f32),
        "r1": _pool1_row_selectors(tb),                      # (2, 16tb, 32tb)
        "c1": _lane_selectors(_OC1 * _OH1),                  # (2, 168, 84)
        "r2": _pool2_row_selectors(tb),                      # (2, 5tb, 16tb)
        "c2": _lane_selectors(_OC2 * _OH2),                  # (2, 160, 80)
        "wf1": wf1.astype(bf16),                             # (5, 80, 120)
        "bf1": p["fc1_b"][None, :].astype(f32),
        "wf2": p["fc2_w"].T.astype(bf16),                    # (120, 84)
        "bf2": p["fc2_b"][None, :].astype(f32),
        "wf3": p["fc3_w"].T.astype(bf16),                    # (84, 10)
        "bf3": p["fc3_b"][None, :].astype(f32),
    }


def init_params(key):
    """PyTorch-default-style uniform(-1/sqrt(fan_in), +) init, torch layouts."""
    ks = jax.random.split(key, 10)

    def u(k, shape, fan_in):
        bound = 1.0 / jnp.sqrt(jnp.float32(fan_in))
        return jax.random.uniform(k, shape, jnp.float32, -bound, bound)

    return {
        "conv1_w": u(ks[0], (6, 1, 5, 5), 25),
        "conv1_b": u(ks[1], (6,), 25),
        "conv2_w": u(ks[2], (16, 6, 5, 5), 150),
        "conv2_b": u(ks[3], (16,), 150),
        "fc1_w": u(ks[4], (120, 400), 400),
        "fc1_b": u(ks[5], (120,), 400),
        "fc2_w": u(ks[6], (84, 120), 120),
        "fc2_b": u(ks[7], (84,), 120),
        "fc3_w": u(ks[8], (10, 84), 84),
        "fc3_b": u(ks[9], (10,), 84),
    }


# ---------------------------------------------------------------------------
# Pure-JAX f32 reference (mirrors the PyTorch module) for the self-check
# ---------------------------------------------------------------------------
def lenet_reference(params, x):
    hp = jax.lax.Precision.HIGHEST
    y = lax.conv_general_dilated(
        x, params["conv1_w"], window_strides=(1, 1), padding="VALID",
        dimension_numbers=("NCHW", "OIHW", "NCHW"), precision=hp)
    y = jax.nn.relu(y + params["conv1_b"][None, :, None, None])
    y = lax.reduce_window(y, -jnp.inf, lax.max, (1, 1, 2, 2), (1, 1, 2, 2), "VALID")
    y = lax.conv_general_dilated(
        y, params["conv2_w"], window_strides=(1, 1), padding="VALID",
        dimension_numbers=("NCHW", "OIHW", "NCHW"), precision=hp)
    y = jax.nn.relu(y + params["conv2_b"][None, :, None, None])
    y = lax.reduce_window(y, -jnp.inf, lax.max, (1, 1, 2, 2), (1, 1, 2, 2), "VALID")
    y = y.reshape(y.shape[0], 400)
    y = jax.nn.relu(jnp.dot(y, params["fc1_w"].T, precision=hp) + params["fc1_b"])
    y = jax.nn.relu(jnp.dot(y, params["fc2_w"].T, precision=hp) + params["fc2_b"])
    y = jnp.dot(y, params["fc3_w"].T, precision=hp) + params["fc3_b"]
    return jax.nn.softmax(y, axis=1)


if __name__ == "__main__":
    key = jax.random.PRNGKey(0)
    pkey, xkey = jax.random.split(key)
    params = init_params(pkey)
    # Batch tile of 8 -> grid length 2 for B=16 (keeps both v7x TCs busy).
    kparams = prepare_params(params, tb=8)
    # LeNet's 400-d fc1 (= 16*5*5) implies 32x32 single-channel input.
    x = jax.random.normal(xkey, (16, 1, 32, 32), jnp.float32)

    fwd = jax.jit(lenet_forward)
    out = jax.block_until_ready(fwd(kparams, x))

    assert out.shape == (16, _NCLS)
    assert bool(jnp.allclose(jnp.sum(out, axis=1), 1.0, atol=1e-5))

    ref = jax.block_until_ready(lenet_reference(params, x))
    # bf16 MXU operands (f32 accumulation) perturb the probabilities by ~1e-3.
    max_diff = float(jnp.max(jnp.abs(out - ref)))
    assert max_diff < 5e-3, f"kernel/reference mismatch: {max_diff}"

    print("KERNEL_OK")
</pallas_src>

<mosaic_0001>
module attributes {stable_mosaic.version = 11 : i64} {
  func.func @_lenet_kernel(%arg0: i32, %arg1: memref<256x32xf32, #tpu.memory_space<vmem>>, %arg2: memref<160x168xbf16, #tpu.memory_space<vmem>>, %arg3: memref<1x168xf32, #tpu.memory_space<vmem>>, %arg4: memref<420x160xbf16, #tpu.memory_space<vmem>>, %arg5: memref<1x160xf32, #tpu.memory_space<vmem>>, %arg6: memref<2x128x256xbf16, #tpu.memory_space<vmem>>, %arg7: memref<2x168x84xbf16, #tpu.memory_space<vmem>>, %arg8: memref<2x40x128xbf16, #tpu.memory_space<vmem>>, %arg9: memref<2x160x80xbf16, #tpu.memory_space<vmem>>, %arg10: memref<5x80x120xbf16, #tpu.memory_space<vmem>>, %arg11: memref<1x120xf32, #tpu.memory_space<vmem>>, %arg12: memref<120x84xbf16, #tpu.memory_space<vmem>>, %arg13: memref<1x84xf32, #tpu.memory_space<vmem>>, %arg14: memref<84x10xbf16, #tpu.memory_space<vmem>>, %arg15: memref<1x10xf32, #tpu.memory_space<vmem>>, %arg16: memref<8x10xf32, #tpu.memory_space<vmem>>) attributes {dimension_semantics = [#tpu.dimension_semantics<parallel>], iteration_bounds = array<i64: 2>, scalar_prefetch = 0 : i64, scratch_operands = 0 : i64, tpu.core_type = #tpu.core_type<tc>, window_params = [{transform_indices = @transform_0, window_bounds = array<i64: 256, 32>}, {pipeline_mode = #tpu.pipeline_mode<synchronous>, transform_indices = @transform_1, window_bounds = array<i64: 160, 168>}, {pipeline_mode = #tpu.pipeline_mode<synchronous>, transform_indices = @transform_2, window_bounds = array<i64: 1, 168>}, {pipeline_mode = #tpu.pipeline_mode<synchronous>, transform_indices = @transform_3, window_bounds = array<i64: 420, 160>}, {pipeline_mode = #tpu.pipeline_mode<synchronous>, transform_indices = @transform_4, window_bounds = array<i64: 1, 160>}, {pipeline_mode = #tpu.pipeline_mode<synchronous>, transform_indices = @transform_5, window_bounds = array<i64: 2, 128, 256>}, {pipeline_mode = #tpu.pipeline_mode<synchronous>, transform_indices = @transform_6, window_bounds = array<i64: 2, 168, 84>}, {pipeline_mode = #tpu.pipeline_mode<synchronous>, transform_indices = @transform_7, window_bounds = array<i64: 2, 40, 128>}, {pipeline_mode = #tpu.pipeline_mode<synchronous>, transform_indices = @transform_8, window_bounds = array<i64: 2, 160, 80>}, {pipeline_mode = #tpu.pipeline_mode<synchronous>, transform_indices = @transform_9, window_bounds = array<i64: 5, 80, 120>}, {pipeline_mode = #tpu.pipeline_mode<synchronous>, transform_indices = @transform_10, window_bounds = array<i64: 1, 120>}, {pipeline_mode = #tpu.pipeline_mode<synchronous>, transform_indices = @transform_11, window_bounds = array<i64: 120, 84>}, {pipeline_mode = #tpu.pipeline_mode<synchronous>, transform_indices = @transform_12, window_bounds = array<i64: 1, 84>}, {pipeline_mode = #tpu.pipeline_mode<synchronous>, transform_indices = @transform_13, window_bounds = array<i64: 84, 10>}, {pipeline_mode = #tpu.pipeline_mode<synchronous>, transform_indices = @transform_14, window_bounds = array<i64: 1, 10>}, {transform_indices = @transform_15, window_bounds = array<i64: 8, 10>}]} {
    %c0 = arith.constant 0 : index
    %c0_0 = arith.constant 0 : index
    %0 = vector.load %arg1[%c0, %c0_0] : memref<256x32xf32, #tpu.memory_space<vmem>>, vector<256x32xf32>
    %1 = vector.extract_strided_slice %0 {offsets = [1, 0], sizes = [255, 32], strides = [1, 1]} : vector<256x32xf32> to vector<255x32xf32>
    %2 = vector.extract_strided_slice %0 {offsets = [0, 0], sizes = [1, 32], strides = [1, 1]} : vector<256x32xf32> to vector<1x32xf32>
    %3 = tpu.concatenate %1, %2 in 0 : vector<255x32xf32>, vector<1x32xf32> -> vector<256x32xf32>
    %4 = vector.extract_strided_slice %0 {offsets = [2, 0], sizes = [254, 32], strides = [1, 1]} : vector<256x32xf32> to vector<254x32xf32>
    %5 = vector.extract_strided_slice %0 {offsets = [0, 0], sizes = [2, 32], strides = [1, 1]} : vector<256x32xf32> to vector<2x32xf32>
    %6 = tpu.concatenate %4, %5 in 0 : vector<254x32xf32>, vector<2x32xf32> -> vector<256x32xf32>
    %7 = vector.extract_strided_slice %0 {offsets = [3, 0], sizes = [253, 32], strides = [1, 1]} : vector<256x32xf32> to vector<253x32xf32>
    %8 = vector.extract_strided_slice %0 {offsets = [0, 0], sizes = [3, 32], strides = [1, 1]} : vector<256x32xf32> to vector<3x32xf32>
    %9 = tpu.concatenate %7, %8 in 0 : vector<253x32xf32>, vector<3x32xf32> -> vector<256x32xf32>
    %10 = vector.extract_strided_slice %0 {offsets = [4, 0], sizes = [252, 32], strides = [1, 1]} : vector<256x32xf32> to vector<252x32xf32>
    %11 = vector.extract_strided_slice %0 {offsets = [0, 0], sizes = [4, 32], strides = [1, 1]} : vector<256x32xf32> to vector<4x32xf32>
    %12 = tpu.concatenate %10, %11 in 0 : vector<252x32xf32>, vector<4x32xf32> -> vector<256x32xf32>
    %13 = tpu.concatenate %0, %3, %6, %9, %12 in 1 : vector<256x32xf32>, vector<256x32xf32>, vector<256x32xf32>, vector<256x32xf32>, vector<256x32xf32> -> vector<256x160xf32>
    %14 = arith.truncf %13 : vector<256x160xf32> to vector<256x160xbf16>
    %c0_1 = arith.constant 0 : index
    %c0_2 = arith.constant 0 : index
    %15 = vector.load %arg2[%c0_1, %c0_2] : memref<160x168xbf16, #tpu.memory_space<vmem>>, vector<160x168xbf16>
    %cst = arith.constant dense<0.000000e+00> : vector<256x168xf32>
    %16 = tpu.matmul %14, %15, %cst {dimension_numbers = #tpu.dot_dimension_numbers<[1], [0], [0], [1], [0, 0, 1, 1], [], []>} : vector<256x160xbf16>, vector<160x168xbf16>, vector<256x168xf32> -> vector<256x168xf32>
    %c0_3 = arith.constant 0 : index
    %c0_4 = arith.constant 0 : index
    %17 = vector.load %arg3[%c0_3, %c0_4] : memref<1x168xf32, #tpu.memory_space<vmem>>, vector<1x168xf32>
    %18 = vector.broadcast %17 : vector<1x168xf32> to vector<256x168xf32>
    %19 = arith.addf %16, %18 : vector<256x168xf32>
    %cst_5 = arith.constant 0.000000e+00 : f32
    %20 = vector.broadcast %cst_5 : f32 to vector<256x168xf32>
    %21 = arith.maximumf %19, %20 : vector<256x168xf32>
    %22 = arith.truncf %21 : vector<256x168xf32> to vector<256x168xbf16>
    %c0_6 = arith.constant 0 : index
    %c0_7 = arith.constant 0 : index
    %c0_8 = arith.constant 0 : index
    %23 = vector.load %arg6[%c0_6, %c0_7, %c0_8] : memref<2x128x256xbf16, #tpu.memory_space<vmem>>, vector<1x128x256xbf16>
    %24 = vector.shape_cast %23 : vector<1x128x256xbf16> to vector<128x256xbf16>
    %cst_9 = arith.constant dense<0.000000e+00> : vector<128x168xf32>
    %25 = tpu.matmul %24, %22, %cst_9 {dimension_numbers = #tpu.dot_dimension_numbers<[1], [0], [0], [1], [0, 0, 1, 1], [], []>} : vector<128x256xbf16>, vector<256x168xbf16>, vector<128x168xf32> -> vector<128x168xf32>
    %c1 = arith.constant 1 : index
    %c0_10 = arith.constant 0 : index
    %c0_11 = arith.constant 0 : index
    %26 = vector.load %arg6[%c1, %c0_10, %c0_11] : memref<2x128x256xbf16, #tpu.memory_space<vmem>>, vector<1x128x256xbf16>
    %27 = vector.shape_cast %26 : vector<1x128x256xbf16> to vector<128x256xbf16>
    %cst_12 = arith.constant dense<0.000000e+00> : vector<128x168xf32>
    %28 = tpu.matmul %27, %22, %cst_12 {dimension_numbers = #tpu.dot_dimension_numbers<[1], [0], [0], [1], [0, 0, 1, 1], [], []>} : vector<128x256xbf16>, vector<256x168xbf16>, vector<128x168xf32> -> vector<128x168xf32>
    %29 = arith.maximumf %25, %28 : vector<128x168xf32>
    %30 = arith.truncf %29 : vector<128x168xf32> to vector<128x168xbf16>
    %c0_13 = arith.constant 0 : index
    %c0_14 = arith.constant 0 : index
    %c0_15 = arith.constant 0 : index
    %31 = vector.load %arg7[%c0_13, %c0_14, %c0_15] : memref<2x168x84xbf16, #tpu.memory_space<vmem>>, vector<1x168x84xbf16>
    %32 = vector.shape_cast %31 : vector<1x168x84xbf16> to vector<168x84xbf16>
    %cst_16 = arith.constant dense<0.000000e+00> : vector<128x84xf32>
    %33 = tpu.matmul %30, %32, %cst_16 {dimension_numbers = #tpu.dot_dimension_numbers<[1], [0], [0], [1], [0, 0, 1, 1], [], []>} : vector<128x168xbf16>, vector<168x84xbf16>, vector<128x84xf32> -> vector<128x84xf32>
    %c1_17 = arith.constant 1 : index
    %c0_18 = arith.constant 0 : index
    %c0_19 = arith.constant 0 : index
    %34 = vector.load %arg7[%c1_17, %c0_18, %c0_19] : memref<2x168x84xbf16, #tpu.memory_space<vmem>>, vector<1x168x84xbf16>
    %35 = vector.shape_cast %34 : vector<1x168x84xbf16> to vector<168x84xbf16>
    %cst_20 = arith.constant dense<0.000000e+00> : vector<128x84xf32>
    %36 = tpu.matmul %30, %35, %cst_20 {dimension_numbers = #tpu.dot_dimension_numbers<[1], [0], [0], [1], [0, 0, 1, 1], [], []>} : vector<128x168xbf16>, vector<168x84xbf16>, vector<128x84xf32> -> vector<128x84xf32>
    %37 = arith.maximumf %33, %36 : vector<128x84xf32>
    %38 = vector.extract_strided_slice %37 {offsets = [1, 0], sizes = [127, 84], strides = [1, 1]} : vector<128x84xf32> to vector<127x84xf32>
    %39 = vector.extract_strided_slice %37 {offsets = [0, 0], sizes = [1, 84], strides = [1, 1]} : vector<128x84xf32> to vector<1x84xf32>
    %40 = tpu.concatenate %38, %39 in 0 : vector<127x84xf32>, vector<1x84xf32> -> vector<128x84xf32>
    %41 = vector.extract_strided_slice %37 {offsets = [2, 0], sizes = [126, 84], strides = [1, 1]} : vector<128x84xf32> to vector<126x84xf32>
    %42 = vector.extract_strided_slice %37 {offsets = [0, 0], sizes = [2, 84], strides = [1, 1]} : vector<128x84xf32> to vector<2x84xf32>
    %43 = tpu.concatenate %41, %42 in 0 : vector<126x84xf32>, vector<2x84xf32> -> vector<128x84xf32>
    %44 = vector.extract_strided_slice %37 {offsets = [3, 0], sizes = [125, 84], strides = [1, 1]} : vector<128x84xf32> to vector<125x84xf32>
    %45 = vector.extract_strided_slice %37 {offsets = [0, 0], sizes = [3, 84], strides = [1, 1]} : vector<128x84xf32> to vector<3x84xf32>
    %46 = tpu.concatenate %44, %45 in 0 : vector<125x84xf32>, vector<3x84xf32> -> vector<128x84xf32>
    %47 = vector.extract_strided_slice %37 {offsets = [4, 0], sizes = [124, 84], strides = [1, 1]} : vector<128x84xf32> to vector<124x84xf32>
    %48 = vector.extract_strided_slice %37 {offsets = [0, 0], sizes = [4, 84], strides = [1, 1]} : vector<128x84xf32> to vector<4x84xf32>
    %49 = tpu.concatenate %47, %48 in 0 : vector<124x84xf32>, vector<4x84xf32> -> vector<128x84xf32>
    %50 = tpu.concatenate %37, %40, %43, %46, %49 in 1 : vector<128x84xf32>, vector<128x84xf32>, vector<128x84xf32>, vector<128x84xf32>, vector<128x84xf32> -> vector<128x420xf32>
    %51 = arith.truncf %50 : vector<128x420xf32> to vector<128x420xbf16>
    %c0_21 = arith.constant 0 : index
    %c0_22 = arith.constant 0 : index
    %52 = vector.load %arg4[%c0_21, %c0_22] : memref<420x160xbf16, #tpu.memory_space<vmem>>, vector<420x160xbf16>
    %cst_23 = arith.constant dense<0.000000e+00> : vector<128x160xf32>
    %53 = tpu.matmul %51, %52, %cst_23 {dimension_numbers = #tpu.dot_dimension_numbers<[1], [0], [0], [1], [0, 0, 1, 1], [], []>} : vector<128x420xbf16>, vector<420x160xbf16>, vector<128x160xf32> -> vector<128x160xf32>
    %c0_24 = arith.constant 0 : index
    %c0_25 = arith.constant 0 : index
    %54 = vector.load %arg5[%c0_24, %c0_25] : memref<1x160xf32, #tpu.memory_space<vmem>>, vector<1x160xf32>
    %55 = vector.broadcast %54 : vector<1x160xf32> to vector<128x160xf32>
    %56 = arith.addf %53, %55 : vector<128x160xf32>
    %cst_26 = arith.constant 0.000000e+00 : f32
    %57 = vector.broadcast %cst_26 : f32 to vector<128x160xf32>
    %58 = arith.maximumf %56, %57 : vector<128x160xf32>
    %59 = arith.truncf %58 : vector<128x160xf32> to vector<128x160xbf16>
    %c0_27 = arith.constant 0 : index
    %c0_28 = arith.constant 0 : index
    %c0_29 = arith.constant 0 : index
    %60 = vector.load %arg8[%c0_27, %c0_28, %c0_29] : memref<2x40x128xbf16, #tpu.memory_space<vmem>>, vector<1x40x128xbf16>
    %61 = vector.shape_cast %60 : vector<1x40x128xbf16> to vector<40x128xbf16>
    %cst_30 = arith.constant dense<0.000000e+00> : vector<40x160xf32>
    %62 = tpu.matmul %61, %59, %cst_30 {dimension_numbers = #tpu.dot_dimension_numbers<[1], [0], [0], [1], [0, 0, 1, 1], [], []>} : vector<40x128xbf16>, vector<128x160xbf16>, vector<40x160xf32> -> vector<40x160xf32>
    %c1_31 = arith.constant 1 : index
    %c0_32 = arith.constant 0 : index
    %c0_33 = arith.constant 0 : index
    %63 = vector.load %arg8[%c1_31, %c0_32, %c0_33] : memref<2x40x128xbf16, #tpu.memory_space<vmem>>, vector<1x40x128xbf16>
    %64 = vector.shape_cast %63 : vector<1x40x128xbf16> to vector<40x128xbf16>
    %cst_34 = arith.constant dense<0.000000e+00> : vector<40x160xf32>
    %65 = tpu.matmul %64, %59, %cst_34 {dimension_numbers = #tpu.dot_dimension_numbers<[1], [0], [0], [1], [0, 0, 1, 1], [], []>} : vector<40x128xbf16>, vector<128x160xbf16>, vector<40x160xf32> -> vector<40x160xf32>
    %66 = arith.maximumf %62, %65 : vector<40x160xf32>
    %67 = arith.truncf %66 : vector<40x160xf32> to vector<40x160xbf16>
    %c0_35 = arith.constant 0 : index
    %c0_36 = arith.constant 0 : index
    %c0_37 = arith.constant 0 : index
    %68 = vector.load %arg9[%c0_35, %c0_36, %c0_37] : memref<2x160x80xbf16, #tpu.memory_space<vmem>>, vector<1x160x80xbf16>
    %69 = vector.shape_cast %68 : vector<1x160x80xbf16> to vector<160x80xbf16>
    %cst_38 = arith.constant dense<0.000000e+00> : vector<40x80xf32>
    %70 = tpu.matmul %67, %69, %cst_38 {dimension_numbers = #tpu.dot_dimension_numbers<[1], [0], [0], [1], [0, 0, 1, 1], [], []>} : vector<40x160xbf16>, vector<160x80xbf16>, vector<40x80xf32> -> vector<40x80xf32>
    %c1_39 = arith.constant 1 : index
    %c0_40 = arith.constant 0 : index
    %c0_41 = arith.constant 0 : index
    %71 = vector.load %arg9[%c1_39, %c0_40, %c0_41] : memref<2x160x80xbf16, #tpu.memory_space<vmem>>, vector<1x160x80xbf16>
    %72 = vector.shape_cast %71 : vector<1x160x80xbf16> to vector<160x80xbf16>
    %cst_42 = arith.constant dense<0.000000e+00> : vector<40x80xf32>
    %73 = tpu.matmul %67, %72, %cst_42 {dimension_numbers = #tpu.dot_dimension_numbers<[1], [0], [0], [1], [0, 0, 1, 1], [], []>} : vector<40x160xbf16>, vector<160x80xbf16>, vector<40x80xf32> -> vector<40x80xf32>
    %74 = arith.maximumf %70, %73 : vector<40x80xf32>
    %75 = arith.truncf %74 : vector<40x80xf32> to vector<40x80xbf16>
    %76 = vector.extract_strided_slice %75 {offsets = [0, 0], sizes = [8, 80], strides = [1, 1]} : vector<40x80xbf16> to vector<8x80xbf16>
    %c0_43 = arith.constant 0 : index
    %c0_44 = arith.constant 0 : index
    %c0_45 = arith.constant 0 : index
    %77 = vector.load %arg10[%c0_43, %c0_44, %c0_45] : memref<5x80x120xbf16, #tpu.memory_space<vmem>>, vector<1x80x120xbf16>
    %78 = vector.shape_cast %77 : vector<1x80x120xbf16> to vector<80x120xbf16>
    %cst_46 = arith.constant dense<0.000000e+00> : vector<8x120xf32>
    %79 = tpu.matmul %76, %78, %cst_46 {dimension_numbers = #tpu.dot_dimension_numbers<[1], [0], [0], [1], [0, 0, 1, 1], [], []>} : vector<8x80xbf16>, vector<80x120xbf16>, vector<8x120xf32> -> vector<8x120xf32>
    %80 = vector.extract_strided_slice %75 {offsets = [8, 0], sizes = [8, 80], strides = [1, 1]} : vector<40x80xbf16> to vector<8x80xbf16>
    %c1_47 = arith.constant 1 : index
    %c0_48 = arith.constant 0 : index
    %c0_49 = arith.constant 0 : index
    %81 = vector.load %arg10[%c1_47, %c0_48, %c0_49] : memref<5x80x120xbf16, #tpu.memory_space<vmem>>, vector<1x80x120xbf16>
    %82 = vector.shape_cast %81 : vector<1x80x120xbf16> to vector<80x120xbf16>
    %cst_50 = arith.constant dense<0.000000e+00> : vector<8x120xf32>
    %83 = tpu.matmul %80, %82, %cst_50 {dimension_numbers = #tpu.dot_dimension_numbers<[1], [0], [0], [1], [0, 0, 1, 1], [], []>} : vector<8x80xbf16>, vector<80x120xbf16>, vector<8x120xf32> -> vector<8x120xf32>
    %84 = arith.addf %79, %83 : vector<8x120xf32>
    %85 = vector.extract_strided_slice %75 {offsets = [16, 0], sizes = [8, 80], strides = [1, 1]} : vector<40x80xbf16> to vector<8x80xbf16>
    %c2 = arith.constant 2 : index
    %c0_51 = arith.constant 0 : index
    %c0_52 = arith.constant 0 : index
    %86 = vector.load %arg10[%c2, %c0_51, %c0_52] : memref<5x80x120xbf16, #tpu.memory_space<vmem>>, vector<1x80x120xbf16>
    %87 = vector.shape_cast %86 : vector<1x80x120xbf16> to vector<80x120xbf16>
    %cst_53 = arith.constant dense<0.000000e+00> : vector<8x120xf32>
    %88 = tpu.matmul %85, %87, %cst_53 {dimension_numbers = #tpu.dot_dimension_numbers<[1], [0], [0], [1], [0, 0, 1, 1], [], []>} : vector<8x80xbf16>, vector<80x120xbf16>, vector<8x120xf32> -> vector<8x120xf32>
    %89 = arith.addf %84, %88 : vector<8x120xf32>
    %90 = vector.extract_strided_slice %75 {offsets = [24, 0], sizes = [8, 80], strides = [1, 1]} : vector<40x80xbf16> to vector<8x80xbf16>
    %c3 = arith.constant 3 : index
    %c0_54 = arith.constant 0 : index
    %c0_55 = arith.constant 0 : index
    %91 = vector.load %arg10[%c3, %c0_54, %c0_55] : memref<5x80x120xbf16, #tpu.memory_space<vmem>>, vector<1x80x120xbf16>
    %92 = vector.shape_cast %91 : vector<1x80x120xbf16> to vector<80x120xbf16>
    %cst_56 = arith.constant dense<0.000000e+00> : vector<8x120xf32>
    %93 = tpu.matmul %90, %92, %cst_56 {dimension_numbers = #tpu.dot_dimension_numbers<[1], [0], [0], [1], [0, 0, 1, 1], [], []>} : vector<8x80xbf16>, vector<80x120xbf16>, vector<8x120xf32> -> vector<8x120xf32>
    %94 = arith.addf %89, %93 : vector<8x120xf32>
    %95 = vector.extract_strided_slice %75 {offsets = [32, 0], sizes = [8, 80], strides = [1, 1]} : vector<40x80xbf16> to vector<8x80xbf16>
    %c4 = arith.constant 4 : index
    %c0_57 = arith.constant 0 : index
    %c0_58 = arith.constant 0 : index
    %96 = vector.load %arg10[%c4, %c0_57, %c0_58] : memref<5x80x120xbf16, #tpu.memory_space<vmem>>, vector<1x80x120xbf16>
    %97 = vector.shape_cast %96 : vector<1x80x120xbf16> to vector<80x120xbf16>
    %cst_59 = arith.constant dense<0.000000e+00> : vector<8x120xf32>
    %98 = tpu.matmul %95, %97, %cst_59 {dimension_numbers = #tpu.dot_dimension_numbers<[1], [0], [0], [1], [0, 0, 1, 1], [], []>} : vector<8x80xbf16>, vector<80x120xbf16>, vector<8x120xf32> -> vector<8x120xf32>
    %99 = arith.addf %94, %98 : vector<8x120xf32>
    %c0_60 = arith.constant 0 : index
    %c0_61 = arith.constant 0 : index
    %100 = vector.load %arg11[%c0_60, %c0_61] : memref<1x120xf32, #tpu.memory_space<vmem>>, vector<1x120xf32>
    %101 = vector.broadcast %100 : vector<1x120xf32> to vector<8x120xf32>
    %102 = arith.addf %99, %101 : vector<8x120xf32>
    %cst_62 = arith.constant 0.000000e+00 : f32
    %103 = vector.broadcast %cst_62 : f32 to vector<8x120xf32>
    %104 = arith.maximumf %102, %103 : vector<8x120xf32>
    %105 = arith.truncf %104 : vector<8x120xf32> to vector<8x120xbf16>
    %c0_63 = arith.constant 0 : index
    %c0_64 = arith.constant 0 : index
    %106 = vector.load %arg12[%c0_63, %c0_64] : memref<120x84xbf16, #tpu.memory_space<vmem>>, vector<120x84xbf16>
    %cst_65 = arith.constant dense<0.000000e+00> : vector<8x84xf32>
    %107 = tpu.matmul %105, %106, %cst_65 {dimension_numbers = #tpu.dot_dimension_numbers<[1], [0], [0], [1], [0, 0, 1, 1], [], []>} : vector<8x120xbf16>, vector<120x84xbf16>, vector<8x84xf32> -> vector<8x84xf32>
    %c0_66 = arith.constant 0 : index
    %c0_67 = arith.constant 0 : index
    %108 = vector.load %arg13[%c0_66, %c0_67] : memref<1x84xf32, #tpu.memory_space<vmem>>, vector<1x84xf32>
    %109 = vector.broadcast %108 : vector<1x84xf32> to vector<8x84xf32>
    %110 = arith.addf %107, %109 : vector<8x84xf32>
    %cst_68 = arith.constant 0.000000e+00 : f32
    %111 = vector.broadcast %cst_68 : f32 to vector<8x84xf32>
    %112 = arith.maximumf %110, %111 : vector<8x84xf32>
    %113 = arith.truncf %112 : vector<8x84xf32> to vector<8x84xbf16>
    %c0_69 = arith.constant 0 : index
    %c0_70 = arith.constant 0 : index
    %114 = vector.load %arg14[%c0_69, %c0_70] : memref<84x10xbf16, #tpu.memory_space<vmem>>, vector<84x10xbf16>
    %cst_71 = arith.constant dense<0.000000e+00> : vector<8x10xf32>
    %115 = tpu.matmul %113, %114, %cst_71 {dimension_numbers = #tpu.dot_dimension_numbers<[1], [0], [0], [1], [0, 0, 1, 1], [], []>} : vector<8x84xbf16>, vector<84x10xbf16>, vector<8x10xf32> -> vector<8x10xf32>
    %c0_72 = arith.constant 0 : index
    %c0_73 = arith.constant 0 : index
    %116 = vector.load %arg15[%c0_72, %c0_73] : memref<1x10xf32, #tpu.memory_space<vmem>>, vector<1x10xf32>
    %117 = vector.broadcast %116 : vector<1x10xf32> to vector<8x10xf32>
    %118 = arith.addf %115, %117 : vector<8x10xf32>
    %cst_74 = arith.constant dense<0xFF800000> : vector<8xf32>
    %119 = vector.multi_reduction <maximumf>, %118, %cst_74 [1] : vector<8x10xf32> to vector<8xf32>
    %120 = vector.shape_cast %119 : vector<8xf32> to vector<8x1xf32>
    %121 = vector.broadcast %120 : vector<8x1xf32> to vector<8x10xf32>
    %122 = arith.subf %118, %121 : vector<8x10xf32>
    %123 = math.exp %122 : vector<8x10xf32>
    %cst_75 = arith.constant dense<0.000000e+00> : vector<8xf32>
    %124 = vector.multi_reduction <add>, %123, %cst_75 [1] : vector<8x10xf32> to vector<8xf32>
    %125 = vector.shape_cast %124 : vector<8xf32> to vector<8x1xf32>
    %126 = tpu.reciprocal %125 : vector<8x1xf32> -> vector<8x1xf32>
    %127 = vector.broadcast %126 : vector<8x1xf32> to vector<8x10xf32>
    %128 = arith.mulf %123, %127 : vector<8x10xf32>
    %c0_76 = arith.constant 0 : index
    %c0_77 = arith.constant 0 : index
    %129 = vector.load %arg16[%c0_76, %c0_77] : memref<8x10xf32, #tpu.memory_space<vmem>>, vector<8x10xf32>
    tpu.vector_store %arg16[%c0_76, %c0_77], %128 {strides = array<i32>} : memref<8x10xf32, #tpu.memory_space<vmem>>, vector<8x10xf32>,
    return
  }
  func.func @transform_0(%arg0: i32) -> (i32, i32) {
    %c0_i32 = arith.constant 0 : i32
    %c0_i32_0 = arith.constant 0 : i32
    return %arg0, %c0_i32 : i32, i32
  }
  func.func @transform_1(%arg0: i32) -> (i32, i32) {
    %c0_i32 = arith.constant 0 : i32
    %c0_i32_0 = arith.constant 0 : i32
    %c0_i32_1 = arith.constant 0 : i32
    return %c0_i32, %c0_i32_0 : i32, i32
  }
  func.func @transform_2(%arg0: i32) -> (i32, i32) {
    %c0_i32 = arith.constant 0 : i32
    %c0_i32_0 = arith.constant 0 : i32
    %c0_i32_1 = arith.constant 0 : i32
    return %c0_i32, %c0_i32_0 : i32, i32
  }
  func.func @transform_3(%arg0: i32) -> (i32, i32) {
    %c0_i32 = arith.constant 0 : i32
    %c0_i32_0 = arith.constant 0 : i32
    %c0_i32_1 = arith.constant 0 : i32
    return %c0_i32, %c0_i32_0 : i32, i32
  }
  func.func @transform_4(%arg0: i32) -> (i32, i32) {
    %c0_i32 = arith.constant 0 : i32
    %c0_i32_0 = arith.constant 0 : i32
    %c0_i32_1 = arith.constant 0 : i32
    return %c0_i32, %c0_i32_0 : i32, i32
  }
  func.func @transform_5(%arg0: i32) -> (i32, i32, i32) {
    %c0_i32 = arith.constant 0 : i32
    %c0_i32_0 = arith.constant 0 : i32
    %c0_i32_1 = arith.constant 0 : i32
    %c0_i32_2 = arith.constant 0 : i32
    return %c0_i32, %c0_i32_0, %c0_i32_1 : i32, i32, i32
  }
  func.func @transform_6(%arg0: i32) -> (i32, i32, i32) {
    %c0_i32 = arith.constant 0 : i32
    %c0_i32_0 = arith.constant 0 : i32
    %c0_i32_1 = arith.constant 0 : i32
    %c0_i32_2 = arith.constant 0 : i32
    return %c0_i32, %c0_i32_0, %c0_i32_1 : i32, i32, i32
  }
  func.func @transform_7(%arg0: i32) -> (i32, i32, i32) {
    %c0_i32 = arith.constant 0 : i32
    %c0_i32_0 = arith.constant 0 : i32
    %c0_i32_1 = arith.constant 0 : i32
    %c0_i32_2 = arith.constant 0 : i32
    return %c0_i32, %c0_i32_0, %c0_i32_1 : i32, i32, i32
  }
  func.func @transform_8(%arg0: i32) -> (i32, i32, i32) {
    %c0_i32 = arith.constant 0 : i32
    %c0_i32_0 = arith.constant 0 : i32
    %c0_i32_1 = arith.constant 0 : i32
    %c0_i32_2 = arith.constant 0 : i32
    return %c0_i32, %c0_i32_0, %c0_i32_1 : i32, i32, i32
  }
  func.func @transform_9(%arg0: i32) -> (i32, i32, i32) {
    %c0_i32 = arith.constant 0 : i32
    %c0_i32_0 = arith.constant 0 : i32
    %c0_i32_1 = arith.constant 0 : i32
    %c0_i32_2 = arith.constant 0 : i32
    return %c0_i32, %c0_i32_0, %c0_i32_1 : i32, i32, i32
  }
  func.func @transform_10(%arg0: i32) -> (i32, i32) {
    %c0_i32 = arith.constant 0 : i32
    %c0_i32_0 = arith.constant 0 : i32
    %c0_i32_1 = arith.constant 0 : i32
    return %c0_i32, %c0_i32_0 : i32, i32
  }
  func.func @transform_11(%arg0: i32) -> (i32, i32) {
    %c0_i32 = arith.constant 0 : i32
    %c0_i32_0 = arith.constant 0 : i32
    %c0_i32_1 = arith.constant 0 : i32
    return %c0_i32, %c0_i32_0 : i32, i32
  }
  func.func @transform_12(%arg0: i32) -> (i32, i32) {
    %c0_i32 = arith.constant 0 : i32
    %c0_i32_0 = arith.constant 0 : i32
    %c0_i32_1 = arith.constant 0 : i32
    return %c0_i32, %c0_i32_0 : i32, i32
  }
  func.func @transform_13(%arg0: i32) -> (i32, i32) {
    %c0_i32 = arith.constant 0 : i32
    %c0_i32_0 = arith.constant 0 : i32
    %c0_i32_1 = arith.constant 0 : i32
    return %c0_i32, %c0_i32_0 : i32, i32
  }
  func.func @transform_14(%arg0: i32) -> (i32, i32) {
    %c0_i32 = arith.constant 0 : i32
    %c0_i32_0 = arith.constant 0 : i32
    %c0_i32_1 = arith.constant 0 : i32
    return %c0_i32, %c0_i32_0 : i32, i32
  }
  func.func @transform_15(%arg0: i32) -> (i32, i32) {
    %c0_i32 = arith.constant 0 : i32
    %c0_i32_0 = arith.constant 0 : i32
    return %arg0, %c0_i32 : i32, i32
  }
}

</mosaic_0001>

<llo_original>
// kernel: lenet_forward.1
$region0: #{lenet_forward.1}
  #allocation0 [shape = 'u32[]', space=smem, size = 0x4, offset = 0x4, fixed_abs, tag = 'smem constant byte address 0x4 - core index']
  #allocation1 [shape = 'u32[144,128]{1,0:T(1,128)}', space=vmem, size = 0x12000, scoped, tag = 'internal scratch']
  %s0 = inlined_call_operand.vmem [shape: f32[512,32], index: 0, kind: input, shape index: {}]
  %s1 = inlined_call_operand.hbm [shape: bf16[160,168], index: 1, kind: input, shape index: {}]
  %s2 = inlined_call_operand.vmem [shape: f32[1,168], index: 2, kind: input, shape index: {}]
  %s3 = inlined_call_operand.vmem [shape: bf16[420,160], index: 3, kind: input, shape index: {}]
  %s4 = inlined_call_operand.vmem [shape: f32[1,160], index: 4, kind: input, shape index: {}]
  %s5 = inlined_call_operand.vmem [shape: bf16[2,128,256], index: 5, kind: input, shape index: {}]
  %s6 = inlined_call_operand.vmem [shape: bf16[2,168,84], index: 6, kind: input, shape index: {}]
  %s7 = inlined_call_operand.hbm [shape: bf16[2,40,128], index: 7, kind: input, shape index: {}]
  %s8 = inlined_call_operand.hbm [shape: bf16[2,160,80], index: 8, kind: input, shape index: {}]
  %s9 = inlined_call_operand.hbm [shape: bf16[5,80,120], index: 9, kind: input, shape index: {}]
  %s10 = inlined_call_operand.vmem [shape: f32[1,120], index: 10, kind: input, shape index: {}]
  %s11 = inlined_call_operand.vmem [shape: bf16[120,84], index: 11, kind: input, shape index: {}]
  %s12 = inlined_call_operand.vmem [shape: f32[1,84], index: 12, kind: input, shape index: {}]
  %s13 = inlined_call_operand.vmem [shape: bf16[84,10], index: 13, kind: input, shape index: {}]
  %s14 = inlined_call_operand.vmem [shape: f32[1,10], index: 14, kind: input, shape index: {}]
  %s15 = inlined_call_operand.hbm [shape: f32[16,10], index: 15, kind: output, shape index: {}]
  %s16 = sld [smem:[#allocation0]]
  $region109: #{lenet_forward.1} parent=0
    _
  %s18 = ssub.s32 1, %s16
  %s19 = scalar_select 0, %s18, %s16
  $region1: #{lenet_forward.1} parent=0
    #allocation2 [shape = 'u8[81920]{0}', space=vmem, size = 0x14000, scoped, tag = 'input window, operand 1, single buffered']
    #allocation3 [shape = 's32[2]{0}', space=sflag, size = 0x8, scoped, tag = 'scoped memory for lenet_forward.1']
    #allocation4 [shape = 's32[2]{0}', space=sflag, size = 0x8, scoped, tag = 'scoped memory for lenet_forward.1']
    #allocation5 [shape = 'u8[20480]{0}', space=vmem, size = 0x5000, scoped, tag = 'input window, operand 7, single buffered']
    #allocation6 [shape = 's32[1]{0}', space=sflag, size = 0x4, scoped, tag = 'scoped memory for lenet_forward.1']
    #allocation7 [shape = 'u8[81920]{0}', space=vmem, size = 0x14000, scoped, tag = 'input window, operand 8, single buffered']
    #allocation8 [shape = 'u8[102400]{0}', space=vmem, size = 0x19000, scoped, tag = 'input window, operand 9, single buffered']
    #allocation9 [shape = 's32[1]{0}', space=sflag, size = 0x4, scoped, tag = 'scoped memory for lenet_forward.1']
    #allocation10 [shape = 'u8[8192]{0}', space=vmem, size = 0x2000, scoped, tag = 'output window, operand 0']
    %20 = vsyncpa [#allocation3], 0
    %21 = vsyncpa [#allocation6], 0
    %22 = vsyncpa [#allocation9], 0
    %23 = vsyncpa [#allocation4], 0
    %s24 = scalar_lea.sflag [#allocation4], 1
    %25 = vsyncpa %s24, 0
    loop: start=0, step=1, limit=4
    $region2: #{lenet_forward.1} parent=1 // loop_pre_header
      _
    $region3: #{lenet_forward.1} parent=1 // loop_header
      %s27 = sphi 0, %s31
      %p28 = scmp.ge.s32.totalorder %s27, 4
      %s37 = sphi 0, %s39
      %s40 = sphi 0, %s37
      %s41 = sphi 0, %s40
      %s57 = sphi 0, %s41
      %s61 = sphi 0, %s61
      %s63 = sphi 0, %s61
      %s64 = sphi 0, %s63
      %s78 = sphi 0, %s64
      %s82 = sphi 0, %s82
      %s84 = sphi 0, %s82
      %s85 = sphi 0, %s84
      %s99 = sphi 0, %s85
      %s103 = sphi 0, %s103
      %s105 = sphi 0, %s103
      %s106 = sphi 0, %s105
      %s120 = sphi 0, %s106
      %s124 = sphi 0, %s124
      %s126 = sphi 0, %s124
      %s127 = sphi 0, %s126
      %s141 = sphi 0, %s127
      %s145 = sphi 0, %s145
      %s147 = sphi 0, %s145
      %s148 = sphi 0, %s147
      %s162 = sphi 0, %s148
      %s166 = sphi 0, %s166
      %s168 = sphi 0, %s166
      %s169 = sphi 0, %s168
      %s183 = sphi 0, %s169
      %s187 = sphi 0, %s187
      %s189 = sphi 0, %s187
      %s190 = sphi 0, %s189
      %s204 = sphi 0, %s190
      %s208 = sphi 0, %s208
      %s210 = sphi 0, %s208
      %s211 = sphi 0, %s210
      %s225 = sphi 0, %s211
      %s229 = sphi 0, %s229
      %s231 = sphi 0, %s229
      %s232 = sphi 0, %s231
      %s246 = sphi 0, %s232
      %s250 = sphi 0, %s250
      %s252 = sphi 0, %s250
      %s253 = sphi 0, %s252
      %s267 = sphi 0, %s253
      %s271 = sphi 0, %s271
      %s273 = sphi 0, %s271
      %s274 = sphi 0, %s273
      %s288 = sphi 0, %s274
      %s292 = sphi 0, %s292
      %s294 = sphi 0, %s292
      %s295 = sphi 0, %s294
      %s309 = sphi 0, %s295
      %s313 = sphi 0, %s313
      %s315 = sphi 0, %s313
      %s316 = sphi 0, %s315
      %s330 = sphi 0, %s316
      %s334 = sphi 0, %s334
      %s336 = sphi 0, %s334
      %s337 = sphi 0, %s336
      %s351 = sphi 0, %s337
      %s357 = sphi 0, %s359
      %s360 = sphi 0, %s357
      %s361 = sphi 0, %s360
      %s377 = sphi 0, %s361
    $region4: #{lenet_forward.1} parent=1 // loop_header_branch
      %30 = sbr.rel (%p28) target = $region8
    $region5: #{lenet_forward.1} parent=1 // loop_body
      %s32 = ssub.s32 %s27, 1
      %s33 = ssub.s32 %s27, 2
      %s34 = sadd.s32 %s27, 1
      %s35 = ssub.s32 %s27, %s34
      %p36 = scmp.eq.s32.totalorder %s35, 0
      %s38 = sadd.s32 %s37, 1
      %s39 = scalar_select %p36, %s37, %s38
      %p42 = pneg %p36
      %p43 = scmp.eq.s32.totalorder %s27, 1
      %p44 = por %p42, %p43
      %p45 = scmp.ne.s32.totalorder %s37, %s40
      %p46 = scmp.eq.s32.totalorder %s27, 0
      %p47 = por %p45, %p46
      %p48 = scmp.ne.s32.totalorder %s37, %s40
      %p49 = scmp.eq.s32.totalorder %s32, 1
      %p50 = por %p48, %p49
      %p51 = scmp.ne.s32.totalorder %s40, %s41
      %p52 = scmp.eq.s32.totalorder %s32, 0
      %p53 = por %p51, %p52
      %p54 = scmp.ne.s32.totalorder %s40, %s41
      %p55 = scmp.eq.s32.totalorder %s33, 1
      %p56 = por %p54, %p55
      %p58 = scmp.ne.s32.totalorder %s41, %s57
      %p59 = scmp.eq.s32.totalorder %s33, 0
      %p60 = por %p58, %p59
      %s62 = sadd.s32 %s61, 1
      %p65 = scmp.eq.s32.totalorder %s27, 1
      %p66 = scmp.ne.s32.totalorder %s61, %s63
      %p67 = scmp.eq.s32.totalorder %s27, 0
      %p68 = por %p66, %p67
      %p69 = scmp.ne.s32.totalorder %s61, %s63
      %p70 = scmp.eq.s32.totalorder %s32, 1
      %p71 = por %p69, %p70
      %p72 = scmp.ne.s32.totalorder %s63, %s64
      %p73 = scmp.eq.s32.totalorder %s32, 0
      %p74 = por %p72, %p73
      %p75 = scmp.ne.s32.totalorder %s63, %s64
      %p76 = scmp.eq.s32.totalorder %s33, 1
      %p77 = por %p75, %p76
      %p79 = scmp.ne.s32.totalorder %s64, %s78
      %p80 = scmp.eq.s32.totalorder %s33, 0
      %p81 = por %p79, %p80
      %s83 = sadd.s32 %s82, 1
      %p86 = scmp.eq.s32.totalorder %s27, 1
      %p87 = scmp.ne.s32.totalorder %s82, %s84
      %p88 = scmp.eq.s32.totalorder %s27, 0
      %p89 = por %p87, %p88
      %p90 = scmp.ne.s32.totalorder %s82, %s84
      %p91 = scmp.eq.s32.totalorder %s32, 1
      %p92 = por %p90, %p91
      %p93 = scmp.ne.s32.totalorder %s84, %s85
      %p94 = scmp.eq.s32.totalorder %s32, 0
      %p95 = por %p93, %p94
      %p96 = scmp.ne.s32.totalorder %s84, %s85
      %p97 = scmp.eq.s32.totalorder %s33, 1
      %p98 = por %p96, %p97
      %p100 = scmp.ne.s32.totalorder %s85, %s99
      %p101 = scmp.eq.s32.totalorder %s33, 0
      %p102 = por %p100, %p101
      %s104 = sadd.s32 %s103, 1
      %p107 = scmp.eq.s32.totalorder %s27, 1
      %p108 = scmp.ne.s32.totalorder %s103, %s105
      %p109 = scmp.eq.s32.totalorder %s27, 0
      %p110 = por %p108, %p109
      %p111 = scmp.ne.s32.totalorder %s103, %s105
      %p112 = scmp.eq.s32.totalorder %s32, 1
      %p113 = por %p111, %p112
      %p114 = scmp.ne.s32.totalorder %s105, %s106
      %p115 = scmp.eq.s32.totalorder %s32, 0
      %p116 = por %p114, %p115
      %p117 = scmp.ne.s32.totalorder %s105, %s106
      %p118 = scmp.eq.s32.totalorder %s33, 1
      %p119 = por %p117, %p118
      %p121 = scmp.ne.s32.totalorder %s106, %s120
      %p122 = scmp.eq.s32.totalorder %s33, 0
      %p123 = por %p121, %p122
      %s125 = sadd.s32 %s124, 1
      %p128 = scmp.eq.s32.totalorder %s27, 1
      %p129 = scmp.ne.s32.totalorder %s124, %s126
      %p130 = scmp.eq.s32.totalorder %s27, 0
      %p131 = por %p129, %p130
      %p132 = scmp.ne.s32.totalorder %s124, %s126
      %p133 = scmp.eq.s32.totalorder %s32, 1
      %p134 = por %p132, %p133
      %p135 = scmp.ne.s32.totalorder %s126, %s127
      %p136 = scmp.eq.s32.totalorder %s32, 0
      %p137 = por %p135, %p136
      %p138 = scmp.ne.s32.totalorder %s126, %s127
      %p139 = scmp.eq.s32.totalorder %s33, 1
      %p140 = por %p138, %p139
      %p142 = scmp.ne.s32.totalorder %s127, %s141
      %p143 = scmp.eq.s32.totalorder %s33, 0
      %p144 = por %p142, %p143
      %s146 = sadd.s32 %s145, 1
      %p149 = scmp.eq.s32.totalorder %s27, 1
      %p150 = scmp.ne.s32.totalorder %s145, %s147
      %p151 = scmp.eq.s32.totalorder %s27, 0
      %p152 = por %p150, %p151
      %p153 = scmp.ne.s32.totalorder %s145, %s147
      %p154 = scmp.eq.s32.totalorder %s32, 1
      %p155 = por %p153, %p154
      %p156 = scmp.ne.s32.totalorder %s147, %s148
      %p157 = scmp.eq.s32.totalorder %s32, 0
      %p158 = por %p156, %p157
      %p159 = scmp.ne.s32.totalorder %s147, %s148
      %p160 = scmp.eq.s32.totalorder %s33, 1
      %p161 = por %p159, %p160
      %p163 = scmp.ne.s32.totalorder %s148, %s162
      %p164 = scmp.eq.s32.totalorder %s33, 0
      %p165 = por %p163, %p164
      %s167 = sadd.s32 %s166, 1
      %p170 = scmp.eq.s32.totalorder %s27, 1
      %p171 = scmp.ne.s32.totalorder %s166, %s168
      %p172 = scmp.eq.s32.totalorder %s27, 0
      %p173 = por %p171, %p172
      %p174 = scmp.ne.s32.totalorder %s166, %s168
      %p175 = scmp.eq.s32.totalorder %s32, 1
      %p176 = por %p174, %p175
      %p177 = scmp.ne.s32.totalorder %s168, %s169
      %p178 = scmp.eq.s32.totalorder %s32, 0
      %p179 = por %p177, %p178
      %p180 = scmp.ne.s32.totalorder %s168, %s169
      %p181 = scmp.eq.s32.totalorder %s33, 1
      %p182 = por %p180, %p181
      %p184 = scmp.ne.s32.totalorder %s169, %s183
      %p185 = scmp.eq.s32.totalorder %s33, 0
      %p186 = por %p184, %p185
      %s188 = sadd.s32 %s187, 1
      %p191 = scmp.eq.s32.totalorder %s27, 1
      %p192 = scmp.ne.s32.totalorder %s187, %s189
      %p193 = scmp.eq.s32.totalorder %s27, 0
      %p194 = por %p192, %p193
      %p195 = scmp.ne.s32.totalorder %s187, %s189
      %p196 = scmp.eq.s32.totalorder %s32, 1
      %p197 = por %p195, %p196
      %p198 = scmp.ne.s32.totalorder %s189, %s190
      %p199 = scmp.eq.s32.totalorder %s32, 0
      %p200 = por %p198, %p199
      %p201 = scmp.ne.s32.totalorder %s189, %s190
      %p202 = scmp.eq.s32.totalorder %s33, 1
      %p203 = por %p201, %p202
      %p205 = scmp.ne.s32.totalorder %s190, %s204
      %p206 = scmp.eq.s32.totalorder %s33, 0
      %p207 = por %p205, %p206
      %s209 = sadd.s32 %s208, 1
      %p212 = scmp.eq.s32.totalorder %s27, 1
      %p213 = scmp.ne.s32.totalorder %s208, %s210
      %p214 = scmp.eq.s32.totalorder %s27, 0
      %p215 = por %p213, %p214
      %p216 = scmp.ne.s32.totalorder %s208, %s210
      %p217 = scmp.eq.s32.totalorder %s32, 1
      %p218 = por %p216, %p217
      %p219 = scmp.ne.s32.totalorder %s210, %s211
      %p220 = scmp.eq.s32.totalorder %s32, 0
      %p221 = por %p219, %p220
      %p222 = scmp.ne.s32.totalorder %s210, %s211
      %p223 = scmp.eq.s32.totalorder %s33, 1
      %p224 = por %p222, %p223
      %p226 = scmp.ne.s32.totalorder %s211, %s225
      %p227 = scmp.eq.s32.totalorder %s33, 0
      %p228 = por %p226, %p227
      %s230 = sadd.s32 %s229, 1
      %p233 = scmp.eq.s32.totalorder %s27, 1
      %p234 = scmp.ne.s32.totalorder %s229, %s231
      %p235 = scmp.eq.s32.totalorder %s27, 0
      %p236 = por %p234, %p235
      %p237 = scmp.ne.s32.totalorder %s229, %s231
      %p238 = scmp.eq.s32.totalorder %s32, 1
      %p239 = por %p237, %p238
      %p240 = scmp.ne.s32.totalorder %s231, %s232
      %p241 = scmp.eq.s32.totalorder %s32, 0
      %p242 = por %p240, %p241
      %p243 = scmp.ne.s32.totalorder %s231, %s232
      %p244 = scmp.eq.s32.totalorder %s33, 1
      %p245 = por %p243, %p244
      %p247 = scmp.ne.s32.totalorder %s232, %s246
      %p248 = scmp.eq.s32.totalorder %s33, 0
      %p249 = por %p247, %p248
      %s251 = sadd.s32 %s250, 1
      %p254 = scmp.eq.s32.totalorder %s27, 1
      %p255 = scmp.ne.s32.totalorder %s250, %s252
      %p256 = scmp.eq.s32.totalorder %s27, 0
      %p257 = por %p255, %p256
      %p258 = scmp.ne.s32.totalorder %s250, %s252
      %p259 = scmp.eq.s32.totalorder %s32, 1
      %p260 = por %p258, %p259
      %p261 = scmp.ne.s32.totalorder %s252, %s253
      %p262 = scmp.eq.s32.totalorder %s32, 0
      %p263 = por %p261, %p262
      %p264 = scmp.ne.s32.totalorder %s252, %s253
      %p265 = scmp.eq.s32.totalorder %s33, 1
      %p266 = por %p264, %p265
      %p268 = scmp.ne.s32.totalorder %s253, %s267
      %p269 = scmp.eq.s32.totalorder %s33, 0
      %p270 = por %p268, %p269
      %s272 = sadd.s32 %s271, 1
      %p275 = scmp.eq.s32.totalorder %s27, 1
      %p276 = scmp.ne.s32.totalorder %s271, %s273
      %p277 = scmp.eq.s32.totalorder %s27, 0
      %p278 = por %p276, %p277
      %p279 = scmp.ne.s32.totalorder %s271, %s273
      %p280 = scmp.eq.s32.totalorder %s32, 1
      %p281 = por %p279, %p280
      %p282 = scmp.ne.s32.totalorder %s273, %s274
      %p283 = scmp.eq.s32.totalorder %s32, 0
      %p284 = por %p282, %p283
      %p285 = scmp.ne.s32.totalorder %s273, %s274
      %p286 = scmp.eq.s32.totalorder %s33, 1
      %p287 = por %p285, %p286
      %p289 = scmp.ne.s32.totalorder %s274, %s288
      %p290 = scmp.eq.s32.totalorder %s33, 0
      %p291 = por %p289, %p290
      %s293 = sadd.s32 %s292, 1
      %p296 = scmp.eq.s32.totalorder %s27, 1
      %p297 = scmp.ne.s32.totalorder %s292, %s294
      %p298 = scmp.eq.s32.totalorder %s27, 0
      %p299 = por %p297, %p298
      %p300 = scmp.ne.s32.totalorder %s292, %s294
      %p301 = scmp.eq.s32.totalorder %s32, 1
      %p302 = por %p300, %p301
      %p303 = scmp.ne.s32.totalorder %s294, %s295
      %p304 = scmp.eq.s32.totalorder %s32, 0
      %p305 = por %p303, %p304
      %p306 = scmp.ne.s32.totalorder %s294, %s295
      %p307 = scmp.eq.s32.totalorder %s33, 1
      %p308 = por %p306, %p307
      %p310 = scmp.ne.s32.totalorder %s295, %s309
      %p311 = scmp.eq.s32.totalorder %s33, 0
      %p312 = por %p310, %p311
      %s314 = sadd.s32 %s313, 1
      %p317 = scmp.eq.s32.totalorder %s27, 1
      %p318 = scmp.ne.s32.totalorder %s313, %s315
      %p319 = scmp.eq.s32.totalorder %s27, 0
      %p320 = por %p318, %p319
      %p321 = scmp.ne.s32.totalorder %s313, %s315
      %p322 = scmp.eq.s32.totalorder %s32, 1
      %p323 = por %p321, %p322
      %p324 = scmp.ne.s32.totalorder %s315, %s316
      %p325 = scmp.eq.s32.totalorder %s32, 0
      %p326 = por %p324, %p325
      %p327 = scmp.ne.s32.totalorder %s315, %s316
      %p328 = scmp.eq.s32.totalorder %s33, 1
      %p329 = por %p327, %p328
      %p331 = scmp.ne.s32.totalorder %s316, %s330
      %p332 = scmp.eq.s32.totalorder %s33, 0
      %p333 = por %p331, %p332
      %s335 = sadd.s32 %s334, 1
      %p338 = scmp.eq.s32.totalorder %s27, 1
      %p339 = scmp.ne.s32.totalorder %s334, %s336
      %p340 = scmp.eq.s32.totalorder %s27, 0
      %p341 = por %p339, %p340
      %p342 = scmp.ne.s32.totalorder %s334, %s336
      %p343 = scmp.eq.s32.totalorder %s32, 1
      %p344 = por %p342, %p343
      %p345 = scmp.ne.s32.totalorder %s336, %s337
      %p346 = scmp.eq.s32.totalorder %s32, 0
      %p347 = por %p345, %p346
      %p348 = scmp.ne.s32.totalorder %s336, %s337
      %p349 = scmp.eq.s32.totalorder %s33, 1
      %p350 = por %p348, %p349
      %p352 = scmp.ne.s32.totalorder %s337, %s351
      %p353 = scmp.eq.s32.totalorder %s33, 0
      %p354 = por %p352, %p353
      %s355 = ssub.s32 %s27, %s34
      %p356 = scmp.eq.s32.totalorder %s355, 0
      %s358 = sadd.s32 %s357, 1
      %s359 = scalar_select %p356, %s357, %s358
      %p362 = pneg %p356
      %p363 = scmp.eq.s32.totalorder %s27, 1
      %p364 = por %p362, %p363
      %p365 = scmp.ne.s32.totalorder %s357, %s360
      %p366 = scmp.eq.s32.totalorder %s27, 0
      %p367 = por %p365, %p366
      %p368 = scmp.ne.s32.totalorder %s357, %s360
      %p369 = scmp.eq.s32.totalorder %s32, 1
      %p370 = por %p368, %p369
      %p371 = scmp.ne.s32.totalorder %s360, %s361
      %p372 = scmp.eq.s32.totalorder %s32, 0
      %p373 = por %p371, %p372
      %p374 = scmp.ne.s32.totalorder %s360, %s361
      %p375 = scmp.eq.s32.totalorder %s33, 1
      %p376 = por %p374, %p375
      %p378 = scmp.ne.s32.totalorder %s361, %s377
      %p379 = scmp.eq.s32.totalorder %s33, 0
      %p380 = por %p378, %p379
      %p381 = scmp.le.s32.totalorder 1, %s27
      %p382 = scmp.lt.s32.totalorder %s27, 3
      %p383 = pnand %p381, %p382
      %p384 = pneg %p383
      // Predicated region
      $region9: #{lenet_forward.1} parent=5 // pred_check
        _
      $region10: #{lenet_forward.1} parent=5 // pred_check_branch
        %386 = sbr.rel (%p383) target = $region12
      $region11: #{lenet_forward.1} parent=5 // pred_region
        %s387 = ssub.s32 %s27, 1
        // Predicated region
        $region13: #{lenet_forward.1} parent=11 // pred_check
          %p388 = pneg %p74
        $region14: #{lenet_forward.1} parent=11 // pred_check_branch
          %390 = sbr.rel (%p388) target = $region16
        $region15: #{lenet_forward.1} parent=11 // pred_region
          %s392 = ssub.s32 2560, 2560
          %393 = vsyncadd [#allocation3], %s392
          %s394 = sshll.u32 [#allocation2], 4
          %s395 = int_to_ptr.vmem [resolvable:$true] %s394
          %400 = dma.hbm_to_vmem [thread:$0]  %s1, 2560, %s395, [#allocation3], 128, 128, 8
        $region16: #{lenet_forward.1} parent=11 // pred_fallthru
          _
        // Predicated region
        $region17: #{lenet_forward.1} parent=11 // pred_check
          %p401 = pneg %p95
        $region18: #{lenet_forward.1} parent=11 // pred_check_branch
          %403 = sbr.rel (%p401) target = $region20
        $region19: #{lenet_forward.1} parent=11 // pred_region
          _
        $region20: #{lenet_forward.1} parent=11 // pred_fallthru
          _
        // Predicated region
        $region21: #{lenet_forward.1} parent=11 // pred_check
          %p404 = pneg %p116
        $region22: #{lenet_forward.1} parent=11 // pred_check_branch
          %406 = sbr.rel (%p404) target = $region24
        $region23: #{lenet_forward.1} parent=11 // pred_region
          _
        $region24: #{lenet_forward.1} parent=11 // pred_fallthru
          _
        // Predicated region
        $region25: #{lenet_forward.1} parent=11 // pred_check
          %p407 = pneg %p137
        $region26: #{lenet_forward.1} parent=11 // pred_check_branch
          %409 = sbr.rel (%p407) target = $region28
        $region27: #{lenet_forward.1} parent=11 // pred_region
          _
        $region28: #{lenet_forward.1} parent=11 // pred_fallthru
          _
        // Predicated region
        $region29: #{lenet_forward.1} parent=11 // pred_check
          %p410 = pneg %p158
        $region30: #{lenet_forward.1} parent=11 // pred_check_branch
          %412 = sbr.rel (%p410) target = $region32
        $region31: #{lenet_forward.1} parent=11 // pred_region
          _
        $region32: #{lenet_forward.1} parent=11 // pred_fallthru
          _
        // Predicated region
        $region33: #{lenet_forward.1} parent=11 // pred_check
          %p413 = pneg %p179
        $region34: #{lenet_forward.1} parent=11 // pred_check_branch
          %415 = sbr.rel (%p413) target = $region36
        $region35: #{lenet_forward.1} parent=11 // pred_region
          _
        $region36: #{lenet_forward.1} parent=11 // pred_fallthru
          _
        // Predicated region
        $region37: #{lenet_forward.1} parent=11 // pred_check
          %p416 = pneg %p200
        $region38: #{lenet_forward.1} parent=11 // pred_check_branch
          %418 = sbr.rel (%p416) target = $region40
        $region39: #{lenet_forward.1} parent=11 // pred_region
          %s420 = ssub.s32 640, 640
          %421 = vsyncadd [#allocation6], %s420
          %s422 = sshll.u32 [#allocation5], 4
          %s423 = int_to_ptr.vmem [resolvable:$true] %s422
          %428 = dma.hbm_to_vmem [thread:$0]  %s7, 640, %s423, [#allocation6], 64, 64, 4
        $region40: #{lenet_forward.1} parent=11 // pred_fallthru
          _
        // Predicated region
        $region41: #{lenet_forward.1} parent=11 // pred_check
          %p429 = pneg %p221
        $region42: #{lenet_forward.1} parent=11 // pred_check_branch
          %431 = sbr.rel (%p429) target = $region44
        $region43: #{lenet_forward.1} parent=11 // pred_region
          %s433 = ssub.s32 2560, 2560
          %434 = vsyncadd [#allocation6], %s433
          %s435 = sshll.u32 [#allocation7], 4
          %s436 = int_to_ptr.vmem [resolvable:$true] %s435
          %441 = dma.hbm_to_vmem [thread:$0]  %s8, 2560, %s436, [#allocation6], 64, 64, 4
        $region44: #{lenet_forward.1} parent=11 // pred_fallthru
          _
        // Predicated region
        $region45: #{lenet_forward.1} parent=11 // pred_check
          %p442 = pneg %p242
        $region46: #{lenet_forward.1} parent=11 // pred_check_branch
          %444 = sbr.rel (%p442) target = $region48
        $region47: #{lenet_forward.1} parent=11 // pred_region
          %s446 = ssub.s32 3200, 3200
          %447 = vsyncadd [#allocation9], %s446
          %s448 = sshll.u32 [#allocation8], 4
          %s449 = int_to_ptr.vmem [resolvable:$true] %s448
          %454 = dma.hbm_to_vmem [thread:$0]  %s9, 3200, %s449, [#allocation9], 64, 64, 4
        $region48: #{lenet_forward.1} parent=11 // pred_fallthru
          _
        // Predicated region
        $region49: #{lenet_forward.1} parent=11 // pred_check
          %p455 = pneg %p263
        $region50: #{lenet_forward.1} parent=11 // pred_check_branch
          %457 = sbr.rel (%p455) target = $region52
        $region51: #{lenet_forward.1} parent=11 // pred_region
          _
        $region52: #{lenet_forward.1} parent=11 // pred_fallthru
          _
        // Predicated region
        $region53: #{lenet_forward.1} parent=11 // pred_check
          %p458 = pneg %p284
        $region54: #{lenet_forward.1} parent=11 // pred_check_branch
          %460 = sbr.rel (%p458) target = $region56
        $region55: #{lenet_forward.1} parent=11 // pred_region
          _
        $region56: #{lenet_forward.1} parent=11 // pred_fallthru
          _
        // Predicated region
        $region57: #{lenet_forward.1} parent=11 // pred_check
          %p461 = pneg %p305
        $region58: #{lenet_forward.1} parent=11 // pred_check_branch
          %463 = sbr.rel (%p461) target = $region60
        $region59: #{lenet_forward.1} parent=11 // pred_region
          _
        $region60: #{lenet_forward.1} parent=11 // pred_fallthru
          _
        // Predicated region
        $region61: #{lenet_forward.1} parent=11 // pred_check
          %p464 = pneg %p326
        $region62: #{lenet_forward.1} parent=11 // pred_check_branch
          %466 = sbr.rel (%p464) target = $region64
        $region63: #{lenet_forward.1} parent=11 // pred_region
          _
        $region64: #{lenet_forward.1} parent=11 // pred_fallthru
          _
        // Predicated region
        $region65: #{lenet_forward.1} parent=11 // pred_check
          %p467 = pneg %p347
        $region66: #{lenet_forward.1} parent=11 // pred_check_branch
          %469 = sbr.rel (%p467) target = $region68
        $region67: #{lenet_forward.1} parent=11 // pred_region
          _
        $region68: #{lenet_forward.1} parent=11 // pred_fallthru
          _
      $region12: #{lenet_forward.1} parent=5 // pred_fallthru
        _
      %p470 = scmp.lt.s32.totalorder %s27, 2
      // Predicated region
      $region69: #{lenet_forward.1} parent=5 // pred_check
        %p471 = pneg %p470
      $region70: #{lenet_forward.1} parent=5 // pred_check_branch
        %473 = sbr.rel (%p471) target = $region72
      $region71: #{lenet_forward.1} parent=5 // pred_region
        // Predicated region
        $region73: #{lenet_forward.1} parent=71 // pred_check
          %p474 = pneg %p47
        $region74: #{lenet_forward.1} parent=71 // pred_check_branch
          %476 = sbr.rel (%p474) target = $region76
        $region75: #{lenet_forward.1} parent=71 // pred_region
          %s477 = smul.u32 32, %s27
          %p478 = scmp.lt.s32.totalorder %s477, 63
          %s479 = scalar_select %p478, %s477, 63
          %s480 = smul.addr %s479, 8
          %s481 = scalar_lea.vmem %s0, %s480
          %s482 = smul.u32 32, %s27
        $region76: #{lenet_forward.1} parent=71 // pred_fallthru
          _
      $region72: #{lenet_forward.1} parent=5 // pred_fallthru
        _
      %p483 = scmp.le.s32.totalorder 1, %s27
      %p484 = scmp.lt.s32.totalorder %s27, 3
      %p485 = pnand %p483, %p484
      %p486 = pneg %p485
      // Predicated region
      $region77: #{lenet_forward.1} parent=5 // pred_check
        _
      $region78: #{lenet_forward.1} parent=5 // pred_check_branch
        %488 = sbr.rel (%p485) target = $region80
      $region79: #{lenet_forward.1} parent=5 // pred_region
        %s489 = ssub.s32 %s27, 1
        // Predicated region
        $region81: #{lenet_forward.1} parent=79 // pred_check
          %p490 = pneg %p74
        $region82: #{lenet_forward.1} parent=79 // pred_check_branch
          %492 = sbr.rel (%p490) target = $region84
        $region83: #{lenet_forward.1} parent=79 // pred_region
          %493 = dma.done [#allocation3], 2560
        $region84: #{lenet_forward.1} parent=79 // pred_fallthru
          _
        // Predicated region
        $region85: #{lenet_forward.1} parent=79 // pred_check
          %p494 = pneg %p200
        $region86: #{lenet_forward.1} parent=79 // pred_check_branch
          %496 = sbr.rel (%p494) target = $region88
        $region87: #{lenet_forward.1} parent=79 // pred_region
          %497 = dma.done [#allocation6], 640
        $region88: #{lenet_forward.1} parent=79 // pred_fallthru
          _
        // Predicated region
        $region89: #{lenet_forward.1} parent=79 // pred_check
          %p498 = pneg %p221
        $region90: #{lenet_forward.1} parent=79 // pred_check_branch
          %500 = sbr.rel (%p498) target = $region92
        $region91: #{lenet_forward.1} parent=79 // pred_region
          %501 = dma.done [#allocation6], 2560
        $region92: #{lenet_forward.1} parent=79 // pred_fallthru
          _
        // Predicated region
        $region93: #{lenet_forward.1} parent=79 // pred_check
          %p502 = pneg %p242
        $region94: #{lenet_forward.1} parent=79 // pred_check_branch
          %504 = sbr.rel (%p502) target = $region96
        $region95: #{lenet_forward.1} parent=79 // pred_region
          %505 = dma.done [#allocation9], 3200
        $region96: #{lenet_forward.1} parent=79 // pred_fallthru
          _
        %s506 = smul.u32 32, %s32
        %p507 = scmp.lt.s32.totalorder %s506, 63
        %s508 = scalar_select %p507, %s506, 63
        %s509 = smul.addr %s508, 8
        %s510 = scalar_lea.vmem %s0, %s509
        %p511 = pneg %p53
        %p512 = pneg %p50
        %p513 = pneg %p74
        %p514 = pneg %p71
        %p515 = pneg %p95
        %p516 = pneg %p92
        %p517 = pneg %p116
        %p518 = pneg %p113
        %p519 = pneg %p137
        %p520 = pneg %p134
        %p521 = pneg %p158
        %p522 = pneg %p155
        %p523 = pneg %p179
        %p524 = pneg %p176
        %p525 = pneg %p200
        %p526 = pneg %p197
        %p527 = pneg %p221
        %p528 = pneg %p218
        %p529 = pneg %p242
        %p530 = pneg %p239
        %p531 = pneg %p263
        %p532 = pneg %p260
        %p533 = pneg %p284
        %p534 = pneg %p281
        %p535 = pneg %p305
        %p536 = pneg %p302
        %p537 = pneg %p326
        %p538 = pneg %p323
        %p539 = pneg %p347
        %p540 = pneg %p344
        %p541 = pneg %p373
        %p542 = pneg %p370
        %s543 = sand.u32 %s360, 1
        %s544 = scalar_lea.sflag [#allocation4], %s543
        %s545 = sand.u32 %s360, 1
        %s546 = smul.addr %s545, 8
        %s547 = scalar_lea.vmem [#allocation10], %s546
        %s548 = smul.u32 32, %s32
        %p549 = scmp.lt.s32.totalorder %s548, 63
        %s550 = scalar_select %p549, %s548, 63
        %s551 = smul.addr %s550, 8
        %s552 = scalar_lea.vmem %s0, %s551
        %s553 = smul.u32 32, %s32
        %v555 = vld [vmem:[%s552] sm:$0xff]
        %v556 = vld [vmem:[%s552 + $0x8] sm:$0xff]
        %v557 = vld [vmem:[%s552 + $0x10] sm:$0xff]
        %v558 = vld [vmem:[%s552 + $0x18] sm:$0xff]
        %v559 = vld [vmem:[%s552 + $0x20] sm:$0xff]
        %v560 = vld [vmem:[%s552 + $0x28] sm:$0xff]
        %v561 = vld [vmem:[%s552 + $0x30] sm:$0xff]
        %v562 = vld [vmem:[%s552 + $0x38] sm:$0xff]
        %v563 = vld [vmem:[%s552 + $0x40] sm:$0xff]
        %v564 = vld [vmem:[%s552 + $0x48] sm:$0xff]
        %v565 = vld [vmem:[%s552 + $0x50] sm:$0xff]
        %v566 = vld [vmem:[%s552 + $0x58] sm:$0xff]
        %v567 = vld [vmem:[%s552 + $0x60] sm:$0xff]
        %v568 = vld [vmem:[%s552 + $0x68] sm:$0xff]
        %v569 = vld [vmem:[%s552 + $0x70] sm:$0xff]
        %v570 = vld [vmem:[%s552 + $0x78] sm:$0xff]
        %v571 = vld [vmem:[%s552 + $0x80] sm:$0xff]
        %v572 = vld [vmem:[%s552 + $0x88] sm:$0xff]
        %v573 = vld [vmem:[%s552 + $0x90] sm:$0xff]
        %v574 = vld [vmem:[%s552 + $0x98] sm:$0xff]
        %v575 = vld [vmem:[%s552 + $0xa0] sm:$0xff]
        %v576 = vld [vmem:[%s552 + $0xa8] sm:$0xff]
        %v577 = vld [vmem:[%s552 + $0xb0] sm:$0xff]
        %v578 = vld [vmem:[%s552 + $0xb8] sm:$0xff]
        %v579 = vld [vmem:[%s552 + $0xc0] sm:$0xff]
        %v580 = vld [vmem:[%s552 + $0xc8] sm:$0xff]
        %v581 = vld [vmem:[%s552 + $0xd0] sm:$0xff]
        %v582 = vld [vmem:[%s552 + $0xd8] sm:$0xff]
        %v583 = vld [vmem:[%s552 + $0xe0] sm:$0xff]
        %v584 = vld [vmem:[%s552 + $0xe8] sm:$0xff]
        %v585 = vld [vmem:[%s552 + $0xf0] sm:$0xff]
        %v586 = vld [vmem:[%s552 + $0xf8] sm:$0xff]
        %vm619 = vcmask 1046528
        %v620 = vrot.slane %v555, 1
        %v621 = vrot.slane %v556, 1
        %v622 = vsel %vm619, %v620, %v621
        %v623 = vrot.slane %v557, 1
        %v624 = vsel %vm619, %v621, %v623
        %v625 = vrot.slane %v558, 1
        %v626 = vsel %vm619, %v623, %v625
        %v627 = vrot.slane %v559, 1
        %v628 = vsel %vm619, %v625, %v627
        %v629 = vrot.slane %v560, 1
        %v630 = vsel %vm619, %v627, %v629
        %v631 = vrot.slane %v561, 1
        %v632 = vsel %vm619, %v629, %v631
        %v633 = vrot.slane %v562, 1
        %v634 = vsel %vm619, %v631, %v633
        %v635 = vrot.slane %v563, 1
        %v636 = vsel %vm619, %v633, %v635
        %v637 = vrot.slane %v564, 1
        %v638 = vsel %vm619, %v635, %v637
        %v639 = vrot.slane %v565, 1
        %v640 = vsel %vm619, %v637, %v639
        %v641 = vrot.slane %v566, 1
        %v642 = vsel %vm619, %v639, %v641
        %v643 = vrot.slane %v567, 1
        %v644 = vsel %vm619, %v641, %v643
        %v645 = vrot.slane %v568, 1
        %v646 = vsel %vm619, %v643, %v645
        %v647 = vrot.slane %v569, 1
        %v648 = vsel %vm619, %v645, %v647
        %v649 = vrot.slane %v570, 1
        %v650 = vsel %vm619, %v647, %v649
        %v651 = vrot.slane %v571, 1
        %v652 = vsel %vm619, %v649, %v651
        %v653 = vrot.slane %v572, 1
        %v654 = vsel %vm619, %v651, %v653
        %v655 = vrot.slane %v573, 1
        %v656 = vsel %vm619, %v653, %v655
        %v657 = vrot.slane %v574, 1
        %v658 = vsel %vm619, %v655, %v657
        %v659 = vrot.slane %v575, 1
        %v660 = vsel %vm619, %v657, %v659
        %v661 = vrot.slane %v576, 1
        %v662 = vsel %vm619, %v659, %v661
        %v663 = vrot.slane %v577, 1
        %v664 = vsel %vm619, %v661, %v663
        %v665 = vrot.slane %v578, 1
        %v666 = vsel %vm619, %v663, %v665
        %v667 = vrot.slane %v579, 1
        %v668 = vsel %vm619, %v665, %v667
        %v669 = vrot.slane %v580, 1
        %v670 = vsel %vm619, %v667, %v669
        %v671 = vrot.slane %v581, 1
        %v672 = vsel %vm619, %v669, %v671
        %v673 = vrot.slane %v582, 1
        %v674 = vsel %vm619, %v671, %v673
        %v675 = vrot.slane %v583, 1
        %v676 = vsel %vm619, %v673, %v675
        %v677 = vrot.slane %v584, 1
        %v678 = vsel %vm619, %v675, %v677
        %v679 = vrot.slane %v585, 1
        %v680 = vsel %vm619, %v677, %v679
        %v681 = vrot.slane %v586, 1
        %v682 = vsel %vm619, %v679, %v681
        %v685 = vsel %vm619, %v681, %v620
        %vm686 = vcmask 1045504
        %v687 = vrot.slane %v555, 2
        %v688 = vrot.slane %v556, 2
        %v689 = vsel %vm686, %v687, %v688
        %v690 = vrot.slane %v557, 2
        %v691 = vsel %vm686, %v688, %v690
        %v692 = vrot.slane %v558, 2
        %v693 = vsel %vm686, %v690, %v692
        %v694 = vrot.slane %v559, 2
        %v695 = vsel %vm686, %v692, %v694
        %v696 = vrot.slane %v560, 2
        %v697 = vsel %vm686, %v694, %v696
        %v698 = vrot.slane %v561, 2
        %v699 = vsel %vm686, %v696, %v698
        %v700 = vrot.slane %v562, 2
        %v701 = vsel %vm686, %v698, %v700
        %v702 = vrot.slane %v563, 2
        %v703 = vsel %vm686, %v700, %v702
        %v704 = vrot.slane %v564, 2
        %v705 = vsel %vm686, %v702, %v704
        %v706 = vrot.slane %v565, 2
        %v707 = vsel %vm686, %v704, %v706
        %v708 = vrot.slane %v566, 2
        %v709 = vsel %vm686, %v706, %v708
        %v710 = vrot.slane %v567, 2
        %v711 = vsel %vm686, %v708, %v710
        %v712 = vrot.slane %v568, 2
        %v713 = vsel %vm686, %v710, %v712
        %v714 = vrot.slane %v569, 2
        %v715 = vsel %vm686, %v712, %v714
        %v716 = vrot.slane %v570, 2
        %v717 = vsel %vm686, %v714, %v716
        %v718 = vrot.slane %v571, 2
        %v719 = vsel %vm686, %v716, %v718
        %v720 = vrot.slane %v572, 2
        %v721 = vsel %vm686, %v718, %v720
        %v722 = vrot.slane %v573, 2
        %v723 = vsel %vm686, %v720, %v722
        %v724 = vrot.slane %v574, 2
        %v725 = vsel %vm686, %v722, %v724
        %v726 = vrot.slane %v575, 2
        %v727 = vsel %vm686, %v724, %v726
        %v728 = vrot.slane %v576, 2
        %v729 = vsel %vm686, %v726, %v728
        %v730 = vrot.slane %v577, 2
        %v731 = vsel %vm686, %v728, %v730
        %v732 = vrot.slane %v578, 2
        %v733 = vsel %vm686, %v730, %v732
        %v734 = vrot.slane %v579, 2
        %v735 = vsel %vm686, %v732, %v734
        %v736 = vrot.slane %v580, 2
        %v737 = vsel %vm686, %v734, %v736
        %v738 = vrot.slane %v581, 2
        %v739 = vsel %vm686, %v736, %v738
        %v740 = vrot.slane %v582, 2
        %v741 = vsel %vm686, %v738, %v740
        %v742 = vrot.slane %v583, 2
        %v743 = vsel %vm686, %v740, %v742
        %v744 = vrot.slane %v584, 2
        %v745 = vsel %vm686, %v742, %v744
        %v746 = vrot.slane %v585, 2
        %v747 = vsel %vm686, %v744, %v746
        %v748 = vrot.slane %v586, 2
        %v749 = vsel %vm686, %v746, %v748
        %v752 = vsel %vm686, %v748, %v687
        %vm753 = vcmask 1044480
        %v754 = vrot.slane %v555, 3
        %v755 = vrot.slane %v556, 3
        %v756 = vsel %vm753, %v754, %v755
        %v757 = vrot.slane %v557, 3
        %v758 = vsel %vm753, %v755, %v757
        %v759 = vrot.slane %v558, 3
        %v760 = vsel %vm753, %v757, %v759
        %v761 = vrot.slane %v559, 3
        %v762 = vsel %vm753, %v759, %v761
        %v763 = vrot.slane %v560, 3
        %v764 = vsel %vm753, %v761, %v763
        %v765 = vrot.slane %v561, 3
        %v766 = vsel %vm753, %v763, %v765
        %v767 = vrot.slane %v562, 3
        %v768 = vsel %vm753, %v765, %v767
        %v769 = vrot.slane %v563, 3
        %v770 = vsel %vm753, %v767, %v769
        %v771 = vrot.slane %v564, 3
        %v772 = vsel %vm753, %v769, %v771
        %v773 = vrot.slane %v565, 3
        %v774 = vsel %vm753, %v771, %v773
        %v775 = vrot.slane %v566, 3
        %v776 = vsel %vm753, %v773, %v775
        %v777 = vrot.slane %v567, 3
        %v778 = vsel %vm753, %v775, %v777
        %v779 = vrot.slane %v568, 3
        %v780 = vsel %vm753, %v777, %v779
        %v781 = vrot.slane %v569, 3
        %v782 = vsel %vm753, %v779, %v781
        %v783 = vrot.slane %v570, 3
        %v784 = vsel %vm753, %v781, %v783
        %v785 = vrot.slane %v571, 3
        %v786 = vsel %vm753, %v783, %v785
        %v787 = vrot.slane %v572, 3
        %v788 = vsel %vm753, %v785, %v787
        %v789 = vrot.slane %v573, 3
        %v790 = vsel %vm753, %v787, %v789
        %v791 = vrot.slane %v574, 3
        %v792 = vsel %vm753, %v789, %v791
        %v793 = vrot.slane %v575, 3
        %v794 = vsel %vm753, %v791, %v793
        %v795 = vrot.slane %v576, 3
        %v796 = vsel %vm753, %v793, %v795
        %v797 = vrot.slane %v577, 3
        %v798 = vsel %vm753, %v795, %v797
        %v799 = vrot.slane %v578, 3
        %v800 = vsel %vm753, %v797, %v799
        %v801 = vrot.slane %v579, 3
        %v802 = vsel %vm753, %v799, %v801
        %v803 = vrot.slane %v580, 3
        %v804 = vsel %vm753, %v801, %v803
        %v805 = vrot.slane %v581, 3
        %v806 = vsel %vm753, %v803, %v805
        %v807 = vrot.slane %v582, 3
        %v808 = vsel %vm753, %v805, %v807
        %v809 = vrot.slane %v583, 3
        %v810 = vsel %vm753, %v807, %v809
        %v811 = vrot.slane %v584, 3
        %v812 = vsel %vm753, %v809, %v811
        %v813 = vrot.slane %v585, 3
        %v814 = vsel %vm753, %v811, %v813
        %v815 = vrot.slane %v586, 3
        %v816 = vsel %vm753, %v813, %v815
        %v819 = vsel %vm753, %v815, %v754
        %vm820 = vcmask 1043456
        %v821 = vrot.slane %v555, 4
        %v822 = vrot.slane %v556, 4
        %v823 = vsel %vm820, %v821, %v822
        %v824 = vrot.slane %v557, 4
        %v825 = vsel %vm820, %v822, %v824
        %v826 = vrot.slane %v558, 4
        %v827 = vsel %vm820, %v824, %v826
        %v828 = vrot.slane %v559, 4
        %v829 = vsel %vm820, %v826, %v828
        %v830 = vrot.slane %v560, 4
        %v831 = vsel %vm820, %v828, %v830
        %v832 = vrot.slane %v561, 4
        %v833 = vsel %vm820, %v830, %v832
        %v834 = vrot.slane %v562, 4
        %v835 = vsel %vm820, %v832, %v834
        %v836 = vrot.slane %v563, 4
        %v837 = vsel %vm820, %v834, %v836
        %v838 = vrot.slane %v564, 4
        %v839 = vsel %vm820, %v836, %v838
        %v840 = vrot.slane %v565, 4
        %v841 = vsel %vm820, %v838, %v840
        %v842 = vrot.slane %v566, 4
        %v843 = vsel %vm820, %v840, %v842
        %v844 = vrot.slane %v567, 4
        %v845 = vsel %vm820, %v842, %v844
        %v846 = vrot.slane %v568, 4
        %v847 = vsel %vm820, %v844, %v846
        %v848 = vrot.slane %v569, 4
        %v849 = vsel %vm820, %v846, %v848
        %v850 = vrot.slane %v570, 4
        %v851 = vsel %vm820, %v848, %v850
        %v852 = vrot.slane %v571, 4
        %v853 = vsel %vm820, %v850, %v852
        %v854 = vrot.slane %v572, 4
        %v855 = vsel %vm820, %v852, %v854
        %v856 = vrot.slane %v573, 4
        %v857 = vsel %vm820, %v854, %v856
        %v858 = vrot.slane %v574, 4
        %v859 = vsel %vm820, %v856, %v858
        %v860 = vrot.slane %v575, 4
        %v861 = vsel %vm820, %v858, %v860
        %v862 = vrot.slane %v576, 4
        %v863 = vsel %vm820, %v860, %v862
        %v864 = vrot.slane %v577, 4
        %v865 = vsel %vm820, %v862, %v864
        %v866 = vrot.slane %v578, 4
        %v867 = vsel %vm820, %v864, %v866
        %v868 = vrot.slane %v579, 4
        %v869 = vsel %vm820, %v866, %v868
        %v870 = vrot.slane %v580, 4
        %v871 = vsel %vm820, %v868, %v870
        %v872 = vrot.slane %v581, 4
        %v873 = vsel %vm820, %v870, %v872
        %v874 = vrot.slane %v582, 4
        %v875 = vsel %vm820, %v872, %v874
        %v876 = vrot.slane %v583, 4
        %v877 = vsel %vm820, %v874, %v876
        %v878 = vrot.slane %v584, 4
        %v879 = vsel %vm820, %v876, %v878
        %v880 = vrot.slane %v585, 4
        %v881 = vsel %vm820, %v878, %v880
        %v882 = vrot.slane %v586, 4
        %v883 = vsel %vm820, %v880, %v882
        %v917 = vsel %vm820, %v882, %v821
        %919 = vrot.lane.b32.xlu0 %v622, 32
        %v920 = vpop.permute.xlu0 %919
        %921 = vrot.lane.b32.xlu0 %v624, 32
        %v922 = vpop.permute.xlu0 %921
        %923 = vrot.lane.b32.xlu0 %v626, 32
        %v924 = vpop.permute.xlu0 %923
        %925 = vrot.lane.b32.xlu0 %v628, 32
        %v926 = vpop.permute.xlu0 %925
        %927 = vrot.lane.b32.xlu0 %v630, 32
        %v928 = vpop.permute.xlu0 %927
        %929 = vrot.lane.b32.xlu0 %v632, 32
        %v930 = vpop.permute.xlu0 %929
        %931 = vrot.lane.b32.xlu0 %v634, 32
        %v932 = vpop.permute.xlu0 %931
        %933 = vrot.lane.b32.xlu0 %v636, 32
        %v934 = vpop.permute.xlu0 %933
        %935 = vrot.lane.b32.xlu0 %v638, 32
        %v936 = vpop.permute.xlu0 %935
        %937 = vrot.lane.b32.xlu0 %v640, 32
        %v938 = vpop.permute.xlu0 %937
        %939 = vrot.lane.b32.xlu0 %v642, 32
        %v940 = vpop.permute.xlu0 %939
        %941 = vrot.lane.b32.xlu0 %v644, 32
        %v942 = vpop.permute.xlu0 %941
        %943 = vrot.lane.b32.xlu0 %v646, 32
        %v944 = vpop.permute.xlu0 %943
        %945 = vrot.lane.b32.xlu0 %v648, 32
        %v946 = vpop.permute.xlu0 %945
        %947 = vrot.lane.b32.xlu0 %v650, 32
        %v948 = vpop.permute.xlu0 %947
        %949 = vrot.lane.b32.xlu0 %v652, 32
        %v950 = vpop.permute.xlu0 %949
        %951 = vrot.lane.b32.xlu0 %v654, 32
        %v952 = vpop.permute.xlu0 %951
        %953 = vrot.lane.b32.xlu0 %v656, 32
        %v954 = vpop.permute.xlu0 %953
        %955 = vrot.lane.b32.xlu0 %v658, 32
        %v956 = vpop.permute.xlu0 %955
        %957 = vrot.lane.b32.xlu0 %v660, 32
        %v958 = vpop.permute.xlu0 %957
        %959 = vrot.lane.b32.xlu0 %v662, 32
        %v960 = vpop.permute.xlu0 %959
        %961 = vrot.lane.b32.xlu0 %v664, 32
        %v962 = vpop.permute.xlu0 %961
        %963 = vrot.lane.b32.xlu0 %v666, 32
        %v964 = vpop.permute.xlu0 %963
        %965 = vrot.lane.b32.xlu0 %v668, 32
        %v966 = vpop.permute.xlu0 %965
        %967 = vrot.lane.b32.xlu0 %v670, 32
        %v968 = vpop.permute.xlu0 %967
        %969 = vrot.lane.b32.xlu0 %v672, 32
        %v970 = vpop.permute.xlu0 %969
        %971 = vrot.lane.b32.xlu0 %v674, 32
        %v972 = vpop.permute.xlu0 %971
        %973 = vrot.lane.b32.xlu0 %v676, 32
        %v974 = vpop.permute.xlu0 %973
        %975 = vrot.lane.b32.xlu0 %v678, 32
        %v976 = vpop.permute.xlu0 %975
        %977 = vrot.lane.b32.xlu0 %v680, 32
        %v978 = vpop.permute.xlu0 %977
        %979 = vrot.lane.b32.xlu0 %v682, 32
        %v980 = vpop.permute.xlu0 %979
        %981 = vrot.lane.b32.xlu0 %v685, 32
        %v982 = vpop.permute.xlu0 %981
        %1016 = vrot.lane.b32.xlu0 %v689, 64
        %v1017 = vpop.permute.xlu0 %1016
        %1018 = vrot.lane.b32.xlu0 %v691, 64
        %v1019 = vpop.permute.xlu0 %1018
        %1020 = vrot.lane.b32.xlu0 %v693, 64
        %v1021 = vpop.permute.xlu0 %1020
        %1022 = vrot.lane.b32.xlu0 %v695, 64
        %v1023 = vpop.permute.xlu0 %1022
        %1024 = vrot.lane.b32.xlu0 %v697, 64
        %v1025 = vpop.permute.xlu0 %1024
        %1026 = vrot.lane.b32.xlu0 %v699, 64
        %v1027 = vpop.permute.xlu0 %1026
        %1028 = vrot.lane.b32.xlu0 %v701, 64
        %v1029 = vpop.permute.xlu0 %1028
        %1030 = vrot.lane.b32.xlu0 %v703, 64
        %v1031 = vpop.permute.xlu0 %1030
        %1032 = vrot.lane.b32.xlu0 %v705, 64
        %v1033 = vpop.permute.xlu0 %1032
        %1034 = vrot.lane.b32.xlu0 %v707, 64
        %v1035 = vpop.permute.xlu0 %1034
        %1036 = vrot.lane.b32.xlu0 %v709, 64
        %v1037 = vpop.permute.xlu0 %1036
        %1038 = vrot.lane.b32.xlu0 %v711, 64
        %v1039 = vpop.permute.xlu0 %1038
        %1040 = vrot.lane.b32.xlu0 %v713, 64
        %v1041 = vpop.permute.xlu0 %1040
        %1042 = vrot.lane.b32.xlu0 %v715, 64
        %v1043 = vpop.permute.xlu0 %1042
        %1044 = vrot.lane.b32.xlu0 %v717, 64
        %v1045 = vpop.permute.xlu0 %1044
        %1046 = vrot.lane.b32.xlu0 %v719, 64
        %v1047 = vpop.permute.xlu0 %1046
        %1048 = vrot.lane.b32.xlu0 %v721, 64
        %v1049 = vpop.permute.xlu0 %1048
        %1050 = vrot.lane.b32.xlu0 %v723, 64
        %v1051 = vpop.permute.xlu0 %1050
        %1052 = vrot.lane.b32.xlu0 %v725, 64
        %v1053 = vpop.permute.xlu0 %1052
        %1054 = vrot.lane.b32.xlu0 %v727, 64
        %v1055 = vpop.permute.xlu0 %1054
        %1056 = vrot.lane.b32.xlu0 %v729, 64
        %v1057 = vpop.permute.xlu0 %1056
        %1058 = vrot.lane.b32.xlu0 %v731, 64
        %v1059 = vpop.permute.xlu0 %1058
        %1060 = vrot.lane.b32.xlu0 %v733, 64
        %v1061 = vpop.permute.xlu0 %1060
        %1062 = vrot.lane.b32.xlu0 %v735, 64
        %v1063 = vpop.permute.xlu0 %1062
        %1064 = vrot.lane.b32.xlu0 %v737, 64
        %v1065 = vpop.permute.xlu0 %1064
        %1066 = vrot.lane.b32.xlu0 %v739, 64
        %v1067 = vpop.permute.xlu0 %1066
        %1068 = vrot.lane.b32.xlu0 %v741, 64
        %v1069 = vpop.permute.xlu0 %1068
        %1070 = vrot.lane.b32.xlu0 %v743, 64
        %v1071 = vpop.permute.xlu0 %1070
        %1072 = vrot.lane.b32.xlu0 %v745, 64
        %v1073 = vpop.permute.xlu0 %1072
        %1074 = vrot.lane.b32.xlu0 %v747, 64
        %v1075 = vpop.permute.xlu0 %1074
        %1076 = vrot.lane.b32.xlu0 %v749, 64
        %v1077 = vpop.permute.xlu0 %1076
        %1078 = vrot.lane.b32.xlu0 %v752, 64
        %v1079 = vpop.permute.xlu0 %1078
        %1113 = vrot.lane.b32.xlu0 %v756, 96
        %v1114 = vpop.permute.xlu0 %1113
        %1115 = vrot.lane.b32.xlu0 %v758, 96
        %v1116 = vpop.permute.xlu0 %1115
        %1117 = vrot.lane.b32.xlu0 %v760, 96
        %v1118 = vpop.permute.xlu0 %1117
        %1119 = vrot.lane.b32.xlu0 %v762, 96
        %v1120 = vpop.permute.xlu0 %1119
        %1121 = vrot.lane.b32.xlu0 %v764, 96
        %v1122 = vpop.permute.xlu0 %1121
        %1123 = vrot.lane.b32.xlu0 %v766, 96
        %v1124 = vpop.permute.xlu0 %1123
        %1125 = vrot.lane.b32.xlu0 %v768, 96
        %v1126 = vpop.permute.xlu0 %1125
        %1127 = vrot.lane.b32.xlu0 %v770, 96
        %v1128 = vpop.permute.xlu0 %1127
        %1129 = vrot.lane.b32.xlu0 %v772, 96
        %v1130 = vpop.permute.xlu0 %1129
        %1131 = vrot.lane.b32.xlu0 %v774, 96
        %v1132 = vpop.permute.xlu0 %1131
        %1133 = vrot.lane.b32.xlu0 %v776, 96
        %v1134 = vpop.permute.xlu0 %1133
        %1135 = vrot.lane.b32.xlu0 %v778, 96
        %v1136 = vpop.permute.xlu0 %1135
        %1137 = vrot.lane.b32.xlu0 %v780, 96
        %v1138 = vpop.permute.xlu0 %1137
        %1139 = vrot.lane.b32.xlu0 %v782, 96
        %v1140 = vpop.permute.xlu0 %1139
        %1141 = vrot.lane.b32.xlu0 %v784, 96
        %v1142 = vpop.permute.xlu0 %1141
        %1143 = vrot.lane.b32.xlu0 %v786, 96
        %v1144 = vpop.permute.xlu0 %1143
        %1145 = vrot.lane.b32.xlu0 %v788, 96
        %v1146 = vpop.permute.xlu0 %1145
        %1147 = vrot.lane.b32.xlu0 %v790, 96
        %v1148 = vpop.permute.xlu0 %1147
        %1149 = vrot.lane.b32.xlu0 %v792, 96
        %v1150 = vpop.permute.xlu0 %1149
        %1151 = vrot.lane.b32.xlu0 %v794, 96
        %v1152 = vpop.permute.xlu0 %1151
        %1153 = vrot.lane.b32.xlu0 %v796, 96
        %v1154 = vpop.permute.xlu0 %1153
        %1155 = vrot.lane.b32.xlu0 %v798, 96
        %v1156 = vpop.permute.xlu0 %1155
        %1157 = vrot.lane.b32.xlu0 %v800, 96
        %v1158 = vpop.permute.xlu0 %1157
        %1159 = vrot.lane.b32.xlu0 %v802, 96
        %v1160 = vpop.permute.xlu0 %1159
        %1161 = vrot.lane.b32.xlu0 %v804, 96
        %v1162 = vpop.permute.xlu0 %1161
        %1163 = vrot.lane.b32.xlu0 %v806, 96
        %v1164 = vpop.permute.xlu0 %1163
        %1165 = vrot.lane.b32.xlu0 %v808, 96
        %v1166 = vpop.permute.xlu0 %1165
        %1167 = vrot.lane.b32.xlu0 %v810, 96
        %v1168 = vpop.permute.xlu0 %1167
        %1169 = vrot.lane.b32.xlu0 %v812, 96
        %v1170 = vpop.permute.xlu0 %1169
        %1171 = vrot.lane.b32.xlu0 %v814, 96
        %v1172 = vpop.permute.xlu0 %1171
        %1173 = vrot.lane.b32.xlu0 %v816, 96
        %v1174 = vpop.permute.xlu0 %1173
        %1175 = vrot.lane.b32.xlu0 %v819, 96
        %v1176 = vpop.permute.xlu0 %1175
        %vm1209 = vcmask 261120
        %v1210 = vsel %vm1209, %v555, %v920
        %v1211 = vsel %vm1209, %v556, %v922
        %v1212 = vsel %vm1209, %v557, %v924
        %v1213 = vsel %vm1209, %v558, %v926
        %v1214 = vsel %vm1209, %v559, %v928
        %v1215 = vsel %vm1209, %v560, %v930
        %v1216 = vsel %vm1209, %v561, %v932
        %v1217 = vsel %vm1209, %v562, %v934
        %v1218 = vsel %vm1209, %v563, %v936
        %v1219 = vsel %vm1209, %v564, %v938
        %v1220 = vsel %vm1209, %v565, %v940
        %v1221 = vsel %vm1209, %v566, %v942
        %v1222 = vsel %vm1209, %v567, %v944
        %v1223 = vsel %vm1209, %v568, %v946
        %v1224 = vsel %vm1209, %v569, %v948
        %v1225 = vsel %vm1209, %v570, %v950
        %v1226 = vsel %vm1209, %v571, %v952
        %v1227 = vsel %vm1209, %v572, %v954
        %v1228 = vsel %vm1209, %v573, %v956
        %v1229 = vsel %vm1209, %v574, %v958
        %v1230 = vsel %vm1209, %v575, %v960
        %v1231 = vsel %vm1209, %v576, %v962
        %v1232 = vsel %vm1209, %v577, %v964
        %v1233 = vsel %vm1209, %v578, %v966
        %v1234 = vsel %vm1209, %v579, %v968
        %v1235 = vsel %vm1209, %v580, %v970
        %v1236 = vsel %vm1209, %v581, %v972
        %v1237 = vsel %vm1209, %v582, %v974
        %v1238 = vsel %vm1209, %v583, %v976
        %v1239 = vsel %vm1209, %v584, %v978
        %v1240 = vsel %vm1209, %v585, %v980
        %v1241 = vsel %vm1209, %v586, %v982
        %vm1242 = vcmask 523264
        %v1243 = vsel %vm1242, %v1210, %v1017
        %v1244 = vsel %vm1242, %v1211, %v1019
        %v1245 = vsel %vm1242, %v1212, %v1021
        %v1246 = vsel %vm1242, %v1213, %v1023
        %v1247 = vsel %vm1242, %v1214, %v1025
        %v1248 = vsel %vm1242, %v1215, %v1027
        %v1249 = vsel %vm1242, %v1216, %v1029
        %v1250 = vsel %vm1242, %v1217, %v1031
        %v1251 = vsel %vm1242, %v1218, %v1033
        %v1252 = vsel %vm1242, %v1219, %v1035
        %v1253 = vsel %vm1242, %v1220, %v1037
        %v1254 = vsel %vm1242, %v1221, %v1039
        %v1255 = vsel %vm1242, %v1222, %v1041
        %v1256 = vsel %vm1242, %v1223, %v1043
        %v1257 = vsel %vm1242, %v1224, %v1045
        %v1258 = vsel %vm1242, %v1225, %v1047
        %v1259 = vsel %vm1242, %v1226, %v1049
        %v1260 = vsel %vm1242, %v1227, %v1051
        %v1261 = vsel %vm1242, %v1228, %v1053
        %v1262 = vsel %vm1242, %v1229, %v1055
        %v1263 = vsel %vm1242, %v1230, %v1057
        %v1264 = vsel %vm1242, %v1231, %v1059
        %v1265 = vsel %vm1242, %v1232, %v1061
        %v1266 = vsel %vm1242, %v1233, %v1063
        %v1267 = vsel %vm1242, %v1234, %v1065
        %v1268 = vsel %vm1242, %v1235, %v1067
        %v1269 = vsel %vm1242, %v1236, %v1069
        %v1270 = vsel %vm1242, %v1237, %v1071
        %v1271 = vsel %vm1242, %v1238, %v1073
        %v1272 = vsel %vm1242, %v1239, %v1075
        %v1273 = vsel %vm1242, %v1240, %v1077
        %v1274 = vsel %vm1242, %v1241, %v1079
        %vm1275 = vcmask 785408
        %v1276 = vsel %vm1275, %v1243, %v1114
        %v1277 = vsel %vm1275, %v1244, %v1116
        %v1278 = vsel %vm1275, %v1245, %v1118
        %v1279 = vsel %vm1275, %v1246, %v1120
        %v1280 = vsel %vm1275, %v1247, %v1122
        %v1281 = vsel %vm1275, %v1248, %v1124
        %v1282 = vsel %vm1275, %v1249, %v1126
        %v1283 = vsel %vm1275, %v1250, %v1128
        %v1284 = vsel %vm1275, %v1251, %v1130
        %v1285 = vsel %vm1275, %v1252, %v1132
        %v1286 = vsel %vm1275, %v1253, %v1134
        %v1287 = vsel %vm1275, %v1254, %v1136
        %v1288 = vsel %vm1275, %v1255, %v1138
        %v1289 = vsel %vm1275, %v1256, %v1140
        %v1290 = vsel %vm1275, %v1257, %v1142
        %v1291 = vsel %vm1275, %v1258, %v1144
        %v1292 = vsel %vm1275, %v1259, %v1146
        %v1293 = vsel %vm1275, %v1260, %v1148
        %v1294 = vsel %vm1275, %v1261, %v1150
        %v1295 = vsel %vm1275, %v1262, %v1152
        %v1296 = vsel %vm1275, %v1263, %v1154
        %v1297 = vsel %vm1275, %v1264, %v1156
        %v1298 = vsel %vm1275, %v1265, %v1158
        %v1299 = vsel %vm1275, %v1266, %v1160
        %v1300 = vsel %vm1275, %v1267, %v1162
        %v1301 = vsel %vm1275, %v1268, %v1164
        %v1302 = vsel %vm1275, %v1269, %v1166
        %v1303 = vsel %vm1275, %v1270, %v1168
        %v1304 = vsel %vm1275, %v1271, %v1170
        %v1305 = vsel %vm1275, %v1272, %v1172
        %v1306 = vsel %vm1275, %v1273, %v1174
        %v1307 = vsel %vm1275, %v1274, %v1176
        %v1308 = vpack.c.bf16 %v1277, %v1276
        %v1309 = vpack.c.bf16 %v825, %v823
        %v1310 = vpack.c.bf16 %v1279, %v1278
        %v1311 = vpack.c.bf16 %v829, %v827
        %v1312 = vpack.c.bf16 %v1281, %v1280
        %v1313 = vpack.c.bf16 %v833, %v831
        %v1314 = vpack.c.bf16 %v1283, %v1282
        %v1315 = vpack.c.bf16 %v837, %v835
        %v1316 = vpack.c.bf16 %v1285, %v1284
        %v1317 = vpack.c.bf16 %v841, %v839
        %v1318 = vpack.c.bf16 %v1287, %v1286
        %v1319 = vpack.c.bf16 %v845, %v843
        %v1320 = vpack.c.bf16 %v1289, %v1288
        %v1321 = vpack.c.bf16 %v849, %v847
        %v1322 = vpack.c.bf16 %v1291, %v1290
        %v1323 = vpack.c.bf16 %v853, %v851
        %v1324 = vpack.c.bf16 %v1293, %v1292
        %v1325 = vpack.c.bf16 %v857, %v855
        %v1326 = vpack.c.bf16 %v1295, %v1294
        %v1327 = vpack.c.bf16 %v861, %v859
        %v1328 = vpack.c.bf16 %v1297, %v1296
        %v1329 = vpack.c.bf16 %v865, %v863
        %v1330 = vpack.c.bf16 %v1299, %v1298
        %v1331 = vpack.c.bf16 %v869, %v867
        %v1332 = vpack.c.bf16 %v1301, %v1300
        %v1333 = vpack.c.bf16 %v873, %v871
        %v1334 = vpack.c.bf16 %v1303, %v1302
        %v1335 = vpack.c.bf16 %v877, %v875
        %v1336 = vpack.c.bf16 %v1305, %v1304
        %v1337 = vpack.c.bf16 %v881, %v879
        %v1338 = vpack.c.bf16 %v1307, %v1306
        %v1339 = vpack.c.bf16 %v917, %v883
        %v1340 = vld [vmem:[#allocation2] sm:$0xff]
        %v1341 = vld [vmem:[#allocation2 + $0x8] sm:$0xff]
        %v1342 = vld [vmem:[#allocation2 + $0x10] sm:$0xff]
        %v1343 = vld [vmem:[#allocation2 + $0x18] sm:$0xff]
        %v1344 = vld [vmem:[#allocation2 + $0x20] sm:$0xff]
        %v1345 = vld [vmem:[#allocation2 + $0x28] sm:$0xff]
        %v1346 = vld [vmem:[#allocation2 + $0x30] sm:$0xff]
        %v1347 = vld [vmem:[#allocation2 + $0x38] sm:$0xff]
        %v1348 = vld [vmem:[#allocation2 + $0x40] sm:$0xff]
        %v1349 = vld [vmem:[#allocation2 + $0x48] sm:$0xff]
        %v1350 = vld [vmem:[#allocation2 + $0x50] sm:$0xff]
        %v1351 = vld [vmem:[#allocation2 + $0x58] sm:$0xff]
        %v1352 = vld [vmem:[#allocation2 + $0x60] sm:$0xff]
        %v1353 = vld [vmem:[#allocation2 + $0x68] sm:$0xff]
        %v1354 = vld [vmem:[#allocation2 + $0x70] sm:$0xff]
        %v1355 = vld [vmem:[#allocation2 + $0x78] sm:$0xff]
        %v1356 = vld [vmem:[#allocation2 + $0x80] sm:$0xff]
        %v1357 = vld [vmem:[#allocation2 + $0x88] sm:$0xff]
        %v1358 = vld [vmem:[#allocation2 + $0x90] sm:$0xff]
        %v1359 = vld [vmem:[#allocation2 + $0x98] sm:$0xff]
        %v1360 = vld [vmem:[%s2] sm:$0x3]
        %v1362 = vlaneseq
        %v1363 = vshrl.u32 %v1362, 7
        %v1364 = vsub.s32 0, %v1363
        %v1365 = vrot.slane %v1360, %v1364
        %v1366 = vlaneseq
        %v1367 = vshrl.u32 %v1366, 7
        %v1368 = vsub.s32 1, %v1367
        %v1369 = vrot.slane %v1360, %v1368
        %v1392 = vunpack.c.l.b16 %v1340
        %v1393 = vunpack.c.h.b16 %v1340
        %v1394 = vunpack.c.l.b16 %v1341
        %v1395 = vunpack.c.h.b16 %v1341
        %v1396 = vunpack.c.l.b16 %v1342
        %v1397 = vunpack.c.h.b16 %v1342
        %v1398 = vunpack.c.l.b16 %v1343
        %v1399 = vunpack.c.h.b16 %v1343
        %v1400 = vunpack.c.l.b16 %v1344
        %v1401 = vunpack.c.h.b16 %v1344
        %v1402 = vunpack.c.l.b16 %v1345
        %v1403 = vunpack.c.h.b16 %v1345
        %v1404 = vunpack.c.l.b16 %v1346
        %v1405 = vunpack.c.h.b16 %v1346
        %v1406 = vunpack.c.l.b16 %v1347
        %v1407 = vunpack.c.h.b16 %v1347
        %v1408 = vunpack.c.l.b16 %v1348
        %v1409 = vunpack.c.h.b16 %v1348
        %v1410 = vunpack.c.l.b16 %v1349
        %v1411 = vunpack.c.h.b16 %v1349
        %v1412 = vunpack.c.l.b16 %v1350
        %v1413 = vunpack.c.h.b16 %v1350
        %v1414 = vunpack.c.l.b16 %v1351
        %v1415 = vunpack.c.h.b16 %v1351
        %v1416 = vunpack.c.l.b16 %v1352
        %v1417 = vunpack.c.h.b16 %v1352
        %v1418 = vunpack.c.l.b16 %v1353
        %v1419 = vunpack.c.h.b16 %v1353
        %v1420 = vunpack.c.l.b16 %v1354
        %v1421 = vunpack.c.h.b16 %v1354
        %v1422 = vunpack.c.l.b16 %v1355
        %v1423 = vunpack.c.h.b16 %v1355
        %v1424 = vunpack.c.l.b16 %v1356
        %v1425 = vunpack.c.h.b16 %v1356
        %v1426 = vunpack.c.l.b16 %v1357
        %v1427 = vunpack.c.h.b16 %v1357
        %v1428 = vunpack.c.l.b16 %v1358
        %v1429 = vunpack.c.h.b16 %v1358
        %v1430 = vunpack.c.l.b16 %v1359
        %v1431 = vunpack.c.h.b16 %v1359
        %v1432 = vpack.c.b16 %v1394, %v1392
        %v1433 = vpack.c.b16 %v1395, %v1393
        %v1434 = vpack.c.b16 %v1398, %v1396
        %v1435 = vpack.c.b16 %v1399, %v1397
        %v1436 = vpack.c.b16 %v1402, %v1400
        %v1437 = vpack.c.b16 %v1403, %v1401
        %v1438 = vpack.c.b16 %v1406, %v1404
        %v1439 = vpack.c.b16 %v1407, %v1405
        %v1440 = vpack.c.b16 %v1410, %v1408
        %v1441 = vpack.c.b16 %v1411, %v1409
        %v1442 = vpack.c.b16 %v1414, %v1412
        %v1443 = vpack.c.b16 %v1415, %v1413
        %v1444 = vpack.c.b16 %v1418, %v1416
        %v1445 = vpack.c.b16 %v1419, %v1417
        %v1446 = vpack.c.b16 %v1422, %v1420
        %v1447 = vpack.c.b16 %v1423, %v1421
        %v1448 = vpack.c.b16 %v1426, %v1424
        %v1449 = vpack.c.b16 %v1427, %v1425
        %v1450 = vpack.c.b16 %v1430, %v1428
        %v1451 = vpack.c.b16 %v1431, %v1429
        %v1473 = vsel %vm1209, %v1309, 0
        %v1476 = vsel %vm1209, %v1311, 0
        %v1479 = vsel %vm1209, %v1313, 0
        %v1482 = vsel %vm1209, %v1315, 0
        %v1485 = vsel %vm1209, %v1317, 0
        %v1488 = vsel %vm1209, %v1319, 0
        %v1491 = vsel %vm1209, %v1321, 0
        %v1494 = vsel %vm1209, %v1323, 0
        %v1497 = vsel %vm1209, %v1325, 0
        %v1500 = vsel %vm1209, %v1327, 0
        %v1503 = vsel %vm1209, %v1329, 0
        %v1506 = vsel %vm1209, %v1331, 0
        %v1509 = vsel %vm1209, %v1333, 0
        %v1512 = vsel %vm1209, %v1335, 0
        %v1515 = vsel %vm1209, %v1337, 0
        %v1518 = vsel %vm1209, %v1339, 0
        %1520 = vmatprep.subr.bf16.mxu0 %v1433
        %1521 = vmatpush1.bf16.msra.mxu0 %v1432
        %1522 = vmatprep.subr.bf16.mxu0 %v1435
        %1523 = vmatpush1.bf16.msra.mxu0 %v1434
        %1524 = vmatprep.subr.bf16.mxu0 %v1437
        %1525 = vmatpush1.bf16.msra.mxu0 %v1436
        %1526 = vmatprep.subr.bf16.mxu0 %v1439
        %1527 = vmatpush1.bf16.msra.mxu0 %v1438
        %1528 = vmatprep.subr.bf16.mxu0 %v1441
        %1529 = vmatpush1.bf16.msra.mxu0 %v1440
        %1530 = vmatprep.subr.bf16.mxu0 %v1443
        %1531 = vmatpush1.bf16.msra.mxu0 %v1442
        %1532 = vmatprep.subr.bf16.mxu0 %v1445
        %1533 = vmatpush1.bf16.msra.mxu0 %v1444
        %1534 = vmatprep.subr.bf16.mxu0 %v1447
        %1535 = vmatpush1.bf16.msra.mxu0 %v1446
        %1536 = vmatprep.subr.bf16.mxu0 %v1449
        %1537 = vmatpush1.bf16.msra.mxu0 %v1448
        %1538 = vmatprep.subr.bf16.mxu0 %v1451
        %1539 = vmatpush1.bf16.msra.mxu0 %v1450
        %1540 = vmatprep.subr.bf16.mxu0 0
        %1541 = vmatpush1.bf16.msra.mxu0 0
        %1542 = vmatprep.subr.bf16.mxu0 0
        %1543 = vmatpush1.bf16.msra.mxu0 0
        %1544 = vmatprep.subr.bf16.mxu0 0
        %1545 = vmatpush1.bf16.msra.mxu0 0
        %1546 = vmatprep.subr.bf16.mxu0 0
        %1547 = vmatpush1.bf16.msra.mxu0 0
        %1548 = vmatprep.subr.bf16.mxu0 0
        %1549 = vmatpush1.bf16.msra.mxu0 0
        %1550 = vmatprep.subr.bf16.mxu0 0
        %1551 = vmatpush1.bf16.msra.mxu0 0
        %1552 = vmatprep.mubr.bf16.mxu0 %v1473
        %1553 = vmatmul.mubr.bf16.gmra.mrb[0].mxu0 %v1308
        %v1554 = vpop.f32.mrb[0].mxu0
        %v1555 = vadd.f32 %v1365, %v1554
        %v1556 = vpop.f32.mrb[0].mxu0
        %v1557 = vadd.f32 %v1369, %v1556
        %v1558 = vpop.f32.mrb[0].mxu0
        %v1559 = vadd.f32 %v1365, %v1558
        %v1560 = vpop.f32.mrb[0].mxu0
        %v1561 = vadd.f32 %v1369, %v1560
        %1562 = vmatprep.mubr.bf16.mxu0 %v1476
        %1563 = vmatmul.mubr.bf16.gmra.mrb[0].mxu0 %v1310
        %v1564 = vpop.f32.mrb[0].mxu0
        %v1565 = vadd.f32 %v1365, %v1564
        %v1566 = vpop.f32.mrb[0].mxu0
        %v1567 = vadd.f32 %v1369, %v1566
        %v1568 = vpop.f32.mrb[0].mxu0
        %v1569 = vadd.f32 %v1365, %v1568
        %v1570 = vpop.f32.mrb[0].mxu0
        %v1571 = vadd.f32 %v1369, %v1570
        %1572 = vmatprep.mubr.bf16.mxu0 %v1479
        %1573 = vmatmul.mubr.bf16.gmra.mrb[0].mxu0 %v1312
        %v1574 = vpop.f32.mrb[0].mxu0
        %v1575 = vadd.f32 %v1365, %v1574
        %v1576 = vpop.f32.mrb[0].mxu0
        %v1577 = vadd.f32 %v1369, %v1576
        %v1578 = vpop.f32.mrb[0].mxu0
        %v1579 = vadd.f32 %v1365, %v1578
        %v1580 = vpop.f32.mrb[0].mxu0
        %v1581 = vadd.f32 %v1369, %v1580
        %1582 = vmatprep.mubr.bf16.mxu0 %v1482
        %1583 = vmatmul.mubr.bf16.gmra.mrb[0].mxu0 %v1314
        %v1584 = vpop.f32.mrb[0].mxu0
        %v1585 = vadd.f32 %v1365, %v1584
        %v1586 = vpop.f32.mrb[0].mxu0
        %v1587 = vadd.f32 %v1369, %v1586
        %v1588 = vpop.f32.mrb[0].mxu0
        %v1589 = vadd.f32 %v1365, %v1588
        %v1590 = vpop.f32.mrb[0].mxu0
        %v1591 = vadd.f32 %v1369, %v1590
        %1592 = vmatprep.mubr.bf16.mxu0 %v1485
        %1593 = vmatmul.mubr.bf16.gmra.mrb[0].mxu0 %v1316
        %v1594 = vpop.f32.mrb[0].mxu0
        %v1595 = vadd.f32 %v1365, %v1594
        %v1596 = vpop.f32.mrb[0].mxu0
        %v1597 = vadd.f32 %v1369, %v1596
        %v1598 = vpop.f32.mrb[0].mxu0
        %v1599 = vadd.f32 %v1365, %v1598
        %v1600 = vpop.f32.mrb[0].mxu0
        %v1601 = vadd.f32 %v1369, %v1600
        %1602 = vmatprep.mubr.bf16.mxu0 %v1488
        %1603 = vmatmul.mubr.bf16.gmra.mrb[0].mxu0 %v1318
        %v1604 = vpop.f32.mrb[0].mxu0
        %v1605 = vadd.f32 %v1365, %v1604
        %v1606 = vpop.f32.mrb[0].mxu0
        %v1607 = vadd.f32 %v1369, %v1606
        %v1608 = vpop.f32.mrb[0].mxu0
        %v1609 = vadd.f32 %v1365, %v1608
        %v1610 = vpop.f32.mrb[0].mxu0
        %v1611 = vadd.f32 %v1369, %v1610
        %1612 = vmatprep.mubr.bf16.mxu0 %v1491
        %1613 = vmatmul.mubr.bf16.gmra.mrb[0].mxu0 %v1320
        %v1614 = vpop.f32.mrb[0].mxu0
        %v1615 = vadd.f32 %v1365, %v1614
        %v1616 = vpop.f32.mrb[0].mxu0
        %v1617 = vadd.f32 %v1369, %v1616
        %v1618 = vpop.f32.mrb[0].mxu0
        %v1619 = vadd.f32 %v1365, %v1618
        %v1620 = vpop.f32.mrb[0].mxu0
        %v1621 = vadd.f32 %v1369, %v1620
        %1622 = vmatprep.mubr.bf16.mxu0 %v1494
        %1623 = vmatmul.mubr.bf16.gmra.mrb[0].mxu0 %v1322
        %v1624 = vpop.f32.mrb[0].mxu0
        %v1625 = vadd.f32 %v1365, %v1624
        %v1626 = vpop.f32.mrb[0].mxu0
        %v1627 = vadd.f32 %v1369, %v1626
        %v1628 = vpop.f32.mrb[0].mxu0
        %v1629 = vadd.f32 %v1365, %v1628
        %v1630 = vpop.f32.mrb[0].mxu0
        %v1631 = vadd.f32 %v1369, %v1630
        %1632 = vmatprep.mubr.bf16.mxu0 %v1497
        %1633 = vmatmul.mubr.bf16.gmra.mrb[0].mxu0 %v1324
        %v1634 = vpop.f32.mrb[0].mxu0
        %v1635 = vadd.f32 %v1365, %v1634
        %v1636 = vpop.f32.mrb[0].mxu0
        %v1637 = vadd.f32 %v1369, %v1636
        %v1638 = vpop.f32.mrb[0].mxu0
        %v1639 = vadd.f32 %v1365, %v1638
        %v1640 = vpop.f32.mrb[0].mxu0
        %v1641 = vadd.f32 %v1369, %v1640
        %1642 = vmatprep.mubr.bf16.mxu0 %v1500
        %1643 = vmatmul.mubr.bf16.gmra.mrb[0].mxu0 %v1326
        %v1644 = vpop.f32.mrb[0].mxu0
        %v1645 = vadd.f32 %v1365, %v1644
        %v1646 = vpop.f32.mrb[0].mxu0
        %v1647 = vadd.f32 %v1369, %v1646
        %v1648 = vpop.f32.mrb[0].mxu0
        %v1649 = vadd.f32 %v1365, %v1648
        %v1650 = vpop.f32.mrb[0].mxu0
        %v1651 = vadd.f32 %v1369, %v1650
        %1652 = vmatprep.mubr.bf16.mxu0 %v1503
        %1653 = vmatmul.mubr.bf16.gmra.mrb[0].mxu0 %v1328
        %v1654 = vpop.f32.mrb[0].mxu0
        %v1655 = vadd.f32 %v1365, %v1654
        %v1656 = vpop.f32.mrb[0].mxu0
        %v1657 = vadd.f32 %v1369, %v1656
        %v1658 = vpop.f32.mrb[0].mxu0
        %v1659 = vadd.f32 %v1365, %v1658
        %v1660 = vpop.f32.mrb[0].mxu0
        %v1661 = vadd.f32 %v1369, %v1660
        %1662 = vmatprep.mubr.bf16.mxu0 %v1506
        %1663 = vmatmul.mubr.bf16.gmra.mrb[0].mxu0 %v1330
        %v1664 = vpop.f32.mrb[0].mxu0
        %v1665 = vadd.f32 %v1365, %v1664
        %v1666 = vpop.f32.mrb[0].mxu0
        %v1667 = vadd.f32 %v1369, %v1666
        %v1668 = vpop.f32.mrb[0].mxu0
        %v1669 = vadd.f32 %v1365, %v1668
        %v1670 = vpop.f32.mrb[0].mxu0
        %v1671 = vadd.f32 %v1369, %v1670
        %1672 = vmatprep.mubr.bf16.mxu0 %v1509
        %1673 = vmatmul.mubr.bf16.gmra.mrb[0].mxu0 %v1332
        %v1674 = vpop.f32.mrb[0].mxu0
        %v1675 = vadd.f32 %v1365, %v1674
        %v1676 = vpop.f32.mrb[0].mxu0
        %v1677 = vadd.f32 %v1369, %v1676
        %v1678 = vpop.f32.mrb[0].mxu0
        %v1679 = vadd.f32 %v1365, %v1678
        %v1680 = vpop.f32.mrb[0].mxu0
        %v1681 = vadd.f32 %v1369, %v1680
        %1682 = vmatprep.mubr.bf16.mxu0 %v1512
        %1683 = vmatmul.mubr.bf16.gmra.mrb[0].mxu0 %v1334
        %v1684 = vpop.f32.mrb[0].mxu0
        %v1685 = vadd.f32 %v1365, %v1684
        %v1686 = vpop.f32.mrb[0].mxu0
        %v1687 = vadd.f32 %v1369, %v1686
        %v1688 = vpop.f32.mrb[0].mxu0
        %v1689 = vadd.f32 %v1365, %v1688
        %v1690 = vpop.f32.mrb[0].mxu0
        %v1691 = vadd.f32 %v1369, %v1690
        %1692 = vmatprep.mubr.bf16.mxu0 %v1515
        %1693 = vmatmul.mubr.bf16.gmra.mrb[0].mxu0 %v1336
        %v1694 = vpop.f32.mrb[0].mxu0
        %v1695 = vadd.f32 %v1365, %v1694
        %v1696 = vpop.f32.mrb[0].mxu0
        %v1697 = vadd.f32 %v1369, %v1696
        %v1698 = vpop.f32.mrb[0].mxu0
        %v1699 = vadd.f32 %v1365, %v1698
        %v1700 = vpop.f32.mrb[0].mxu0
        %v1701 = vadd.f32 %v1369, %v1700
        %1702 = vmatprep.mubr.bf16.mxu0 %v1518
        %1703 = vmatmul.mubr.bf16.gmra.mrb[0].mxu0 %v1338
        %v1704 = vpop.f32.mrb[0].mxu0
        %v1705 = vadd.f32 %v1365, %v1704
        %v1706 = vpop.f32.mrb[0].mxu0
        %v1707 = vadd.f32 %v1369, %v1706
        %v1708 = vpop.f32.mrb[0].mxu0
        %v1709 = vadd.f32 %v1365, %v1708
        %v1710 = vpop.f32.mrb[0].mxu0
        %v1711 = vadd.f32 %v1369, %v1710
        %1712 = vdwg.mxu0
        %v1713 = vmax.f32 %v1555, 0.0
        %v1714 = vmax.f32 %v1557, 0.0
        %v1715 = vmax.f32 %v1559, 0.0
        %v1716 = vmax.f32 %v1561, 0.0
        %v1717 = vmax.f32 %v1565, 0.0
        %v1718 = vmax.f32 %v1567, 0.0
        %v1719 = vmax.f32 %v1569, 0.0
        %v1720 = vmax.f32 %v1571, 0.0
        %v1721 = vmax.f32 %v1575, 0.0
        %v1722 = vmax.f32 %v1577, 0.0
        %v1723 = vmax.f32 %v1579, 0.0
        %v1724 = vmax.f32 %v1581, 0.0
        %v1725 = vmax.f32 %v1585, 0.0
        %v1726 = vmax.f32 %v1587, 0.0
        %v1727 = vmax.f32 %v1589, 0.0
        %v1728 = vmax.f32 %v1591, 0.0
        %v1729 = vmax.f32 %v1595, 0.0
        %v1730 = vmax.f32 %v1597, 0.0
        %v1731 = vmax.f32 %v1599, 0.0
        %v1732 = vmax.f32 %v1601, 0.0
        %v1733 = vmax.f32 %v1605, 0.0
        %v1734 = vmax.f32 %v1607, 0.0
        %v1735 = vmax.f32 %v1609, 0.0
        %v1736 = vmax.f32 %v1611, 0.0
        %v1737 = vmax.f32 %v1615, 0.0
        %v1738 = vmax.f32 %v1617, 0.0
        %v1739 = vmax.f32 %v1619, 0.0
        %v1740 = vmax.f32 %v1621, 0.0
        %v1741 = vmax.f32 %v1625, 0.0
        %v1742 = vmax.f32 %v1627, 0.0
        %v1743 = vmax.f32 %v1629, 0.0
        %v1744 = vmax.f32 %v1631, 0.0
        %v1745 = vmax.f32 %v1635, 0.0
        %v1746 = vmax.f32 %v1637, 0.0
        %v1747 = vmax.f32 %v1639, 0.0
        %v1748 = vmax.f32 %v1641, 0.0
        %v1749 = vmax.f32 %v1645, 0.0
        %v1750 = vmax.f32 %v1647, 0.0
        %v1751 = vmax.f32 %v1649, 0.0
        %v1752 = vmax.f32 %v1651, 0.0
        %v1753 = vmax.f32 %v1655, 0.0
        %v1754 = vmax.f32 %v1657, 0.0
        %v1755 = vmax.f32 %v1659, 0.0
        %v1756 = vmax.f32 %v1661, 0.0
        %v1757 = vmax.f32 %v1665, 0.0
        %v1758 = vmax.f32 %v1667, 0.0
        %v1759 = vmax.f32 %v1669, 0.0
        %v1760 = vmax.f32 %v1671, 0.0
        %v1761 = vmax.f32 %v1675, 0.0
        %v1762 = vmax.f32 %v1677, 0.0
        %v1763 = vmax.f32 %v1679, 0.0
        %v1764 = vmax.f32 %v1681, 0.0
        %v1765 = vmax.f32 %v1685, 0.0
        %v1766 = vmax.f32 %v1687, 0.0
        %v1767 = vmax.f32 %v1689, 0.0
        %v1768 = vmax.f32 %v1691, 0.0
        %v1769 = vmax.f32 %v1695, 0.0
        %v1770 = vmax.f32 %v1697, 0.0
        %v1771 = vmax.f32 %v1699, 0.0
        %v1772 = vmax.f32 %v1701, 0.0
        %v1773 = vmax.f32 %v1705, 0.0
        %v1774 = vmax.f32 %v1707, 0.0
        %v1775 = vmax.f32 %v1709, 0.0
        %v1776 = vmax.f32 %v1711, 0.0
        %v1777 = vpack.c.bf16 %v1715, %v1713
        %v1778 = vpack.c.bf16 %v1716, %v1714
        %v1779 = vpack.c.bf16 %v1719, %v1717
        %v1780 = vpack.c.bf16 %v1720, %v1718
        %v1781 = vpack.c.bf16 %v1723, %v1721
        %v1782 = vpack.c.bf16 %v1724, %v1722
        %v1783 = vpack.c.bf16 %v1727, %v1725
        %v1784 = vpack.c.bf16 %v1728, %v1726
        %v1785 = vpack.c.bf16 %v1731, %v1729
        %v1786 = vpack.c.bf16 %v1732, %v1730
        %v1787 = vpack.c.bf16 %v1735, %v1733
        %v1788 = vpack.c.bf16 %v1736, %v1734
        %v1789 = vpack.c.bf16 %v1739, %v1737
        %v1790 = vpack.c.bf16 %v1740, %v1738
        %v1791 = vpack.c.bf16 %v1743, %v1741
        %v1792 = vpack.c.bf16 %v1744, %v1742
        %v1793 = vpack.c.bf16 %v1747, %v1745
        %v1794 = vpack.c.bf16 %v1748, %v1746
        %v1795 = vpack.c.bf16 %v1751, %v1749
        %v1796 = vpack.c.bf16 %v1752, %v1750
        %v1797 = vpack.c.bf16 %v1755, %v1753
        %v1798 = vpack.c.bf16 %v1756, %v1754
        %v1799 = vpack.c.bf16 %v1759, %v1757
        %v1800 = vpack.c.bf16 %v1760, %v1758
        %v1801 = vpack.c.bf16 %v1763, %v1761
        %v1802 = vpack.c.bf16 %v1764, %v1762
        %v1803 = vpack.c.bf16 %v1767, %v1765
        %v1804 = vpack.c.bf16 %v1768, %v1766
        %v1805 = vpack.c.bf16 %v1771, %v1769
        %v1806 = vpack.c.bf16 %v1772, %v1770
        %v1807 = vpack.c.bf16 %v1775, %v1773
        %v1808 = vpack.c.bf16 %v1776, %v1774
        %v1809 = vld [vmem:[%s5] sm:$0xff]
        %v1810 = vld [vmem:[%s5 + $0x8] sm:$0xff]
        %v1811 = vld [vmem:[%s5 + $0x10] sm:$0xff]
        %v1812 = vld [vmem:[%s5 + $0x18] sm:$0xff]
        %v1813 = vld [vmem:[%s5 + $0x20] sm:$0xff]
        %v1814 = vld [vmem:[%s5 + $0x28] sm:$0xff]
        %v1815 = vld [vmem:[%s5 + $0x30] sm:$0xff]
        %v1816 = vld [vmem:[%s5 + $0x38] sm:$0xff]
        %v1817 = vld [vmem:[%s5 + $0x40] sm:$0xff]
        %v1818 = vld [vmem:[%s5 + $0x48] sm:$0xff]
        %v1819 = vld [vmem:[%s5 + $0x50] sm:$0xff]
        %v1820 = vld [vmem:[%s5 + $0x58] sm:$0xff]
        %v1821 = vld [vmem:[%s5 + $0x60] sm:$0xff]
        %v1822 = vld [vmem:[%s5 + $0x68] sm:$0xff]
        %v1823 = vld [vmem:[%s5 + $0x70] sm:$0xff]
        %v1824 = vld [vmem:[%s5 + $0x78] sm:$0xff]
        %v1841 = vunpack.c.l.b16 %v1809
        %v1842 = vunpack.c.h.b16 %v1809
        %v1843 = vunpack.c.l.b16 %v1810
        %v1844 = vunpack.c.h.b16 %v1810
        %v1845 = vunpack.c.l.b16 %v1811
        %v1846 = vunpack.c.h.b16 %v1811
        %v1847 = vunpack.c.l.b16 %v1812
        %v1848 = vunpack.c.h.b16 %v1812
        %v1849 = vunpack.c.l.b16 %v1813
        %v1850 = vunpack.c.h.b16 %v1813
        %v1851 = vunpack.c.l.b16 %v1814
        %v1852 = vunpack.c.h.b16 %v1814
        %v1853 = vunpack.c.l.b16 %v1815
        %v1854 = vunpack.c.h.b16 %v1815
        %v1855 = vunpack.c.l.b16 %v1816
        %v1856 = vunpack.c.h.b16 %v1816
        %v1857 = vunpack.c.l.b16 %v1817
        %v1858 = vunpack.c.h.b16 %v1817
        %v1859 = vunpack.c.l.b16 %v1818
        %v1860 = vunpack.c.h.b16 %v1818
        %v1861 = vunpack.c.l.b16 %v1819
        %v1862 = vunpack.c.h.b16 %v1819
        %v1863 = vunpack.c.l.b16 %v1820
        %v1864 = vunpack.c.h.b16 %v1820
        %v1865 = vunpack.c.l.b16 %v1821
        %v1866 = vunpack.c.h.b16 %v1821
        %v1867 = vunpack.c.l.b16 %v1822
        %v1868 = vunpack.c.h.b16 %v1822
        %v1869 = vunpack.c.l.b16 %v1823
        %v1870 = vunpack.c.h.b16 %v1823
        %v1871 = vunpack.c.l.b16 %v1824
        %v1872 = vunpack.c.h.b16 %v1824
        %v1873 = vpack.c.b16 %v1843, %v1841
        %v1874 = vpack.c.b16 %v1844, %v1842
        %v1875 = vpack.c.b16 %v1847, %v1845
        %v1876 = vpack.c.b16 %v1848, %v1846
        %v1877 = vpack.c.b16 %v1851, %v1849
        %v1878 = vpack.c.b16 %v1852, %v1850
        %v1879 = vpack.c.b16 %v1855, %v1853
        %v1880 = vpack.c.b16 %v1856, %v1854
        %v1881 = vpack.c.b16 %v1859, %v1857
        %v1882 = vpack.c.b16 %v1860, %v1858
        %v1883 = vpack.c.b16 %v1863, %v1861
        %v1884 = vpack.c.b16 %v1864, %v1862
        %v1885 = vpack.c.b16 %v1867, %v1865
        %v1886 = vpack.c.b16 %v1868, %v1866
        %v1887 = vpack.c.b16 %v1871, %v1869
        %v1888 = vpack.c.b16 %v1872, %v1870
        %1905 = vmatprep.subr.bf16.mxu0 %v1778
        %1906 = vmatpush1.bf16.msra.mxu0 %v1777
        %1907 = vmatprep.subr.bf16.mxu0 %v1780
        %1908 = vmatpush1.bf16.msra.mxu0 %v1779
        %1909 = vmatprep.subr.bf16.mxu0 %v1782
        %1910 = vmatpush1.bf16.msra.mxu0 %v1781
        %1911 = vmatprep.subr.bf16.mxu0 %v1784
        %1912 = vmatpush1.bf16.msra.mxu0 %v1783
        %1913 = vmatprep.subr.bf16.mxu0 %v1786
        %1914 = vmatpush1.bf16.msra.mxu0 %v1785
        %1915 = vmatprep.subr.bf16.mxu0 %v1788
        %1916 = vmatpush1.bf16.msra.mxu0 %v1787
        %1917 = vmatprep.subr.bf16.mxu0 %v1790
        %1918 = vmatpush1.bf16.msra.mxu0 %v1789
        %1919 = vmatprep.subr.bf16.mxu0 %v1792
        %1920 = vmatpush1.bf16.msra.mxu0 %v1791
        %1921 = vmatprep.subr.bf16.mxu0 %v1794
        %1922 = vmatpush1.bf16.msra.mxu0 %v1793
        %1923 = vmatprep.subr.bf16.mxu0 %v1796
        %1924 = vmatpush1.bf16.msra.mxu0 %v1795
        %1925 = vmatprep.subr.bf16.mxu0 %v1798
        %1926 = vmatpush1.bf16.msra.mxu0 %v1797
        %1927 = vmatprep.subr.bf16.mxu0 %v1800
        %1928 = vmatpush1.bf16.msra.mxu0 %v1799
        %1929 = vmatprep.subr.bf16.mxu0 %v1802
        %1930 = vmatpush1.bf16.msra.mxu0 %v1801
        %1931 = vmatprep.subr.bf16.mxu0 %v1804
        %1932 = vmatpush1.bf16.msra.mxu0 %v1803
        %1933 = vmatprep.subr.bf16.mxu0 %v1806
        %1934 = vmatpush1.bf16.msra.mxu0 %v1805
        %1935 = vmatprep.subr.bf16.mxu0 %v1808
        %1936 = vmatpush1.bf16.msra.mxu0 %v1807
        %1937 = vmatprep.mubr.bf16.mxu0 %v1874
        %1938 = vmatmul.mubr.bf16.gmra.mrb[0].mxu0 %v1873
        %v1939 = vpop.f32.mrb[0].mxu0
        %v1940 = vadd.f32 0.0, %v1939
        %v1941 = vpop.f32.mrb[0].mxu0
        %v1942 = vadd.f32 0.0, %v1941
        %v1943 = vpop.f32.mrb[0].mxu0
        %v1944 = vadd.f32 0.0, %v1943
        %v1945 = vpop.f32.mrb[0].mxu0
        %v1946 = vadd.f32 0.0, %v1945
        %1947 = vmatprep.mubr.bf16.mxu0 %v1876
        %1948 = vmatmul.mubr.bf16.gmra.mrb[0].mxu0 %v1875
        %v1949 = vpop.f32.mrb[0].mxu0
        %v1950 = vadd.f32 0.0, %v1949
        %v1951 = vpop.f32.mrb[0].mxu0
        %v1952 = vadd.f32 0.0, %v1951
        %v1953 = vpop.f32.mrb[0].mxu0
        %v1954 = vadd.f32 0.0, %v1953
        %v1955 = vpop.f32.mrb[0].mxu0
        %v1956 = vadd.f32 0.0, %v1955
        %1957 = vmatprep.mubr.bf16.mxu0 %v1878
        %1958 = vmatmul.mubr.bf16.gmra.mrb[0].mxu0 %v1877
        %v1959 = vpop.f32.mrb[0].mxu0
        %v1960 = vadd.f32 0.0, %v1959
        %v1961 = vpop.f32.mrb[0].mxu0
        %v1962 = vadd.f32 0.0, %v1961
        %v1963 = vpop.f32.mrb[0].mxu0
        %v1964 = vadd.f32 0.0, %v1963
        %v1965 = vpop.f32.mrb[0].mxu0
        %v1966 = vadd.f32 0.0, %v1965
        %1967 = vmatprep.mubr.bf16.mxu0 %v1880
        %1968 = vmatmul.mubr.bf16.gmra.mrb[0].mxu0 %v1879
        %v1969 = vpop.f32.mrb[0].mxu0
        %v1970 = vadd.f32 0.0, %v1969
        %v1971 = vpop.f32.mrb[0].mxu0
        %v1972 = vadd.f32 0.0, %v1971
        %v1973 = vpop.f32.mrb[0].mxu0
        %v1974 = vadd.f32 0.0, %v1973
        %v1975 = vpop.f32.mrb[0].mxu0
        %v1976 = vadd.f32 0.0, %v1975
        %1977 = vmatprep.mubr.bf16.mxu0 %v1882
        %1978 = vmatmul.mubr.bf16.gmra.mrb[0].mxu0 %v1881
        %v1979 = vpop.f32.mrb[0].mxu0
        %v1980 = vadd.f32 0.0, %v1979
        %v1981 = vpop.f32.mrb[0].mxu0
        %v1982 = vadd.f32 0.0, %v1981
        %v1983 = vpop.f32.mrb[0].mxu0
        %v1984 = vadd.f32 0.0, %v1983
        %v1985 = vpop.f32.mrb[0].mxu0
        %v1986 = vadd.f32 0.0, %v1985
        %1987 = vmatprep.mubr.bf16.mxu0 %v1884
        %1988 = vmatmul.mubr.bf16.gmra.mrb[0].mxu0 %v1883
        %v1989 = vpop.f32.mrb[0].mxu0
        %v1990 = vadd.f32 0.0, %v1989
        %v1991 = vpop.f32.mrb[0].mxu0
        %v1992 = vadd.f32 0.0, %v1991
        %v1993 = vpop.f32.mrb[0].mxu0
        %v1994 = vadd.f32 0.0, %v1993
        %v1995 = vpop.f32.mrb[0].mxu0
        %v1996 = vadd.f32 0.0, %v1995
        %1997 = vmatprep.mubr.bf16.mxu0 %v1886
        %1998 = vmatmul.mubr.bf16.gmra.mrb[0].mxu0 %v1885
        %v1999 = vpop.f32.mrb[0].mxu0
        %v2000 = vadd.f32 0.0, %v1999
        %v2001 = vpop.f32.mrb[0].mxu0
        %v2002 = vadd.f32 0.0, %v2001
        %v2003 = vpop.f32.mrb[0].mxu0
        %v2004 = vadd.f32 0.0, %v2003
        %v2005 = vpop.f32.mrb[0].mxu0
        %v2006 = vadd.f32 0.0, %v2005
        %2007 = vmatprep.mubr.bf16.mxu0 %v1888
        %2008 = vmatmul.mubr.bf16.gmra.mrb[0].mxu0 %v1887
        %v2009 = vpop.f32.mrb[0].mxu0
        %v2010 = vadd.f32 0.0, %v2009
        %v2011 = vpop.f32.mrb[0].mxu0
        %v2012 = vadd.f32 0.0, %v2011
        %v2013 = vpop.f32.mrb[0].mxu0
        %v2014 = vadd.f32 0.0, %v2013
        %v2015 = vpop.f32.mrb[0].mxu0
        %v2016 = vadd.f32 0.0, %v2015
        %2017 = vdwg.mxu0
        %s2018 = scalar_lea.vmem %s5, 128
        %v2019 = vld [vmem:[%s2018] sm:$0xff]
        %v2020 = vld [vmem:[%s2018 + $0x8] sm:$0xff]
        %v2021 = vld [vmem:[%s2018 + $0x10] sm:$0xff]
        %v2022 = vld [vmem:[%s2018 + $0x18] sm:$0xff]
        %v2023 = vld [vmem:[%s2018 + $0x20] sm:$0xff]
        %v2024 = vld [vmem:[%s2018 + $0x28] sm:$0xff]
        %v2025 = vld [vmem:[%s2018 + $0x30] sm:$0xff]
        %v2026 = vld [vmem:[%s2018 + $0x38] sm:$0xff]
        %v2027 = vld [vmem:[%s2018 + $0x40] sm:$0xff]
        %v2028 = vld [vmem:[%s2018 + $0x48] sm:$0xff]
        %v2029 = vld [vmem:[%s2018 + $0x50] sm:$0xff]
        %v2030 = vld [vmem:[%s2018 + $0x58] sm:$0xff]
        %v2031 = vld [vmem:[%s2018 + $0x60] sm:$0xff]
        %v2032 = vld [vmem:[%s2018 + $0x68] sm:$0xff]
        %v2033 = vld [vmem:[%s2018 + $0x70] sm:$0xff]
        %v2034 = vld [vmem:[%s2018 + $0x78] sm:$0xff]
        %v2051 = vunpack.c.l.b16 %v2019
        %v2052 = vunpack.c.h.b16 %v2019
        %v2053 = vunpack.c.l.b16 %v2020
        %v2054 = vunpack.c.h.b16 %v2020
        %v2055 = vunpack.c.l.b16 %v2021
        %v2056 = vunpack.c.h.b16 %v2021
        %v2057 = vunpack.c.l.b16 %v2022
        %v2058 = vunpack.c.h.b16 %v2022
        %v2059 = vunpack.c.l.b16 %v2023
        %v2060 = vunpack.c.h.b16 %v2023
        %v2061 = vunpack.c.l.b16 %v2024
        %v2062 = vunpack.c.h.b16 %v2024
        %v2063 = vunpack.c.l.b16 %v2025
        %v2064 = vunpack.c.h.b16 %v2025
        %v2065 = vunpack.c.l.b16 %v2026
        %v2066 = vunpack.c.h.b16 %v2026
        %v2067 = vunpack.c.l.b16 %v2027
        %v2068 = vunpack.c.h.b16 %v2027
        %v2069 = vunpack.c.l.b16 %v2028
        %v2070 = vunpack.c.h.b16 %v2028
        %v2071 = vunpack.c.l.b16 %v2029
        %v2072 = vunpack.c.h.b16 %v2029
        %v2073 = vunpack.c.l.b16 %v2030
        %v2074 = vunpack.c.h.b16 %v2030
        %v2075 = vunpack.c.l.b16 %v2031
        %v2076 = vunpack.c.h.b16 %v2031
        %v2077 = vunpack.c.l.b16 %v2032
        %v2078 = vunpack.c.h.b16 %v2032
        %v2079 = vunpack.c.l.b16 %v2033
        %v2080 = vunpack.c.h.b16 %v2033
        %v2081 = vunpack.c.l.b16 %v2034
        %v2082 = vunpack.c.h.b16 %v2034
        %v2083 = vpack.c.b16 %v2053, %v2051
        %v2084 = vpack.c.b16 %v2054, %v2052
        %v2085 = vpack.c.b16 %v2057, %v2055
        %v2086 = vpack.c.b16 %v2058, %v2056
        %v2087 = vpack.c.b16 %v2061, %v2059
        %v2088 = vpack.c.b16 %v2062, %v2060
        %v2089 = vpack.c.b16 %v2065, %v2063
        %v2090 = vpack.c.b16 %v2066, %v2064
        %v2091 = vpack.c.b16 %v2069, %v2067
        %v2092 = vpack.c.b16 %v2070, %v2068
        %v2093 = vpack.c.b16 %v2073, %v2071
        %v2094 = vpack.c.b16 %v2074, %v2072
        %v2095 = vpack.c.b16 %v2077, %v2075
        %v2096 = vpack.c.b16 %v2078, %v2076
        %v2097 = vpack.c.b16 %v2081, %v2079
        %v2098 = vpack.c.b16 %v2082, %v2080
        %2115 = vmatprep.subr.bf16.mxu0 %v1778
        %2116 = vmatpush1.bf16.msra.mxu0 %v1777
        %2117 = vmatprep.subr.bf16.mxu0 %v1780
        %2118 = vmatpush1.bf16.msra.mxu0 %v1779
        %2119 = vmatprep.subr.bf16.mxu0 %v1782
        %2120 = vmatpush1.bf16.msra.mxu0 %v1781
        %2121 = vmatprep.subr.bf16.mxu0 %v1784
        %2122 = vmatpush1.bf16.msra.mxu0 %v1783
        %2123 = vmatprep.subr.bf16.mxu0 %v1786
        %2124 = vmatpush1.bf16.msra.mxu0 %v1785
        %2125 = vmatprep.subr.bf16.mxu0 %v1788
        %2126 = vmatpush1.bf16.msra.mxu0 %v1787
        %2127 = vmatprep.subr.bf16.mxu0 %v1790
        %2128 = vmatpush1.bf16.msra.mxu0 %v1789
        %2129 = vmatprep.subr.bf16.mxu0 %v1792
        %2130 = vmatpush1.bf16.msra.mxu0 %v1791
        %2131 = vmatprep.subr.bf16.mxu0 %v1794
        %2132 = vmatpush1.bf16.msra.mxu0 %v1793
        %2133 = vmatprep.subr.bf16.mxu0 %v1796
        %2134 = vmatpush1.bf16.msra.mxu0 %v1795
        %2135 = vmatprep.subr.bf16.mxu0 %v1798
        %2136 = vmatpush1.bf16.msra.mxu0 %v1797
        %2137 = vmatprep.subr.bf16.mxu0 %v1800
        %2138 = vmatpush1.bf16.msra.mxu0 %v1799
        %2139 = vmatprep.subr.bf16.mxu0 %v1802
        %2140 = vmatpush1.bf16.msra.mxu0 %v1801
        %2141 = vmatprep.subr.bf16.mxu0 %v1804
        %2142 = vmatpush1.bf16.msra.mxu0 %v1803
        %2143 = vmatprep.subr.bf16.mxu0 %v1806
        %2144 = vmatpush1.bf16.msra.mxu0 %v1805
        %2145 = vmatprep.subr.bf16.mxu0 %v1808
        %2146 = vmatpush1.bf16.msra.mxu0 %v1807
        %2147 = vmatprep.mubr.bf16.mxu0 %v2084
        %2148 = vmatmul.mubr.bf16.gmra.mrb[0].mxu0 %v2083
        %v2149 = vpop.f32.mrb[0].mxu0
        %v2150 = vadd.f32 0.0, %v2149
        %v2151 = vpop.f32.mrb[0].mxu0
        %v2152 = vadd.f32 0.0, %v2151
        %v2153 = vpop.f32.mrb[0].mxu0
        %v2154 = vadd.f32 0.0, %v2153
        %v2155 = vpop.f32.mrb[0].mxu0
        %v2156 = vadd.f32 0.0, %v2155
        %2157 = vmatprep.mubr.bf16.mxu0 %v2086
        %2158 = vmatmul.mubr.bf16.gmra.mrb[0].mxu0 %v2085
        %v2159 = vpop.f32.mrb[0].mxu0
        %v2160 = vadd.f32 0.0, %v2159
        %v2161 = vpop.f32.mrb[0].mxu0
        %v2162 = vadd.f32 0.0, %v2161
        %v2163 = vpop.f32.mrb[0].mxu0
        %v2164 = vadd.f32 0.0, %v2163
        %v2165 = vpop.f32.mrb[0].mxu0
        %v2166 = vadd.f32 0.0, %v2165
        %2167 = vmatprep.mubr.bf16.mxu0 %v2088
        %2168 = vmatmul.mubr.bf16.gmra.mrb[0].mxu0 %v2087
        %v2169 = vpop.f32.mrb[0].mxu0
        %v2170 = vadd.f32 0.0, %v2169
        %v2171 = vpop.f32.mrb[0].mxu0
        %v2172 = vadd.f32 0.0, %v2171
        %v2173 = vpop.f32.mrb[0].mxu0
        %v2174 = vadd.f32 0.0, %v2173
        %v2175 = vpop.f32.mrb[0].mxu0
        %v2176 = vadd.f32 0.0, %v2175
        %2177 = vmatprep.mubr.bf16.mxu0 %v2090
        %2178 = vmatmul.mubr.bf16.gmra.mrb[0].mxu0 %v2089
        %v2179 = vpop.f32.mrb[0].mxu0
        %v2180 = vadd.f32 0.0, %v2179
        %v2181 = vpop.f32.mrb[0].mxu0
        %v2182 = vadd.f32 0.0, %v2181
        %v2183 = vpop.f32.mrb[0].mxu0
        %v2184 = vadd.f32 0.0, %v2183
        %v2185 = vpop.f32.mrb[0].mxu0
        %v2186 = vadd.f32 0.0, %v2185
        %2187 = vmatprep.mubr.bf16.mxu0 %v2092
        %2188 = vmatmul.mubr.bf16.gmra.mrb[0].mxu0 %v2091
        %v2189 = vpop.f32.mrb[0].mxu0
        %v2190 = vadd.f32 0.0, %v2189
        %v2191 = vpop.f32.mrb[0].mxu0
        %v2192 = vadd.f32 0.0, %v2191
        %v2193 = vpop.f32.mrb[0].mxu0
        %v2194 = vadd.f32 0.0, %v2193
        %v2195 = vpop.f32.mrb[0].mxu0
        %v2196 = vadd.f32 0.0, %v2195
        %2197 = vmatprep.mubr.bf16.mxu0 %v2094
        %2198 = vmatmul.mubr.bf16.gmra.mrb[0].mxu0 %v2093
        %v2199 = vpop.f32.mrb[0].mxu0
        %v2200 = vadd.f32 0.0, %v2199
        %v2201 = vpop.f32.mrb[0].mxu0
        %v2202 = vadd.f32 0.0, %v2201
        %v2203 = vpop.f32.mrb[0].mxu0
        %v2204 = vadd.f32 0.0, %v2203
        %v2205 = vpop.f32.mrb[0].mxu0
        %v2206 = vadd.f32 0.0, %v2205
        %2207 = vmatprep.mubr.bf16.mxu0 %v2096
        %2208 = vmatmul.mubr.bf16.gmra.mrb[0].mxu0 %v2095
        %v2209 = vpop.f32.mrb[0].mxu0
        %v2210 = vadd.f32 0.0, %v2209
        %v2211 = vpop.f32.mrb[0].mxu0
        %v2212 = vadd.f32 0.0, %v2211
        %v2213 = vpop.f32.mrb[0].mxu0
        %v2214 = vadd.f32 0.0, %v2213
        %v2215 = vpop.f32.mrb[0].mxu0
        %v2216 = vadd.f32 0.0, %v2215
        %2217 = vmatprep.mubr.bf16.mxu0 %v2098
        %2218 = vmatmul.mubr.bf16.gmra.mrb[0].mxu0 %v2097
        %v2219 = vpop.f32.mrb[0].mxu0
        %v2220 = vadd.f32 0.0, %v2219
        %v2221 = vpop.f32.mrb[0].mxu0
        %v2222 = vadd.f32 0.0, %v2221
        %v2223 = vpop.f32.mrb[0].mxu0
        %v2224 = vadd.f32 0.0, %v2223
        %v2225 = vpop.f32.mrb[0].mxu0
        %v2226 = vadd.f32 0.0, %v2225
        %2227 = vdwg.mxu0
        %v2228 = vmax.f32 %v1940, %v2150
        %v2229 = vmax.f32 %v1942, %v2152
        %v2230 = vmax.f32 %v1944, %v2154
        %v2231 = vmax.f32 %v1946, %v2156
        %v2232 = vmax.f32 %v1950, %v2160
        %v2233 = vmax.f32 %v1952, %v2162
        %v2234 = vmax.f32 %v1954, %v2164
        %v2235 = vmax.f32 %v1956, %v2166
        %v2236 = vmax.f32 %v1960, %v2170
        %v2237 = vmax.f32 %v1962, %v2172
        %v2238 = vmax.f32 %v1964, %v2174
        %v2239 = vmax.f32 %v1966, %v2176
        %v2240 = vmax.f32 %v1970, %v2180
        %v2241 = vmax.f32 %v1972, %v2182
        %v2242 = vmax.f32 %v1974, %v2184
        %v2243 = vmax.f32 %v1976, %v2186
        %v2244 = vmax.f32 %v1980, %v2190
        %v2245 = vmax.f32 %v1982, %v2192
        %v2246 = vmax.f32 %v1984, %v2194
        %v2247 = vmax.f32 %v1986, %v2196
        %v2248 = vmax.f32 %v1990, %v2200
        %v2249 = vmax.f32 %v1992, %v2202
        %v2250 = vmax.f32 %v1994, %v2204
        %v2251 = vmax.f32 %v1996, %v2206
        %v2252 = vmax.f32 %v2000, %v2210
        %v2253 = vmax.f32 %v2002, %v2212
        %v2254 = vmax.f32 %v2004, %v2214
        %v2255 = vmax.f32 %v2006, %v2216
        %v2256 = vmax.f32 %v2010, %v2220
        %v2257 = vmax.f32 %v2012, %v2222
        %v2258 = vmax.f32 %v2014, %v2224
        %v2259 = vmax.f32 %v2016, %v2226
        %v2260 = vpack.c.bf16 %v2230, %v2228
        %v2261 = vpack.c.bf16 %v2231, %v2229
        %v2262 = vpack.c.bf16 %v2234, %v2232
        %v2263 = vpack.c.bf16 %v2235, %v2233
        %v2264 = vpack.c.bf16 %v2238, %v2236
        %v2265 = vpack.c.bf16 %v2239, %v2237
        %v2266 = vpack.c.bf16 %v2242, %v2240
        %v2267 = vpack.c.bf16 %v2243, %v2241
        %v2268 = vpack.c.bf16 %v2246, %v2244
        %v2269 = vpack.c.bf16 %v2247, %v2245
        %v2270 = vpack.c.bf16 %v2250, %v2248
        %v2271 = vpack.c.bf16 %v2251, %v2249
        %v2272 = vpack.c.bf16 %v2254, %v2252
        %v2273 = vpack.c.bf16 %v2255, %v2253
        %v2274 = vpack.c.bf16 %v2258, %v2256
        %v2275 = vpack.c.bf16 %v2259, %v2257
        %v2276 = vld [vmem:[%s6] sm:$0xf]
        %v2277 = vld [vmem:[%s6 + $0x4] sm:$0xf]
        %v2278 = vld [vmem:[%s6 + $0x8] sm:$0xf]
        %v2279 = vld [vmem:[%s6 + $0xc] sm:$0xf]
        %v2280 = vld [vmem:[%s6 + $0x10] sm:$0xf]
        %v2281 = vld [vmem:[%s6 + $0x14] sm:$0xf]
        %v2282 = vld [vmem:[%s6 + $0x18] sm:$0xf]
        %v2283 = vld [vmem:[%s6 + $0x1c] sm:$0xf]
        %v2284 = vld [vmem:[%s6 + $0x20] sm:$0xf]
        %v2285 = vld [vmem:[%s6 + $0x24] sm:$0xf]
        %v2286 = vld [vmem:[%s6 + $0x28] sm:$0xf]
        %v2287 = vld [vmem:[%s6 + $0x2c] sm:$0xf]
        %v2288 = vld [vmem:[%s6 + $0x30] sm:$0xf]
        %v2289 = vld [vmem:[%s6 + $0x34] sm:$0xf]
        %v2290 = vld [vmem:[%s6 + $0x38] sm:$0xf]
        %v2291 = vld [vmem:[%s6 + $0x3c] sm:$0xf]
        %v2292 = vld [vmem:[%s6 + $0x40] sm:$0xf]
        %v2293 = vld [vmem:[%s6 + $0x44] sm:$0xf]
        %v2294 = vld [vmem:[%s6 + $0x48] sm:$0xf]
        %v2295 = vld [vmem:[%s6 + $0x4c] sm:$0xf]
        %v2296 = vld [vmem:[%s6 + $0x50] sm:$0xf]
        %v2318 = vunpack.c.l.b16 %v2276
        %v2319 = vunpack.c.l.b16 %v2277
        %v2320 = vunpack.c.l.b16 %v2278
        %v2321 = vunpack.c.l.b16 %v2279
        %v2322 = vunpack.c.l.b16 %v2280
        %v2323 = vunpack.c.l.b16 %v2281
        %v2324 = vunpack.c.l.b16 %v2282
        %v2325 = vunpack.c.l.b16 %v2283
        %v2326 = vunpack.c.l.b16 %v2284
        %v2327 = vunpack.c.l.b16 %v2285
        %v2328 = vunpack.c.l.b16 %v2286
        %v2329 = vunpack.c.l.b16 %v2287
        %v2330 = vunpack.c.l.b16 %v2288
        %v2331 = vunpack.c.l.b16 %v2289
        %v2332 = vunpack.c.l.b16 %v2290
        %v2333 = vunpack.c.l.b16 %v2291
        %v2334 = vunpack.c.l.b16 %v2292
        %v2335 = vunpack.c.l.b16 %v2293
        %v2336 = vunpack.c.l.b16 %v2294
        %v2337 = vunpack.c.l.b16 %v2295
        %v2338 = vunpack.c.l.b16 %v2296
        %v2339 = vpack.c.b16 %v2319, %v2318
        %v2340 = vpack.c.b16 %v2321, %v2320
        %v2341 = vpack.c.b16 %v2323, %v2322
        %v2342 = vpack.c.b16 %v2325, %v2324
        %v2343 = vpack.c.b16 %v2327, %v2326
        %v2344 = vpack.c.b16 %v2329, %v2328
        %v2345 = vpack.c.b16 %v2331, %v2330
        %v2346 = vpack.c.b16 %v2333, %v2332
        %v2347 = vpack.c.b16 %v2335, %v2334
        %v2348 = vpack.c.b16 %v2337, %v2336
        %v2349 = vpack.c.b16 %v2338, %v2338
        %vm2360 = vcmask 326656
        %v2362 = vsel %vm2360, %v2261, 0
        %v2365 = vsel %vm2360, %v2263, 0
        %v2368 = vsel %vm2360, %v2265, 0
        %v2371 = vsel %vm2360, %v2267, 0
        %v2374 = vsel %vm2360, %v2269, 0
        %v2377 = vsel %vm2360, %v2271, 0
        %v2380 = vsel %vm2360, %v2273, 0
        %v2383 = vsel %vm2360, %v2275, 0
        %v2386 = vsel %vm820, %v2349, 0
        %2388 = vmatprep.subr.bf16.mxu0 0
        %2389 = vmatpush1.bf16.msra.mxu0 %v2339
        %2390 = vmatprep.subr.bf16.mxu0 0
        %2391 = vmatpush1.bf16.msra.mxu0 %v2340
        %2392 = vmatprep.subr.bf16.mxu0 0
        %2393 = vmatpush1.bf16.msra.mxu0 %v2341
        %2394 = vmatprep.subr.bf16.mxu0 0
        %2395 = vmatpush1.bf16.msra.mxu0 %v2342
        %2396 = vmatprep.subr.bf16.mxu0 0
        %2397 = vmatpush1.bf16.msra.mxu0 %v2343
        %2398 = vmatprep.subr.bf16.mxu0 0
        %2399 = vmatpush1.bf16.msra.mxu0 %v2344
        %2400 = vmatprep.subr.bf16.mxu0 0
        %2401 = vmatpush1.bf16.msra.mxu0 %v2345
        %2402 = vmatprep.subr.bf16.mxu0 0
        %2403 = vmatpush1.bf16.msra.mxu0 %v2346
        %2404 = vmatprep.subr.bf16.mxu0 0
        %2405 = vmatpush1.bf16.msra.mxu0 %v2347
        %2406 = vmatprep.subr.bf16.mxu0 0
        %2407 = vmatpush1.bf16.msra.mxu0 %v2348
        %2408 = vmatprep.subr.bf16.mxu0 0
        %2409 = vmatpush1.bf16.msra.mxu0 %v2386
        %2410 = vmatprep.subr.bf16.mxu0 0
        %2411 = vmatpush1.bf16.msra.mxu0 0
        %2412 = vmatprep.subr.bf16.mxu0 0
        %2413 = vmatpush1.bf16.msra.mxu0 0
        %2414 = vmatprep.subr.bf16.mxu0 0
        %2415 = vmatpush1.bf16.msra.mxu0 0
        %2416 = vmatprep.subr.bf16.mxu0 0
        %2417 = vmatpush1.bf16.msra.mxu0 0
        %2418 = vmatprep.subr.bf16.mxu0 0
        %2419 = vmatpush1.bf16.msra.mxu0 0
        %2420 = vmatprep.mubr.bf16.mxu0 %v2362
        %2421 = vmatmul.mubr.bf16.gmra.mrb[0].mxu0 %v2260
        %v2422 = vpop.f32.mrb[0].mxu0
        %v2423 = vadd.f32 0.0, %v2422
        %v2424 = vpop.f32.mrb[0].mxu0
        %v2425 = vpop.f32.mrb[0].mxu0
        %v2426 = vadd.f32 0.0, %v2425
        %v2427 = vpop.f32.mrb[0].mxu0
        %2428 = vmatprep.mubr.bf16.mxu0 %v2365
        %2429 = vmatmul.mubr.bf16.gmra.mrb[0].mxu0 %v2262
        %v2430 = vpop.f32.mrb[0].mxu0
        %v2431 = vadd.f32 0.0, %v2430
        %v2432 = vpop.f32.mrb[0].mxu0
        %v2433 = vpop.f32.mrb[0].mxu0
        %v2434 = vadd.f32 0.0, %v2433
        %v2435 = vpop.f32.mrb[0].mxu0
        %2436 = vmatprep.mubr.bf16.mxu0 %v2368
        %2437 = vmatmul.mubr.bf16.gmra.mrb[0].mxu0 %v2264
        %v2438 = vpop.f32.mrb[0].mxu0
        %v2439 = vadd.f32 0.0, %v2438
        %v2440 = vpop.f32.mrb[0].mxu0
        %v2441 = vpop.f32.mrb[0].mxu0
        %v2442 = vadd.f32 0.0, %v2441
        %v2443 = vpop.f32.mrb[0].mxu0
        %2444 = vmatprep.mubr.bf16.mxu0 %v2371
        %2445 = vmatmul.mubr.bf16.gmra.mrb[0].mxu0 %v2266
        %v2446 = vpop.f32.mrb[0].mxu0
        %v2447 = vadd.f32 0.0, %v2446
        %v2448 = vpop.f32.mrb[0].mxu0
        %v2449 = vpop.f32.mrb[0].mxu0
        %v2450 = vadd.f32 0.0, %v2449
        %v2451 = vpop.f32.mrb[0].mxu0
        %2452 = vmatprep.mubr.bf16.mxu0 %v2374
        %2453 = vmatmul.mubr.bf16.gmra.mrb[0].mxu0 %v2268
        %v2454 = vpop.f32.mrb[0].mxu0
        %v2455 = vadd.f32 0.0, %v2454
        %v2456 = vpop.f32.mrb[0].mxu0
        %v2457 = vpop.f32.mrb[0].mxu0
        %v2458 = vadd.f32 0.0, %v2457
        %v2459 = vpop.f32.mrb[0].mxu0
        %2460 = vmatprep.mubr.bf16.mxu0 %v2377
        %2461 = vmatmul.mubr.bf16.gmra.mrb[0].mxu0 %v2270
        %v2462 = vpop.f32.mrb[0].mxu0
        %v2463 = vadd.f32 0.0, %v2462
        %v2464 = vpop.f32.mrb[0].mxu0
        %v2465 = vpop.f32.mrb[0].mxu0
        %v2466 = vadd.f32 0.0, %v2465
        %v2467 = vpop.f32.mrb[0].mxu0
        %2468 = vmatprep.mubr.bf16.mxu0 %v2380
        %2469 = vmatmul.mubr.bf16.gmra.mrb[0].mxu0 %v2272
        %v2470 = vpop.f32.mrb[0].mxu0
        %v2471 = vadd.f32 0.0, %v2470
        %v2472 = vpop.f32.mrb[0].mxu0
        %v2473 = vpop.f32.mrb[0].mxu0
        %v2474 = vadd.f32 0.0, %v2473
        %v2475 = vpop.f32.mrb[0].mxu0
        %2476 = vmatprep.mubr.bf16.mxu0 %v2383
        %2477 = vmatmul.mubr.bf16.gmra.mrb[0].mxu0 %v2274
        %v2478 = vpop.f32.mrb[0].mxu0
        %v2479 = vadd.f32 0.0, %v2478
        %v2480 = vpop.f32.mrb[0].mxu0
        %v2481 = vpop.f32.mrb[0].mxu0
        %v2482 = vadd.f32 0.0, %v2481
        %v2483 = vpop.f32.mrb[0].mxu0
        %2484 = vdwg.mxu0
        %s2485 = scalar_lea.vmem %s6, 84
        %v2486 = vld [vmem:[%s2485] sm:$0xf]
        %v2487 = vld [vmem:[%s2485 + $0x4] sm:$0xf]
        %v2488 = vld [vmem:[%s2485 + $0x8] sm:$0xf]
        %v2489 = vld [vmem:[%s2485 + $0xc] sm:$0xf]
        %v2490 = vld [vmem:[%s2485 + $0x10] sm:$0xf]
        %v2491 = vld [vmem:[%s2485 + $0x14] sm:$0xf]
        %v2492 = vld [vmem:[%s2485 + $0x18] sm:$0xf]
        %v2493 = vld [vmem:[%s2485 + $0x1c] sm:$0xf]
        %v2494 = vld [vmem:[%s2485 + $0x20] sm:$0xf]
        %v2495 = vld [vmem:[%s2485 + $0x24] sm:$0xf]
        %v2496 = vld [vmem:[%s2485 + $0x28] sm:$0xf]
        %v2497 = vld [vmem:[%s2485 + $0x2c] sm:$0xf]
        %v2498 = vld [vmem:[%s2485 + $0x30] sm:$0xf]
        %v2499 = vld [vmem:[%s2485 + $0x34] sm:$0xf]
        %v2500 = vld [vmem:[%s2485 + $0x38] sm:$0xf]
        %v2501 = vld [vmem:[%s2485 + $0x3c] sm:$0xf]
        %v2502 = vld [vmem:[%s2485 + $0x40] sm:$0xf]
        %v2503 = vld [vmem:[%s2485 + $0x44] sm:$0xf]
        %v2504 = vld [vmem:[%s2485 + $0x48] sm:$0xf]
        %v2505 = vld [vmem:[%s2485 + $0x4c] sm:$0xf]
        %v2506 = vld [vmem:[%s2485 + $0x50] sm:$0xf]
        %v2528 = vunpack.c.l.b16 %v2486
        %v2529 = vunpack.c.l.b16 %v2487
        %v2530 = vunpack.c.l.b16 %v2488
        %v2531 = vunpack.c.l.b16 %v2489
        %v2532 = vunpack.c.l.b16 %v2490
        %v2533 = vunpack.c.l.b16 %v2491
        %v2534 = vunpack.c.l.b16 %v2492
        %v2535 = vunpack.c.l.b16 %v2493
        %v2536 = vunpack.c.l.b16 %v2494
        %v2537 = vunpack.c.l.b16 %v2495
        %v2538 = vunpack.c.l.b16 %v2496
        %v2539 = vunpack.c.l.b16 %v2497
        %v2540 = vunpack.c.l.b16 %v2498
        %v2541 = vunpack.c.l.b16 %v2499
        %v2542 = vunpack.c.l.b16 %v2500
        %v2543 = vunpack.c.l.b16 %v2501
        %v2544 = vunpack.c.l.b16 %v2502
        %v2545 = vunpack.c.l.b16 %v2503
        %v2546 = vunpack.c.l.b16 %v2504
        %v2547 = vunpack.c.l.b16 %v2505
        %v2548 = vunpack.c.l.b16 %v2506
        %v2549 = vpack.c.b16 %v2529, %v2528
        %v2550 = vpack.c.b16 %v2531, %v2530
        %v2551 = vpack.c.b16 %v2533, %v2532
        %v2552 = vpack.c.b16 %v2535, %v2534
        %v2553 = vpack.c.b16 %v2537, %v2536
        %v2554 = vpack.c.b16 %v2539, %v2538
        %v2555 = vpack.c.b16 %v2541, %v2540
        %v2556 = vpack.c.b16 %v2543, %v2542
        %v2557 = vpack.c.b16 %v2545, %v2544
        %v2558 = vpack.c.b16 %v2547, %v2546
        %v2559 = vpack.c.b16 %v2548, %v2548
        %v2571 = vsel %vm820, %v2559, 0
        %2573 = vmatprep.subr.bf16.mxu0 0
        %2574 = vmatpush1.bf16.msra.mxu0 %v2549
        %2575 = vmatprep.subr.bf16.mxu0 0
        %2576 = vmatpush1.bf16.msra.mxu0 %v2550
        %2577 = vmatprep.subr.bf16.mxu0 0
        %2578 = vmatpush1.bf16.msra.mxu0 %v2551
        %2579 = vmatprep.subr.bf16.mxu0 0
        %2580 = vmatpush1.bf16.msra.mxu0 %v2552
        %2581 = vmatprep.subr.bf16.mxu0 0
        %2582 = vmatpush1.bf16.msra.mxu0 %v2553
        %2583 = vmatprep.subr.bf16.mxu0 0
        %2584 = vmatpush1.bf16.msra.mxu0 %v2554
        %2585 = vmatprep.subr.bf16.mxu0 0
        %2586 = vmatpush1.bf16.msra.mxu0 %v2555
        %2587 = vmatprep.subr.bf16.mxu0 0
        %2588 = vmatpush1.bf16.msra.mxu0 %v2556
        %2589 = vmatprep.subr.bf16.mxu0 0
        %2590 = vmatpush1.bf16.msra.mxu0 %v2557
        %2591 = vmatprep.subr.bf16.mxu0 0
        %2592 = vmatpush1.bf16.msra.mxu0 %v2558
        %2593 = vmatprep.subr.bf16.mxu0 0
        %2594 = vmatpush1.bf16.msra.mxu0 %v2571
        %2595 = vmatprep.subr.bf16.mxu0 0
        %2596 = vmatpush1.bf16.msra.mxu0 0
        %2597 = vmatprep.subr.bf16.mxu0 0
        %2598 = vmatpush1.bf16.msra.mxu0 0
        %2599 = vmatprep.subr.bf16.mxu0 0
        %2600 = vmatpush1.bf16.msra.mxu0 0
        %2601 = vmatprep.subr.bf16.mxu0 0
        %2602 = vmatpush1.bf16.msra.mxu0 0
        %2603 = vmatprep.subr.bf16.mxu0 0
        %2604 = vmatpush1.bf16.msra.mxu0 0
        %2605 = vmatprep.mubr.bf16.mxu0 %v2362
        %2606 = vmatmul.mubr.bf16.gmra.mrb[0].mxu0 %v2260
        %v2607 = vpop.f32.mrb[0].mxu0
        %v2608 = vadd.f32 0.0, %v2607
        %v2609 = vpop.f32.mrb[0].mxu0
        %v2610 = vpop.f32.mrb[0].mxu0
        %v2611 = vadd.f32 0.0, %v2610
        %v2612 = vpop.f32.mrb[0].mxu0
        %2613 = vmatprep.mubr.bf16.mxu0 %v2365
        %2614 = vmatmul.mubr.bf16.gmra.mrb[0].mxu0 %v2262
        %v2615 = vpop.f32.mrb[0].mxu0
        %v2616 = vadd.f32 0.0, %v2615
        %v2617 = vpop.f32.mrb[0].mxu0
        %v2618 = vpop.f32.mrb[0].mxu0
        %v2619 = vadd.f32 0.0, %v2618
        %v2620 = vpop.f32.mrb[0].mxu0
        %2621 = vmatprep.mubr.bf16.mxu0 %v2368
        %2622 = vmatmul.mubr.bf16.gmra.mrb[0].mxu0 %v2264
        %v2623 = vpop.f32.mrb[0].mxu0
        %v2624 = vadd.f32 0.0, %v2623
        %v2625 = vpop.f32.mrb[0].mxu0
        %v2626 = vpop.f32.mrb[0].mxu0
        %v2627 = vadd.f32 0.0, %v2626
        %v2628 = vpop.f32.mrb[0].mxu0
        %2629 = vmatprep.mubr.bf16.mxu0 %v2371
        %2630 = vmatmul.mubr.bf16.gmra.mrb[0].mxu0 %v2266
        %v2631 = vpop.f32.mrb[0].mxu0
        %v2632 = vadd.f32 0.0, %v2631
        %v2633 = vpop.f32.mrb[0].mxu0
        %v2634 = vpop.f32.mrb[0].mxu0
        %v2635 = vadd.f32 0.0, %v2634
        %v2636 = vpop.f32.mrb[0].mxu0
        %2637 = vmatprep.mubr.bf16.mxu0 %v2374
        %2638 = vmatmul.mubr.bf16.gmra.mrb[0].mxu0 %v2268
        %v2639 = vpop.f32.mrb[0].mxu0
        %v2640 = vadd.f32 0.0, %v2639
        %v2641 = vpop.f32.mrb[0].mxu0
        %v2642 = vpop.f32.mrb[0].mxu0
        %v2643 = vadd.f32 0.0, %v2642
        %v2644 = vpop.f32.mrb[0].mxu0
        %2645 = vmatprep.mubr.bf16.mxu0 %v2377
        %2646 = vmatmul.mubr.bf16.gmra.mrb[0].mxu0 %v2270
        %v2647 = vpop.f32.mrb[0].mxu0
        %v2648 = vadd.f32 0.0, %v2647
        %v2649 = vpop.f32.mrb[0].mxu0
        %v2650 = vpop.f32.mrb[0].mxu0
        %v2651 = vadd.f32 0.0, %v2650
        %v2652 = vpop.f32.mrb[0].mxu0
        %2653 = vmatprep.mubr.bf16.mxu0 %v2380
        %2654 = vmatmul.mubr.bf16.gmra.mrb[0].mxu0 %v2272
        %v2655 = vpop.f32.mrb[0].mxu0
        %v2656 = vadd.f32 0.0, %v2655
        %v2657 = vpop.f32.mrb[0].mxu0
        %v2658 = vpop.f32.mrb[0].mxu0
        %v2659 = vadd.f32 0.0, %v2658
        %v2660 = vpop.f32.mrb[0].mxu0
        %2661 = vmatprep.mubr.bf16.mxu0 %v2383
        %2662 = vmatmul.mubr.bf16.gmra.mrb[0].mxu0 %v2274
        %v2663 = vpop.f32.mrb[0].mxu0
        %v2664 = vadd.f32 0.0, %v2663
        %v2665 = vpop.f32.mrb[0].mxu0
        %v2666 = vpop.f32.mrb[0].mxu0
        %v2667 = vadd.f32 0.0, %v2666
        %v2668 = vpop.f32.mrb[0].mxu0
        %2669 = vdwg.mxu0
        %v2670 = vmax.f32 %v2423, %v2608
        %v2671 = vmax.f32 %v2426, %v2611
        %v2672 = vmax.f32 %v2431, %v2616
        %v2673 = vmax.f32 %v2434, %v2619
        %v2674 = vmax.f32 %v2439, %v2624
        %v2675 = vmax.f32 %v2442, %v2627
        %v2676 = vmax.f32 %v2447, %v2632
        %v2677 = vmax.f32 %v2450, %v2635
        %v2678 = vmax.f32 %v2455, %v2640
        %v2679 = vmax.f32 %v2458, %v2643
        %v2680 = vmax.f32 %v2463, %v2648
        %v2681 = vmax.f32 %v2466, %v2651
        %v2682 = vmax.f32 %v2471, %v2656
        %v2683 = vmax.f32 %v2474, %v2659
        %v2684 = vmax.f32 %v2479, %v2664
        %v2685 = vmax.f32 %v2482, %v2667
        %v2702 = vrot.slane %v2670, 1
        %v2703 = vrot.slane %v2671, 1
        %v2704 = vsel %vm619, %v2702, %v2703
        %v2705 = vrot.slane %v2672, 1
        %v2706 = vsel %vm619, %v2703, %v2705
        %v2707 = vrot.slane %v2673, 1
        %v2708 = vsel %vm619, %v2705, %v2707
        %v2709 = vrot.slane %v2674, 1
        %v2710 = vsel %vm619, %v2707, %v2709
        %v2711 = vrot.slane %v2675, 1
        %v2712 = vsel %vm619, %v2709, %v2711
        %v2713 = vrot.slane %v2676, 1
        %v2714 = vsel %vm619, %v2711, %v2713
        %v2715 = vrot.slane %v2677, 1
        %v2716 = vsel %vm619, %v2713, %v2715
        %v2717 = vrot.slane %v2678, 1
        %v2718 = vsel %vm619, %v2715, %v2717
        %v2719 = vrot.slane %v2679, 1
        %v2720 = vsel %vm619, %v2717, %v2719
        %v2721 = vrot.slane %v2680, 1
        %v2722 = vsel %vm619, %v2719, %v2721
        %v2723 = vrot.slane %v2681, 1
        %v2724 = vsel %vm619, %v2721, %v2723
        %v2725 = vrot.slane %v2682, 1
        %v2726 = vsel %vm619, %v2723, %v2725
        %v2727 = vrot.slane %v2683, 1
        %v2728 = vsel %vm619, %v2725, %v2727
        %v2729 = vrot.slane %v2684, 1
        %v2730 = vsel %vm619, %v2727, %v2729
        %v2731 = vrot.slane %v2685, 1
        %v2732 = vsel %vm619, %v2729, %v2731
        %v2735 = vsel %vm619, %v2731, %v2702
        %v2736 = vrot.slane %v2670, 2
        %v2737 = vrot.slane %v2671, 2
        %v2738 = vsel %vm686, %v2736, %v2737
        %v2739 = vrot.slane %v2672, 2
        %v2740 = vsel %vm686, %v2737, %v2739
        %v2741 = vrot.slane %v2673, 2
        %v2742 = vsel %vm686, %v2739, %v2741
        %v2743 = vrot.slane %v2674, 2
        %v2744 = vsel %vm686, %v2741, %v2743
        %v2745 = vrot.slane %v2675, 2
        %v2746 = vsel %vm686, %v2743, %v2745
        %v2747 = vrot.slane %v2676, 2
        %v2748 = vsel %vm686, %v2745, %v2747
        %v2749 = vrot.slane %v2677, 2
        %v2750 = vsel %vm686, %v2747, %v2749
        %v2751 = vrot.slane %v2678, 2
        %v2752 = vsel %vm686, %v2749, %v2751
        %v2753 = vrot.slane %v2679, 2
        %v2754 = vsel %vm686, %v2751, %v2753
        %v2755 = vrot.slane %v2680, 2
        %v2756 = vsel %vm686, %v2753, %v2755
        %v2757 = vrot.slane %v2681, 2
        %v2758 = vsel %vm686, %v2755, %v2757
        %v2759 = vrot.slane %v2682, 2
        %v2760 = vsel %vm686, %v2757, %v2759
        %v2761 = vrot.slane %v2683, 2
        %v2762 = vsel %vm686, %v2759, %v2761
        %v2763 = vrot.slane %v2684, 2
        %v2764 = vsel %vm686, %v2761, %v2763
        %v2765 = vrot.slane %v2685, 2
        %v2766 = vsel %vm686, %v2763, %v2765
        %v2769 = vsel %vm686, %v2765, %v2736
        %v2770 = vrot.slane %v2670, 3
        %v2771 = vrot.slane %v2671, 3
        %v2772 = vsel %vm753, %v2770, %v2771
        %v2773 = vrot.slane %v2672, 3
        %v2774 = vsel %vm753, %v2771, %v2773
        %v2775 = vrot.slane %v2673, 3
        %v2776 = vsel %vm753, %v2773, %v2775
        %v2777 = vrot.slane %v2674, 3
        %v2778 = vsel %vm753, %v2775, %v2777
        %v2779 = vrot.slane %v2675, 3
        %v2780 = vsel %vm753, %v2777, %v2779
        %v2781 = vrot.slane %v2676, 3
        %v2782 = vsel %vm753, %v2779, %v2781
        %v2783 = vrot.slane %v2677, 3
        %v2784 = vsel %vm753, %v2781, %v2783
        %v2785 = vrot.slane %v2678, 3
        %v2786 = vsel %vm753, %v2783, %v2785
        %v2787 = vrot.slane %v2679, 3
        %v2788 = vsel %vm753, %v2785, %v2787
        %v2789 = vrot.slane %v2680, 3
        %v2790 = vsel %vm753, %v2787, %v2789
        %v2791 = vrot.slane %v2681, 3
        %v2792 = vsel %vm753, %v2789, %v2791
        %v2793 = vrot.slane %v2682, 3
        %v2794 = vsel %vm753, %v2791, %v2793
        %v2795 = vrot.slane %v2683, 3
        %v2796 = vsel %vm753, %v2793, %v2795
        %v2797 = vrot.slane %v2684, 3
        %v2798 = vsel %vm753, %v2795, %v2797
        %v2799 = vrot.slane %v2685, 3
        %v2800 = vsel %vm753, %v2797, %v2799
        %v2803 = vsel %vm753, %v2799, %v2770
        %v2804 = vrot.slane %v2670, 4
        %v2805 = vrot.slane %v2671, 4
        %v2806 = vsel %vm820, %v2804, %v2805
        %v2807 = vrot.slane %v2672, 4
        %v2808 = vsel %vm820, %v2805, %v2807
        %v2809 = vrot.slane %v2673, 4
        %v2810 = vsel %vm820, %v2807, %v2809
        %v2811 = vrot.slane %v2674, 4
        %v2812 = vsel %vm820, %v2809, %v2811
        %v2813 = vrot.slane %v2675, 4
        %v2814 = vsel %vm820, %v2811, %v2813
        %v2815 = vrot.slane %v2676, 4
        %v2816 = vsel %vm820, %v2813, %v2815
        %v2817 = vrot.slane %v2677, 4
        %v2818 = vsel %vm820, %v2815, %v2817
        %v2819 = vrot.slane %v2678, 4
        %v2820 = vsel %vm820, %v2817, %v2819
        %v2821 = vrot.slane %v2679, 4
        %v2822 = vsel %vm820, %v2819, %v2821
        %v2823 = vrot.slane %v2680, 4
        %v2824 = vsel %vm820, %v2821, %v2823
        %v2825 = vrot.slane %v2681, 4
        %v2826 = vsel %vm820, %v2823, %v2825
        %v2827 = vrot.slane %v2682, 4
        %v2828 = vsel %vm820, %v2825, %v2827
        %v2829 = vrot.slane %v2683, 4
        %v2830 = vsel %vm820, %v2827, %v2829
        %v2831 = vrot.slane %v2684, 4
        %v2832 = vsel %vm820, %v2829, %v2831
        %v2833 = vrot.slane %v2685, 4
        %v2834 = vsel %vm820, %v2831, %v2833
        %v2837 = vsel %vm820, %v2833, %v2804
        %2839 = vrot.lane.b32.xlu0 %v2704, 84
        %v2840 = vpop.permute.xlu0 %2839
        %2841 = vrot.lane.b32.xlu0 %v2706, 84
        %v2842 = vpop.permute.xlu0 %2841
        %2843 = vrot.lane.b32.xlu0 %v2708, 84
        %v2844 = vpop.permute.xlu0 %2843
        %2845 = vrot.lane.b32.xlu0 %v2710, 84
        %v2846 = vpop.permute.xlu0 %2845
        %2847 = vrot.lane.b32.xlu0 %v2712, 84
        %v2848 = vpop.permute.xlu0 %2847
        %2849 = vrot.lane.b32.xlu0 %v2714, 84
        %v2850 = vpop.permute.xlu0 %2849
        %2851 = vrot.lane.b32.xlu0 %v2716, 84
        %v2852 = vpop.permute.xlu0 %2851
        %2853 = vrot.lane.b32.xlu0 %v2718, 84
        %v2854 = vpop.permute.xlu0 %2853
        %2855 = vrot.lane.b32.xlu0 %v2720, 84
        %v2856 = vpop.permute.xlu0 %2855
        %2857 = vrot.lane.b32.xlu0 %v2722, 84
        %v2858 = vpop.permute.xlu0 %2857
        %2859 = vrot.lane.b32.xlu0 %v2724, 84
        %v2860 = vpop.permute.xlu0 %2859
        %2861 = vrot.lane.b32.xlu0 %v2726, 84
        %v2862 = vpop.permute.xlu0 %2861
        %2863 = vrot.lane.b32.xlu0 %v2728, 84
        %v2864 = vpop.permute.xlu0 %2863
        %2865 = vrot.lane.b32.xlu0 %v2730, 84
        %v2866 = vpop.permute.xlu0 %2865
        %2867 = vrot.lane.b32.xlu0 %v2732, 84
        %v2868 = vpop.permute.xlu0 %2867
        %2869 = vrot.lane.b32.xlu0 %v2735, 84
        %v2870 = vpop.permute.xlu0 %2869
        %2888 = vrot.lane.b32.xlu0 %v2738, 40
        %v2889 = vpop.permute.xlu0 %2888
        %2890 = vrot.lane.b32.xlu0 %v2740, 40
        %v2891 = vpop.permute.xlu0 %2890
        %2892 = vrot.lane.b32.xlu0 %v2742, 40
        %v2893 = vpop.permute.xlu0 %2892
        %2894 = vrot.lane.b32.xlu0 %v2744, 40
        %v2895 = vpop.permute.xlu0 %2894
        %2896 = vrot.lane.b32.xlu0 %v2746, 40
        %v2897 = vpop.permute.xlu0 %2896
        %2898 = vrot.lane.b32.xlu0 %v2748, 40
        %v2899 = vpop.permute.xlu0 %2898
        %2900 = vrot.lane.b32.xlu0 %v2750, 40
        %v2901 = vpop.permute.xlu0 %2900
        %2902 = vrot.lane.b32.xlu0 %v2752, 40
        %v2903 = vpop.permute.xlu0 %2902
        %2904 = vrot.lane.b32.xlu0 %v2754, 40
        %v2905 = vpop.permute.xlu0 %2904
        %2906 = vrot.lane.b32.xlu0 %v2756, 40
        %v2907 = vpop.permute.xlu0 %2906
        %2908 = vrot.lane.b32.xlu0 %v2758, 40
        %v2909 = vpop.permute.xlu0 %2908
        %2910 = vrot.lane.b32.xlu0 %v2760, 40
        %v2911 = vpop.permute.xlu0 %2910
        %2912 = vrot.lane.b32.xlu0 %v2762, 40
        %v2913 = vpop.permute.xlu0 %2912
        %2914 = vrot.lane.b32.xlu0 %v2764, 40
        %v2915 = vpop.permute.xlu0 %2914
        %2916 = vrot.lane.b32.xlu0 %v2766, 40
        %v2917 = vpop.permute.xlu0 %2916
        %2918 = vrot.lane.b32.xlu0 %v2769, 40
        %v2919 = vpop.permute.xlu0 %2918
        %2937 = vrot.lane.b32.xlu0 %v2772, 124
        %v2938 = vpop.permute.xlu0 %2937
        %2939 = vrot.lane.b32.xlu0 %v2774, 124
        %v2940 = vpop.permute.xlu0 %2939
        %2941 = vrot.lane.b32.xlu0 %v2776, 124
        %v2942 = vpop.permute.xlu0 %2941
        %2943 = vrot.lane.b32.xlu0 %v2778, 124
        %v2944 = vpop.permute.xlu0 %2943
        %2945 = vrot.lane.b32.xlu0 %v2780, 124
        %v2946 = vpop.permute.xlu0 %2945
        %2947 = vrot.lane.b32.xlu0 %v2782, 124
        %v2948 = vpop.permute.xlu0 %2947
        %2949 = vrot.lane.b32.xlu0 %v2784, 124
        %v2950 = vpop.permute.xlu0 %2949
        %2951 = vrot.lane.b32.xlu0 %v2786, 124
        %v2952 = vpop.permute.xlu0 %2951
        %2953 = vrot.lane.b32.xlu0 %v2788, 124
        %v2954 = vpop.permute.xlu0 %2953
        %2955 = vrot.lane.b32.xlu0 %v2790, 124
        %v2956 = vpop.permute.xlu0 %2955
        %2957 = vrot.lane.b32.xlu0 %v2792, 124
        %v2958 = vpop.permute.xlu0 %2957
        %2959 = vrot.lane.b32.xlu0 %v2794, 124
        %v2960 = vpop.permute.xlu0 %2959
        %2961 = vrot.lane.b32.xlu0 %v2796, 124
        %v2962 = vpop.permute.xlu0 %2961
        %2963 = vrot.lane.b32.xlu0 %v2798, 124
        %v2964 = vpop.permute.xlu0 %2963
        %2965 = vrot.lane.b32.xlu0 %v2800, 124
        %v2966 = vpop.permute.xlu0 %2965
        %2967 = vrot.lane.b32.xlu0 %v2803, 124
        %v2968 = vpop.permute.xlu0 %2967
        %2986 = vrot.lane.b32.xlu0 %v2806, 80
        %v2987 = vpop.permute.xlu0 %2986
        %2988 = vrot.lane.b32.xlu0 %v2808, 80
        %v2989 = vpop.permute.xlu0 %2988
        %2990 = vrot.lane.b32.xlu0 %v2810, 80
        %v2991 = vpop.permute.xlu0 %2990
        %2992 = vrot.lane.b32.xlu0 %v2812, 80
        %v2993 = vpop.permute.xlu0 %2992
        %2994 = vrot.lane.b32.xlu0 %v2814, 80
        %v2995 = vpop.permute.xlu0 %2994
        %2996 = vrot.lane.b32.xlu0 %v2816, 80
        %v2997 = vpop.permute.xlu0 %2996
        %2998 = vrot.lane.b32.xlu0 %v2818, 80
        %v2999 = vpop.permute.xlu0 %2998
        %3000 = vrot.lane.b32.xlu0 %v2820, 80
        %v3001 = vpop.permute.xlu0 %3000
        %3002 = vrot.lane.b32.xlu0 %v2822, 80
        %v3003 = vpop.permute.xlu0 %3002
        %3004 = vrot.lane.b32.xlu0 %v2824, 80
        %v3005 = vpop.permute.xlu0 %3004
        %3006 = vrot.lane.b32.xlu0 %v2826, 80
        %v3007 = vpop.permute.xlu0 %3006
        %3008 = vrot.lane.b32.xlu0 %v2828, 80
        %v3009 = vpop.permute.xlu0 %3008
        %3010 = vrot.lane.b32.xlu0 %v2830, 80
        %v3011 = vpop.permute.xlu0 %3010
        %3012 = vrot.lane.b32.xlu0 %v2832, 80
        %v3013 = vpop.permute.xlu0 %3012
        %3014 = vrot.lane.b32.xlu0 %v2834, 80
        %v3015 = vpop.permute.xlu0 %3014
        %3016 = vrot.lane.b32.xlu0 %v2837, 80
        %v3017 = vpop.permute.xlu0 %3016
        %vm3034 = vcmask 687104
        %v3035 = vsel %vm3034, %v2670, %v2840
        %v3036 = vsel %vm3034, %v2671, %v2842
        %v3037 = vsel %vm3034, %v2672, %v2844
        %v3038 = vsel %vm3034, %v2673, %v2846
        %v3039 = vsel %vm3034, %v2674, %v2848
        %v3040 = vsel %vm3034, %v2675, %v2850
        %v3041 = vsel %vm3034, %v2676, %v2852
        %v3042 = vsel %vm3034, %v2677, %v2854
        %v3043 = vsel %vm3034, %v2678, %v2856
        %v3044 = vsel %vm3034, %v2679, %v2858
        %v3045 = vsel %vm3034, %v2680, %v2860
        %v3046 = vsel %vm3034, %v2681, %v2862
        %v3047 = vsel %vm3034, %v2682, %v2864
        %v3048 = vsel %vm3034, %v2683, %v2866
        %v3049 = vsel %vm3034, %v2684, %v2868
        %v3050 = vsel %vm3034, %v2685, %v2870
        %v3051 = vsel %vm2360, %v2840, %v2889
        %v3052 = vsel %vm2360, %v2842, %v2891
        %v3053 = vsel %vm2360, %v2844, %v2893
        %v3054 = vsel %vm2360, %v2846, %v2895
        %v3055 = vsel %vm2360, %v2848, %v2897
        %v3056 = vsel %vm2360, %v2850, %v2899
        %v3057 = vsel %vm2360, %v2852, %v2901
        %v3058 = vsel %vm2360, %v2854, %v2903
        %v3059 = vsel %vm2360, %v2856, %v2905
        %v3060 = vsel %vm2360, %v2858, %v2907
        %v3061 = vsel %vm2360, %v2860, %v2909
        %v3062 = vsel %vm2360, %v2862, %v2911
        %v3063 = vsel %vm2360, %v2864, %v2913
        %v3064 = vsel %vm2360, %v2866, %v2915
        %v3065 = vsel %vm2360, %v2868, %v2917
        %v3066 = vsel %vm2360, %v2870, %v2919
        %vm3067 = vcmask 1014784
        %v3068 = vsel %vm3067, %v3051, %v2938
        %v3069 = vsel %vm3067, %v3052, %v2940
        %v3070 = vsel %vm3067, %v3053, %v2942
        %v3071 = vsel %vm3067, %v3054, %v2944
        %v3072 = vsel %vm3067, %v3055, %v2946
        %v3073 = vsel %vm3067, %v3056, %v2948
        %v3074 = vsel %vm3067, %v3057, %v2950
        %v3075 = vsel %vm3067, %v3058, %v2952
        %v3076 = vsel %vm3067, %v3059, %v2954
        %v3077 = vsel %vm3067, %v3060, %v2956
        %v3078 = vsel %vm3067, %v3061, %v2958
        %v3079 = vsel %vm3067, %v3062, %v2960
        %v3080 = vsel %vm3067, %v3063, %v2962
        %v3081 = vsel %vm3067, %v3064, %v2964
        %v3082 = vsel %vm3067, %v3065, %v2966
        %v3083 = vsel %vm3067, %v3066, %v2968
        %vm3084 = vcmask 654336
        %v3085 = vsel %vm3084, %v2938, %v2987
        %v3086 = vsel %vm3084, %v2940, %v2989
        %v3087 = vsel %vm3084, %v2942, %v2991
        %v3088 = vsel %vm3084, %v2944, %v2993
        %v3089 = vsel %vm3084, %v2946, %v2995
        %v3090 = vsel %vm3084, %v2948, %v2997
        %v3091 = vsel %vm3084, %v2950, %v2999
        %v3092 = vsel %vm3084, %v2952, %v3001
        %v3093 = vsel %vm3084, %v2954, %v3003
        %v3094 = vsel %vm3084, %v2956, %v3005
        %v3095 = vsel %vm3084, %v2958, %v3007
        %v3096 = vsel %vm3084, %v2960, %v3009
        %v3097 = vsel %vm3084, %v2962, %v3011
        %v3098 = vsel %vm3084, %v2964, %v3013
        %v3099 = vsel %vm3084, %v2966, %v3015
        %v3100 = vsel %vm3084, %v2968, %v3017
        %v3101 = vpack.c.bf16 %v3036, %v3035
        %v3102 = vpack.c.bf16 %v3069, %v3068
        %v3103 = vpack.c.bf16 %v3086, %v3085
        %v3104 = vpack.c.bf16 %v2989, %v2987
        %v3105 = vpack.c.bf16 %v3038, %v3037
        %v3106 = vpack.c.bf16 %v3071, %v3070
        %v3107 = vpack.c.bf16 %v3088, %v3087
        %v3108 = vpack.c.bf16 %v2993, %v2991
        %v3109 = vpack.c.bf16 %v3040, %v3039
        %v3110 = vpack.c.bf16 %v3073, %v3072
        %v3111 = vpack.c.bf16 %v3090, %v3089
        %v3112 = vpack.c.bf16 %v2997, %v2995
        %v3113 = vpack.c.bf16 %v3042, %v3041
        %v3114 = vpack.c.bf16 %v3075, %v3074
        %v3115 = vpack.c.bf16 %v3092, %v3091
        %v3116 = vpack.c.bf16 %v3001, %v2999
        %v3117 = vpack.c.bf16 %v3044, %v3043
        %v3118 = vpack.c.bf16 %v3077, %v3076
        %v3119 = vpack.c.bf16 %v3094, %v3093
        %v3120 = vpack.c.bf16 %v3005, %v3003
        %v3121 = vpack.c.bf16 %v3046, %v3045
        %v3122 = vpack.c.bf16 %v3079, %v3078
        %v3123 = vpack.c.bf16 %v3096, %v3095
        %v3124 = vpack.c.bf16 %v3009, %v3007
        %v3125 = vpack.c.bf16 %v3048, %v3047
        %v3126 = vpack.c.bf16 %v3081, %v3080
        %v3127 = vpack.c.bf16 %v3098, %v3097
        %v3128 = vpack.c.bf16 %v3013, %v3011
        %v3129 = vpack.c.bf16 %v3050, %v3049
        %v3130 = vpack.c.bf16 %v3083, %v3082
        %v3131 = vpack.c.bf16 %v3100, %v3099
        %v3132 = vpack.c.bf16 %v3017, %v3015
        %v3133 = vld [vmem:[%s3] sm:$0xff]
        %v3134 = vld [vmem:[%s3 + $0x8] sm:$0xff]
        %v3135 = vld [vmem:[%s3 + $0x10] sm:$0xff]
        %v3136 = vld [vmem:[%s3 + $0x18] sm:$0xff]
        %v3137 = vld [vmem:[%s3 + $0x20] sm:$0xff]
        %v3138 = vld [vmem:[%s3 + $0x28] sm:$0xff]
        %v3139 = vld [vmem:[%s3 + $0x30] sm:$0xff]
        %v3140 = vld [vmem:[%s3 + $0x38] sm:$0xff]
        %v3141 = vld [vmem:[%s3 + $0x40] sm:$0xff]
        %v3142 = vld [vmem:[%s3 + $0x48] sm:$0xff]
        %v3143 = vld [vmem:[%s3 + $0x50] sm:$0xff]
        %v3144 = vld [vmem:[%s3 + $0x58] sm:$0xff]
        %v3145 = vld [vmem:[%s3 + $0x60] sm:$0xff]
        %v3146 = vld [vmem:[%s3 + $0x68] sm:$0xff]
        %v3147 = vld [vmem:[%s3 + $0x70] sm:$0xff]
        %v3148 = vld [vmem:[%s3 + $0x78] sm:$0xff]
        %v3149 = vld [vmem:[%s3 + $0x80] sm:$0xff]
        %v3150 = vld [vmem:[%s3 + $0x88] sm:$0xff]
        %v3151 = vld [vmem:[%s3 + $0x90] sm:$0xff]
        %v3152 = vld [vmem:[%s3 + $0x98] sm:$0xff]
        %v3153 = vld [vmem:[%s3 + $0xa0] sm:$0xff]
        %v3154 = vld [vmem:[%s3 + $0xa8] sm:$0xff]
        %v3155 = vld [vmem:[%s3 + $0xb0] sm:$0xff]
        %v3156 = vld [vmem:[%s3 + $0xb8] sm:$0xff]
        %v3157 = vld [vmem:[%s3 + $0xc0] sm:$0xff]
        %v3158 = vld [vmem:[%s3 + $0xc8] sm:$0xff]
        %v3159 = vld [vmem:[%s3 + $0xd0] sm:$0xff]
        %v3160 = vld [vmem:[%s3 + $0xd8] sm:$0xff]
        %v3161 = vld [vmem:[%s3 + $0xe0] sm:$0xff]
        %v3162 = vld [vmem:[%s3 + $0xe8] sm:$0xff]
        %v3163 = vld [vmem:[%s3 + $0xf0] sm:$0xff]
        %v3164 = vld [vmem:[%s3 + $0xf8] sm:$0xff]
        %v3165 = vld [vmem:[%s3 + $0x100] sm:$0xff]
        %v3166 = vld [vmem:[%s3 + $0x108] sm:$0xff]
        %v3167 = vld [vmem:[%s3 + $0x110] sm:$0xff]
        %v3168 = vld [vmem:[%s3 + $0x118] sm:$0xff]
        %v3169 = vld [vmem:[%s3 + $0x120] sm:$0xff]
        %v3170 = vld [vmem:[%s3 + $0x128] sm:$0xff]
        %v3171 = vld [vmem:[%s3 + $0x130] sm:$0xff]
        %v3172 = vld [vmem:[%s3 + $0x138] sm:$0xff]
        %v3173 = vld [vmem:[%s3 + $0x140] sm:$0xff]
        %v3174 = vld [vmem:[%s3 + $0x148] sm:$0xff]
        %v3175 = vld [vmem:[%s3 + $0x150] sm:$0xff]
        %v3176 = vld [vmem:[%s3 + $0x158] sm:$0xff]
        %v3177 = vld [vmem:[%s3 + $0x160] sm:$0xff]
        %v3178 = vld [vmem:[%s3 + $0x168] sm:$0xff]
        %v3179 = vld [vmem:[%s3 + $0x170] sm:$0xff]
        %v3180 = vld [vmem:[%s3 + $0x178] sm:$0xff]
        %v3181 = vld [vmem:[%s3 + $0x180] sm:$0xff]
        %v3182 = vld [vmem:[%s3 + $0x188] sm:$0xff]
        %v3183 = vld [vmem:[%s3 + $0x190] sm:$0xff]
        %v3184 = vld [vmem:[%s3 + $0x198] sm:$0xff]
        %v3185 = vld [vmem:[%s3 + $0x1a0] sm:$0x33]
        %v3186 = vld [vmem:[%s4] sm:$0x3]
        %v3188 = vlaneseq
        %v3189 = vshrl.u32 %v3188, 7
        %v3190 = vsub.s32 0, %v3189
        %v3191 = vrot.slane %v3186, %v3190
        %v3192 = vlaneseq
        %v3193 = vshrl.u32 %v3192, 7
        %v3194 = vsub.s32 1, %v3193
        %v3195 = vrot.slane %v3186, %v3194
        %v3251 = vunpack.c.l.b16 %v3133
        %v3252 = vunpack.c.h.b16 %v3133
        %v3253 = vunpack.c.l.b16 %v3134
        %v3254 = vunpack.c.h.b16 %v3134
        %v3255 = vunpack.c.l.b16 %v3135
        %v3256 = vunpack.c.h.b16 %v3135
        %v3257 = vunpack.c.l.b16 %v3136
        %v3258 = vunpack.c.h.b16 %v3136
        %v3259 = vunpack.c.l.b16 %v3137
        %v3260 = vunpack.c.h.b16 %v3137
        %v3261 = vunpack.c.l.b16 %v3138
        %v3262 = vunpack.c.h.b16 %v3138
        %v3263 = vunpack.c.l.b16 %v3139
        %v3264 = vunpack.c.h.b16 %v3139
        %v3265 = vunpack.c.l.b16 %v3140
        %v3266 = vunpack.c.h.b16 %v3140
        %v3267 = vunpack.c.l.b16 %v3141
        %v3268 = vunpack.c.h.b16 %v3141
        %v3269 = vunpack.c.l.b16 %v3142
        %v3270 = vunpack.c.h.b16 %v3142
        %v3271 = vunpack.c.l.b16 %v3143
        %v3272 = vunpack.c.h.b16 %v3143
        %v3273 = vunpack.c.l.b16 %v3144
        %v3274 = vunpack.c.h.b16 %v3144
        %v3275 = vunpack.c.l.b16 %v3145
        %v3276 = vunpack.c.h.b16 %v3145
        %v3277 = vunpack.c.l.b16 %v3146
        %v3278 = vunpack.c.h.b16 %v3146
        %v3279 = vunpack.c.l.b16 %v3147
        %v3280 = vunpack.c.h.b16 %v3147
        %v3281 = vunpack.c.l.b16 %v3148
        %v3282 = vunpack.c.h.b16 %v3148
        %v3283 = vunpack.c.l.b16 %v3149
        %v3284 = vunpack.c.h.b16 %v3149
        %v3285 = vunpack.c.l.b16 %v3150
        %v3286 = vunpack.c.h.b16 %v3150
        %v3287 = vunpack.c.l.b16 %v3151
        %v3288 = vunpack.c.h.b16 %v3151
        %v3289 = vunpack.c.l.b16 %v3152
        %v3290 = vunpack.c.h.b16 %v3152
        %v3291 = vunpack.c.l.b16 %v3153
        %v3292 = vunpack.c.h.b16 %v3153
        %v3293 = vunpack.c.l.b16 %v3154
        %v3294 = vunpack.c.h.b16 %v3154
        %v3295 = vunpack.c.l.b16 %v3155
        %v3296 = vunpack.c.h.b16 %v3155
        %v3297 = vunpack.c.l.b16 %v3156
        %v3298 = vunpack.c.h.b16 %v3156
        %v3299 = vunpack.c.l.b16 %v3157
        %v3300 = vunpack.c.h.b16 %v3157
        %v3301 = vunpack.c.l.b16 %v3158
        %v3302 = vunpack.c.h.b16 %v3158
        %v3303 = vunpack.c.l.b16 %v3159
        %v3304 = vunpack.c.h.b16 %v3159
        %v3305 = vunpack.c.l.b16 %v3160
        %v3306 = vunpack.c.h.b16 %v3160
        %v3307 = vunpack.c.l.b16 %v3161
        %v3308 = vunpack.c.h.b16 %v3161
        %v3309 = vunpack.c.l.b16 %v3162
        %v3310 = vunpack.c.h.b16 %v3162
        %v3311 = vunpack.c.l.b16 %v3163
        %v3312 = vunpack.c.h.b16 %v3163
        %v3313 = vunpack.c.l.b16 %v3164
        %v3314 = vunpack.c.h.b16 %v3164
        %v3315 = vunpack.c.l.b16 %v3165
        %v3316 = vunpack.c.h.b16 %v3165
        %v3317 = vunpack.c.l.b16 %v3166
        %v3318 = vunpack.c.h.b16 %v3166
        %v3319 = vunpack.c.l.b16 %v3167
        %v3320 = vunpack.c.h.b16 %v3167
        %v3321 = vunpack.c.l.b16 %v3168
        %v3322 = vunpack.c.h.b16 %v3168
        %v3323 = vunpack.c.l.b16 %v3169
        %v3324 = vunpack.c.h.b16 %v3169
        %v3325 = vunpack.c.l.b16 %v3170
        %v3326 = vunpack.c.h.b16 %v3170
        %v3327 = vunpack.c.l.b16 %v3171
        %v3328 = vunpack.c.h.b16 %v3171
        %v3329 = vunpack.c.l.b16 %v3172
        %v3330 = vunpack.c.h.b16 %v3172
        %v3331 = vunpack.c.l.b16 %v3173
        %v3332 = vunpack.c.h.b16 %v3173
        %v3333 = vunpack.c.l.b16 %v3174
        %v3334 = vunpack.c.h.b16 %v3174
        %v3335 = vunpack.c.l.b16 %v3175
        %v3336 = vunpack.c.h.b16 %v3175
        %v3337 = vunpack.c.l.b16 %v3176
        %v3338 = vunpack.c.h.b16 %v3176
        %v3339 = vunpack.c.l.b16 %v3177
        %v3340 = vunpack.c.h.b16 %v3177
        %v3341 = vunpack.c.l.b16 %v3178
        %v3342 = vunpack.c.h.b16 %v3178
        %v3343 = vunpack.c.l.b16 %v3179
        %v3344 = vunpack.c.h.b16 %v3179
        %v3345 = vunpack.c.l.b16 %v3180
        %v3346 = vunpack.c.h.b16 %v3180
        %v3347 = vunpack.c.l.b16 %v3181
        %v3348 = vunpack.c.h.b16 %v3181
        %v3349 = vunpack.c.l.b16 %v3182
        %v3350 = vunpack.c.h.b16 %v3182
        %v3351 = vunpack.c.l.b16 %v3183
        %v3352 = vunpack.c.h.b16 %v3183
        %v3353 = vunpack.c.l.b16 %v3184
        %v3354 = vunpack.c.h.b16 %v3184
        %v3355 = vunpack.c.l.b16 %v3185
        %v3356 = vunpack.c.h.b16 %v3185
        %v3357 = vpack.c.b16 %v3253, %v3251
        %v3358 = vpack.c.b16 %v3254, %v3252
        %v3359 = vpack.c.b16 %v3257, %v3255
        %v3360 = vpack.c.b16 %v3258, %v3256
        %v3361 = vpack.c.b16 %v3261, %v3259
        %v3362 = vpack.c.b16 %v3262, %v3260
        %v3363 = vpack.c.b16 %v3265, %v3263
        %v3364 = vpack.c.b16 %v3266, %v3264
        %v3365 = vpack.c.b16 %v3269, %v3267
        %v3366 = vpack.c.b16 %v3270, %v3268
        %v3367 = vpack.c.b16 %v3273, %v3271
        %v3368 = vpack.c.b16 %v3274, %v3272
        %v3369 = vpack.c.b16 %v3277, %v3275
        %v3370 = vpack.c.b16 %v3278, %v3276
        %v3371 = vpack.c.b16 %v3281, %v3279
        %v3372 = vpack.c.b16 %v3282, %v3280
        %v3373 = vpack.c.b16 %v3285, %v3283
        %v3374 = vpack.c.b16 %v3286, %v3284
        %v3375 = vpack.c.b16 %v3289, %v3287
        %v3376 = vpack.c.b16 %v3290, %v3288
        %v3377 = vpack.c.b16 %v3293, %v3291
        %v3378 = vpack.c.b16 %v3294, %v3292
        %v3379 = vpack.c.b16 %v3297, %v3295
        %v3380 = vpack.c.b16 %v3298, %v3296
        %v3381 = vpack.c.b16 %v3301, %v3299
        %v3382 = vpack.c.b16 %v3302, %v3300
        %v3383 = vpack.c.b16 %v3305, %v3303
        %v3384 = vpack.c.b16 %v3306, %v3304
        %v3385 = vpack.c.b16 %v3309, %v3307
        %v3386 = vpack.c.b16 %v3310, %v3308
        %v3387 = vpack.c.b16 %v3313, %v3311
        %v3388 = vpack.c.b16 %v3314, %v3312
        %v3389 = vpack.c.b16 %v3317, %v3315
        %v3390 = vpack.c.b16 %v3318, %v3316
        %v3391 = vpack.c.b16 %v3321, %v3319
        %v3392 = vpack.c.b16 %v3322, %v3320
        %v3393 = vpack.c.b16 %v3325, %v3323
        %v3394 = vpack.c.b16 %v3326, %v3324
        %v3395 = vpack.c.b16 %v3329, %v3327
        %v3396 = vpack.c.b16 %v3330, %v3328
        %v3397 = vpack.c.b16 %v3333, %v3331
        %v3398 = vpack.c.b16 %v3334, %v3332
        %v3399 = vpack.c.b16 %v3337, %v3335
        %v3400 = vpack.c.b16 %v3338, %v3336
        %v3401 = vpack.c.b16 %v3341, %v3339
        %v3402 = vpack.c.b16 %v3342, %v3340
        %v3403 = vpack.c.b16 %v3345, %v3343
        %v3404 = vpack.c.b16 %v3346, %v3344
        %v3405 = vpack.c.b16 %v3349, %v3347
        %v3406 = vpack.c.b16 %v3350, %v3348
        %v3407 = vpack.c.b16 %v3353, %v3351
        %v3408 = vpack.c.b16 %v3354, %v3352
        %v3409 = vpack.c.b16 %v3355, %v3355
        %v3410 = vpack.c.b16 %v3356, %v3356
        %vm3463 = vcmask 293888
        %v3465 = vsel %vm3463, %v3104, 0
        %v3468 = vsel %vm3463, %v3108, 0
        %v3471 = vsel %vm3463, %v3112, 0
        %v3474 = vsel %vm3463, %v3116, 0
        %v3477 = vsel %vm3463, %v3120, 0
        %v3480 = vsel %vm3463, %v3124, 0
        %v3483 = vsel %vm3463, %v3128, 0
        %v3486 = vsel %vm3463, %v3132, 0
        %vm3488 = vcmask 1041408
        %v3490 = vsel %vm3488, %v3409, 0
        %v3493 = vsel %vm3488, %v3410, 0
        %3495 = vmatprep.subr.bf16.mxu0 %v3358
        %3496 = vmatpush1.bf16.msra.mxu0 %v3357
        %3497 = vmatprep.subr.bf16.mxu0 %v3360
        %3498 = vmatpush1.bf16.msra.mxu0 %v3359
        %3499 = vmatprep.subr.bf16.mxu0 %v3362
        %3500 = vmatpush1.bf16.msra.mxu0 %v3361
        %3501 = vmatprep.subr.bf16.mxu0 %v3364
        %3502 = vmatpush1.bf16.msra.mxu0 %v3363
        %3503 = vmatprep.subr.bf16.mxu0 %v3366
        %3504 = vmatpush1.bf16.msra.mxu0 %v3365
        %3505 = vmatprep.subr.bf16.mxu0 %v3368
        %3506 = vmatpush1.bf16.msra.mxu0 %v3367
        %3507 = vmatprep.subr.bf16.mxu0 %v3370
        %3508 = vmatpush1.bf16.msra.mxu0 %v3369
        %3509 = vmatprep.subr.bf16.mxu0 %v3372
        %3510 = vmatpush1.bf16.msra.mxu0 %v3371
        %3511 = vmatprep.subr.bf16.mxu0 %v3374
        %3512 = vmatpush1.bf16.msra.mxu0 %v3373
        %3513 = vmatprep.subr.bf16.mxu0 %v3376
        %3514 = vmatpush1.bf16.msra.mxu0 %v3375
        %3515 = vmatprep.subr.bf16.mxu0 %v3378
        %3516 = vmatpush1.bf16.msra.mxu0 %v3377
        %3517 = vmatprep.subr.bf16.mxu0 %v3380
        %3518 = vmatpush1.bf16.msra.mxu0 %v3379
        %3519 = vmatprep.subr.bf16.mxu0 %v3382
        %3520 = vmatpush1.bf16.msra.mxu0 %v3381
        %3521 = vmatprep.subr.bf16.mxu0 %v3384
        %3522 = vmatpush1.bf16.msra.mxu0 %v3383
        %3523 = vmatprep.subr.bf16.mxu0 %v3386
        %3524 = vmatpush1.bf16.msra.mxu0 %v3385
        %3525 = vmatprep.subr.bf16.mxu0 %v3388
        %3526 = vmatpush1.bf16.msra.mxu0 %v3387
        %3527 = vmatprep.mubr.bf16.mxu0 %v3102
        %3528 = vmatmul.mubr.bf16.gmra.mrb[0].mxu0 %v3101
        %v3529 = vpop.f32.mrb[0].mxu0
        %v3530 = vadd.f32 %v3191, %v3529
        %v3531 = vpop.f32.mrb[0].mxu0
        %v3532 = vadd.f32 %v3195, %v3531
        %v3533 = vpop.f32.mrb[0].mxu0
        %v3534 = vadd.f32 %v3191, %v3533
        %v3535 = vpop.f32.mrb[0].mxu0
        %v3536 = vadd.f32 %v3195, %v3535
        %3537 = vmatprep.mubr.bf16.mxu0 %v3106
        %3538 = vmatmul.mubr.bf16.gmra.mrb[0].mxu0 %v3105
        %v3539 = vpop.f32.mrb[0].mxu0
        %v3540 = vadd.f32 %v3191, %v3539
        %v3541 = vpop.f32.mrb[0].mxu0
        %v3542 = vadd.f32 %v3195, %v3541
        %v3543 = vpop.f32.mrb[0].mxu0
        %v3544 = vadd.f32 %v3191, %v3543
        %v3545 = vpop.f32.mrb[0].mxu0
        %v3546 = vadd.f32 %v3195, %v3545
        %3547 = vmatprep.mubr.bf16.mxu0 %v3110
        %3548 = vmatmul.mubr.bf16.gmra.mrb[0].mxu0 %v3109
        %v3549 = vpop.f32.mrb[0].mxu0
        %v3550 = vadd.f32 %v3191, %v3549
        %v3551 = vpop.f32.mrb[0].mxu0
        %v3552 = vadd.f32 %v3195, %v3551
        %v3553 = vpop.f32.mrb[0].mxu0
        %v3554 = vadd.f32 %v3191, %v3553
        %v3555 = vpop.f32.mrb[0].mxu0
        %v3556 = vadd.f32 %v3195, %v3555
        %3557 = vmatprep.mubr.bf16.mxu0 %v3114
        %3558 = vmatmul.mubr.bf16.gmra.mrb[0].mxu0 %v3113
        %v3559 = vpop.f32.mrb[0].mxu0
        %v3560 = vadd.f32 %v3191, %v3559
        %v3561 = vpop.f32.mrb[0].mxu0
        %v3562 = vadd.f32 %v3195, %v3561
        %v3563 = vpop.f32.mrb[0].mxu0
        %v3564 = vadd.f32 %v3191, %v3563
        %v3565 = vpop.f32.mrb[0].mxu0
        %v3566 = vadd.f32 %v3195, %v3565
        %3567 = vmatprep.mubr.bf16.mxu0 %v3118
        %3568 = vmatmul.mubr.bf16.gmra.mrb[0].mxu0 %v3117
        %v3569 = vpop.f32.mrb[0].mxu0
        %v3570 = vadd.f32 %v3191, %v3569
        %v3571 = vpop.f32.mrb[0].mxu0
        %v3572 = vadd.f32 %v3195, %v3571
        %v3573 = vpop.f32.mrb[0].mxu0
        %v3574 = vadd.f32 %v3191, %v3573
        %v3575 = vpop.f32.mrb[0].mxu0
        %v3576 = vadd.f32 %v3195, %v3575
        %3577 = vmatprep.mubr.bf16.mxu0 %v3122
        %3578 = vmatmul.mubr.bf16.gmra.mrb[0].mxu0 %v3121
        %v3579 = vpop.f32.mrb[0].mxu0
        %v3580 = vadd.f32 %v3191, %v3579
        %v3581 = vpop.f32.mrb[0].mxu0
        %v3582 = vadd.f32 %v3195, %v3581
        %v3583 = vpop.f32.mrb[0].mxu0
        %v3584 = vadd.f32 %v3191, %v3583
        %v3585 = vpop.f32.mrb[0].mxu0
        %v3586 = vadd.f32 %v3195, %v3585
        %3587 = vmatprep.mubr.bf16.mxu0 %v3126
        %3588 = vmatmul.mubr.bf16.gmra.mrb[0].mxu0 %v3125
        %v3589 = vpop.f32.mrb[0].mxu0
        %v3590 = vadd.f32 %v3191, %v3589
        %v3591 = vpop.f32.mrb[0].mxu0
        %v3592 = vadd.f32 %v3195, %v3591
        %v3593 = vpop.f32.mrb[0].mxu0
        %v3594 = vadd.f32 %v3191, %v3593
        %v3595 = vpop.f32.mrb[0].mxu0
        %v3596 = vadd.f32 %v3195, %v3595
        %3597 = vmatprep.mubr.bf16.mxu0 %v3130
        %3598 = vmatmul.mubr.bf16.gmra.mrb[0].mxu0 %v3129
        %v3599 = vpop.f32.mrb[0].mxu0
        %v3600 = vadd.f32 %v3191, %v3599
        %v3601 = vpop.f32.mrb[0].mxu0
        %v3602 = vadd.f32 %v3195, %v3601
        %v3603 = vpop.f32.mrb[0].mxu0
        %v3604 = vadd.f32 %v3191, %v3603
        %v3605 = vpop.f32.mrb[0].mxu0
        %v3606 = vadd.f32 %v3195, %v3605
        %3607 = vdwg.mxu0
        %3608 = vmatprep.subr.bf16.mxu0 %v3390
        %3609 = vmatpush1.bf16.msra.mxu0 %v3389
        %3610 = vmatprep.subr.bf16.mxu0 %v3392
        %3611 = vmatpush1.bf16.msra.mxu0 %v3391
        %3612 = vmatprep.subr.bf16.mxu0 %v3394
        %3613 = vmatpush1.bf16.msra.mxu0 %v3393
        %3614 = vmatprep.subr.bf16.mxu0 %v3396
        %3615 = vmatpush1.bf16.msra.mxu0 %v3395
        %3616 = vmatprep.subr.bf16.mxu0 %v3398
        %3617 = vmatpush1.bf16.msra.mxu0 %v3397
        %3618 = vmatprep.subr.bf16.mxu0 %v3400
        %3619 = vmatpush1.bf16.msra.mxu0 %v3399
        %3620 = vmatprep.subr.bf16.mxu0 %v3402
        %3621 = vmatpush1.bf16.msra.mxu0 %v3401
        %3622 = vmatprep.subr.bf16.mxu0 %v3404
        %3623 = vmatpush1.bf16.msra.mxu0 %v3403
        %3624 = vmatprep.subr.bf16.mxu0 %v3406
        %3625 = vmatpush1.bf16.msra.mxu0 %v3405
        %3626 = vmatprep.subr.bf16.mxu0 %v3408
        %3627 = vmatpush1.bf16.msra.mxu0 %v3407
        %3628 = vmatprep.subr.bf16.mxu0 %v3493
        %3629 = vmatpush1.bf16.msra.mxu0 %v3490
        %3630 = vmatprep.subr.bf16.mxu0 0
        %3631 = vmatpush1.bf16.msra.mxu0 0
        %3632 = vmatprep.subr.bf16.mxu0 0
        %3633 = vmatpush1.bf16.msra.mxu0 0
        %3634 = vmatprep.subr.bf16.mxu0 0
        %3635 = vmatpush1.bf16.msra.mxu0 0
        %3636 = vmatprep.subr.bf16.mxu0 0
        %3637 = vmatpush1.bf16.msra.mxu0 0
        %3638 = vmatprep.subr.bf16.mxu0 0
        %3639 = vmatpush1.bf16.msra.mxu0 0
        %3640 = vmatprep.mubr.bf16.mxu0 %v3465
        %3641 = vmatmul.mubr.bf16.gmra.mrb[0].mxu0 %v3103
        %v3642 = vpop.f32.mrb[0].mxu0
        %v3643 = vadd.f32 %v3530, %v3642
        %v3644 = vpop.f32.mrb[0].mxu0
        %v3645 = vadd.f32 %v3532, %v3644
        %v3646 = vpop.f32.mrb[0].mxu0
        %v3647 = vadd.f32 %v3534, %v3646
        %v3648 = vpop.f32.mrb[0].mxu0
        %v3649 = vadd.f32 %v3536, %v3648
        %3650 = vmatprep.mubr.bf16.mxu0 %v3468
        %3651 = vmatmul.mubr.bf16.gmra.mrb[0].mxu0 %v3107
        %v3652 = vpop.f32.mrb[0].mxu0
        %v3653 = vadd.f32 %v3540, %v3652
        %v3654 = vpop.f32.mrb[0].mxu0
        %v3655 = vadd.f32 %v3542, %v3654
        %v3656 = vpop.f32.mrb[0].mxu0
        %v3657 = vadd.f32 %v3544, %v3656
        %v3658 = vpop.f32.mrb[0].mxu0
        %v3659 = vadd.f32 %v3546, %v3658
        %3660 = vmatprep.mubr.bf16.mxu0 %v3471
        %3661 = vmatmul.mubr.bf16.gmra.mrb[0].mxu0 %v3111
        %v3662 = vpop.f32.mrb[0].mxu0
        %v3663 = vadd.f32 %v3550, %v3662
        %v3664 = vpop.f32.mrb[0].mxu0
        %v3665 = vadd.f32 %v3552, %v3664
        %v3666 = vpop.f32.mrb[0].mxu0
        %v3667 = vadd.f32 %v3554, %v3666
        %v3668 = vpop.f32.mrb[0].mxu0
        %v3669 = vadd.f32 %v3556, %v3668
        %3670 = vmatprep.mubr.bf16.mxu0 %v3474
        %3671 = vmatmul.mubr.bf16.gmra.mrb[0].mxu0 %v3115
        %v3672 = vpop.f32.mrb[0].mxu0
        %v3673 = vadd.f32 %v3560, %v3672
        %v3674 = vpop.f32.mrb[0].mxu0
        %v3675 = vadd.f32 %v3562, %v3674
        %v3676 = vpop.f32.mrb[0].mxu0
        %v3677 = vadd.f32 %v3564, %v3676
        %v3678 = vpop.f32.mrb[0].mxu0
        %v3679 = vadd.f32 %v3566, %v3678
        %3680 = vmatprep.mubr.bf16.mxu0 %v3477
        %3681 = vmatmul.mubr.bf16.gmra.mrb[0].mxu0 %v3119
        %v3682 = vpop.f32.mrb[0].mxu0
        %v3683 = vadd.f32 %v3570, %v3682
        %v3684 = vpop.f32.mrb[0].mxu0
        %v3685 = vadd.f32 %v3572, %v3684
        %v3686 = vpop.f32.mrb[0].mxu0
        %v3687 = vadd.f32 %v3574, %v3686
        %v3688 = vpop.f32.mrb[0].mxu0
        %v3689 = vadd.f32 %v3576, %v3688
        %3690 = vmatprep.mubr.bf16.mxu0 %v3480
        %3691 = vmatmul.mubr.bf16.gmra.mrb[0].mxu0 %v3123
        %v3692 = vpop.f32.mrb[0].mxu0
        %v3693 = vadd.f32 %v3580, %v3692
        %v3694 = vpop.f32.mrb[0].mxu0
        %v3695 = vadd.f32 %v3582, %v3694
        %v3696 = vpop.f32.mrb[0].mxu0
        %v3697 = vadd.f32 %v3584, %v3696
        %v3698 = vpop.f32.mrb[0].mxu0
        %v3699 = vadd.f32 %v3586, %v3698
        %3700 = vmatprep.mubr.bf16.mxu0 %v3483
        %3701 = vmatmul.mubr.bf16.gmra.mrb[0].mxu0 %v3127
        %v3702 = vpop.f32.mrb[0].mxu0
        %v3703 = vadd.f32 %v3590, %v3702
        %v3704 = vpop.f32.mrb[0].mxu0
        %v3705 = vadd.f32 %v3592, %v3704
        %v3706 = vpop.f32.mrb[0].mxu0
        %v3707 = vadd.f32 %v3594, %v3706
        %v3708 = vpop.f32.mrb[0].mxu0
        %v3709 = vadd.f32 %v3596, %v3708
        %3710 = vmatprep.mubr.bf16.mxu0 %v3486
        %3711 = vmatmul.mubr.bf16.gmra.mrb[0].mxu0 %v3131
        %v3712 = vpop.f32.mrb[0].mxu0
        %v3713 = vadd.f32 %v3600, %v3712
        %v3714 = vpop.f32.mrb[0].mxu0
        %v3715 = vadd.f32 %v3602, %v3714
        %v3716 = vpop.f32.mrb[0].mxu0
        %v3717 = vadd.f32 %v3604, %v3716
        %v3718 = vpop.f32.mrb[0].mxu0
        %v3719 = vadd.f32 %v3606, %v3718
        %3720 = vdwg.mxu0
        %v3721 = vmax.f32 %v3643, 0.0
        %v3722 = vmax.f32 %v3645, 0.0
        %v3723 = vmax.f32 %v3647, 0.0
        %v3724 = vmax.f32 %v3649, 0.0
        %v3725 = vmax.f32 %v3653, 0.0
        %v3726 = vmax.f32 %v3655, 0.0
        %v3727 = vmax.f32 %v3657, 0.0
        %v3728 = vmax.f32 %v3659, 0.0
        %v3729 = vmax.f32 %v3663, 0.0
        %v3730 = vmax.f32 %v3665, 0.0
        %v3731 = vmax.f32 %v3667, 0.0
        %v3732 = vmax.f32 %v3669, 0.0
        %v3733 = vmax.f32 %v3673, 0.0
        %v3734 = vmax.f32 %v3675, 0.0
        %v3735 = vmax.f32 %v3677, 0.0
        %v3736 = vmax.f32 %v3679, 0.0
        %v3737 = vmax.f32 %v3683, 0.0
        %v3738 = vmax.f32 %v3685, 0.0
        %v3739 = vmax.f32 %v3687, 0.0
        %v3740 = vmax.f32 %v3689, 0.0
        %v3741 = vmax.f32 %v3693, 0.0
        %v3742 = vmax.f32 %v3695, 0.0
        %v3743 = vmax.f32 %v3697, 0.0
        %v3744 = vmax.f32 %v3699, 0.0
        %v3745 = vmax.f32 %v3703, 0.0
        %v3746 = vmax.f32 %v3705, 0.0
        %v3747 = vmax.f32 %v3707, 0.0
        %v3748 = vmax.f32 %v3709, 0.0
        %v3749 = vmax.f32 %v3713, 0.0
        %v3750 = vmax.f32 %v3715, 0.0
        %v3751 = vmax.f32 %v3717, 0.0
        %v3752 = vmax.f32 %v3719, 0.0
        %v3753 = vpack.c.bf16 %v3723, %v3721
        %v3754 = vpack.c.bf16 %v3724, %v3722
        %v3755 = vpack.c.bf16 %v3727, %v3725
        %v3756 = vpack.c.bf16 %v3728, %v3726
        %v3757 = vpack.c.bf16 %v3731, %v3729
        %v3758 = vpack.c.bf16 %v3732, %v3730
        %v3759 = vpack.c.bf16 %v3735, %v3733
        %v3760 = vpack.c.bf16 %v3736, %v3734
        %v3761 = vpack.c.bf16 %v3739, %v3737
        %v3762 = vpack.c.bf16 %v3740, %v3738
        %v3763 = vpack.c.bf16 %v3743, %v3741
        %v3764 = vpack.c.bf16 %v3744, %v3742
        %v3765 = vpack.c.bf16 %v3747, %v3745
        %v3766 = vpack.c.bf16 %v3748, %v3746
        %v3767 = vpack.c.bf16 %v3751, %v3749
        %v3768 = vpack.c.bf16 %v3752, %v3750
        %v3769 = vld [vmem:[#allocation5] sm:$0xf]
        %v3770 = vld [vmem:[#allocation5 + $0x4] sm:$0xf]
        %v3771 = vld [vmem:[#allocation5 + $0x8] sm:$0xf]
        %v3772 = vld [vmem:[#allocation5 + $0xc] sm:$0xf]
        %v3773 = vld [vmem:[#allocation5 + $0x10] sm:$0xf]
        %v3779 = vunpack.c.l.b16 %v3769
        %v3780 = vunpack.c.l.b16 %v3770
        %v3781 = vunpack.c.l.b16 %v3771
        %v3782 = vunpack.c.l.b16 %v3772
        %v3783 = vunpack.c.l.b16 %v3773
        %v3784 = vpack.c.b16 %v3780, %v3779
        %v3785 = vpack.c.b16 %v3782, %v3781
        %v3786 = vpack.c.b16 %v3783, %v3783
        %3790 = vmatprep.subr.bf16.mxu0 %v3754
        %3791 = vmatpush1.bf16.msra.mxu0 %v3753
        %3792 = vmatprep.subr.bf16.mxu0 %v3756
        %3793 = vmatpush1.bf16.msra.mxu0 %v3755
        %3794 = vmatprep.subr.bf16.mxu0 %v3758
        %3795 = vmatpush1.bf16.msra.mxu0 %v3757
        %3796 = vmatprep.subr.bf16.mxu0 %v3760
        %3797 = vmatpush1.bf16.msra.mxu0 %v3759
        %3798 = vmatprep.subr.bf16.mxu0 %v3762
        %3799 = vmatpush1.bf16.msra.mxu0 %v3761
        %3800 = vmatprep.subr.bf16.mxu0 %v3764
        %3801 = vmatpush1.bf16.msra.mxu0 %v3763
        %3802 = vmatprep.subr.bf16.mxu0 %v3766
        %3803 = vmatpush1.bf16.msra.mxu0 %v3765
        %3804 = vmatprep.subr.bf16.mxu0 %v3768
        %3805 = vmatpush1.bf16.msra.mxu0 %v3767
        %3806 = vmatprep.subr.bf16.mxu0 0
        %3807 = vmatpush1.bf16.msra.mxu0 0
        %3808 = vmatprep.subr.bf16.mxu0 0
        %3809 = vmatpush1.bf16.msra.mxu0 0
        %3810 = vmatprep.subr.bf16.mxu0 0
        %3811 = vmatpush1.bf16.msra.mxu0 0
        %3812 = vmatprep.subr.bf16.mxu0 0
        %3813 = vmatpush1.bf16.msra.mxu0 0
        %3814 = vmatprep.subr.bf16.mxu0 0
        %3815 = vmatpush1.bf16.msra.mxu0 0
        %3816 = vmatprep.subr.bf16.mxu0 0
        %3817 = vmatpush1.bf16.msra.mxu0 0
        %3818 = vmatprep.subr.bf16.mxu0 0
        %3819 = vmatpush1.bf16.msra.mxu0 0
        %3820 = vmatprep.subr.bf16.mxu0 0
        %3821 = vmatpush1.bf16.msra.mxu0 0
        %3822 = vmatprep.mubr.bf16.mxu0 0
        %3823 = vmatmul.mubr.bf16.gmra.mrb[0].mxu0 %v3784
        %v3824 = vpop.f32.mrb[0].mxu0
        %v3825 = vadd.f32 0.0, %v3824
        %v3826 = vpop.f32.mrb[0].mxu0
        %v3827 = vadd.f32 0.0, %v3826
        %v3828 = vpop.f32.mrb[0].mxu0
        %v3829 = vadd.f32 0.0, %v3828
        %v3830 = vpop.f32.mrb[0].mxu0
        %v3831 = vadd.f32 0.0, %v3830
        %3832 = vmatprep.mubr.bf16.mxu0 0
        %3833 = vmatmul.mubr.bf16.gmra.mrb[0].mxu0 %v3785
        %v3834 = vpop.f32.mrb[0].mxu0
        %v3835 = vadd.f32 0.0, %v3834
        %v3836 = vpop.f32.mrb[0].mxu0
        %v3837 = vadd.f32 0.0, %v3836
        %v3838 = vpop.f32.mrb[0].mxu0
        %v3839 = vadd.f32 0.0, %v3838
        %v3840 = vpop.f32.mrb[0].mxu0
        %v3841 = vadd.f32 0.0, %v3840
        %3842 = vmatprep.mubr.bf16.mxu0 0
        %3843 = vmatmul.mubr.bf16.gmra.mrb[0].mxu0 %v3786
        %v3844 = vpop.f32.mrb[0].mxu0
        %v3845 = vadd.f32 0.0, %v3844
        %v3846 = vpop.f32.mrb[0].mxu0
        %v3847 = vadd.f32 0.0, %v3846
        %v3848 = vpop.f32.mrb[0].mxu0
        %v3849 = vpop.f32.mrb[0].mxu0
        %3850 = vdwg.mxu0
        %s3851 = scalar_lea.vmem [#allocation5], 20
        %v3852 = vld [vmem:[%s3851] sm:$0xf]
        %v3853 = vld [vmem:[%s3851 + $0x4] sm:$0xf]
        %v3854 = vld [vmem:[%s3851 + $0x8] sm:$0xf]
        %v3855 = vld [vmem:[%s3851 + $0xc] sm:$0xf]
        %v3856 = vld [vmem:[%s3851 + $0x10] sm:$0xf]
        %v3862 = vunpack.c.l.b16 %v3852
        %v3863 = vunpack.c.l.b16 %v3853
        %v3864 = vunpack.c.l.b16 %v3854
        %v3865 = vunpack.c.l.b16 %v3855
        %v3866 = vunpack.c.l.b16 %v3856
        %v3867 = vpack.c.b16 %v3863, %v3862
        %v3868 = vpack.c.b16 %v3865, %v3864
        %v3869 = vpack.c.b16 %v3866, %v3866
        %3873 = vmatprep.subr.bf16.mxu0 %v3754
        %3874 = vmatpush1.bf16.msra.mxu0 %v3753
        %3875 = vmatprep.subr.bf16.mxu0 %v3756
        %3876 = vmatpush1.bf16.msra.mxu0 %v3755
        %3877 = vmatprep.subr.bf16.mxu0 %v3758
        %3878 = vmatpush1.bf16.msra.mxu0 %v3757
        %3879 = vmatprep.subr.bf16.mxu0 %v3760
        %3880 = vmatpush1.bf16.msra.mxu0 %v3759
        %3881 = vmatprep.subr.bf16.mxu0 %v3762
        %3882 = vmatpush1.bf16.msra.mxu0 %v3761
        %3883 = vmatprep.subr.bf16.mxu0 %v3764
        %3884 = vmatpush1.bf16.msra.mxu0 %v3763
        %3885 = vmatprep.subr.bf16.mxu0 %v3766
        %3886 = vmatpush1.bf16.msra.mxu0 %v3765
        %3887 = vmatprep.subr.bf16.mxu0 %v3768
        %3888 = vmatpush1.bf16.msra.mxu0 %v3767
        %3889 = vmatprep.subr.bf16.mxu0 0
        %3890 = vmatpush1.bf16.msra.mxu0 0
        %3891 = vmatprep.subr.bf16.mxu0 0
        %3892 = vmatpush1.bf16.msra.mxu0 0
        %3893 = vmatprep.subr.bf16.mxu0 0
        %3894 = vmatpush1.bf16.msra.mxu0 0
        %3895 = vmatprep.subr.bf16.mxu0 0
        %3896 = vmatpush1.bf16.msra.mxu0 0
        %3897 = vmatprep.subr.bf16.mxu0 0
        %3898 = vmatpush1.bf16.msra.mxu0 0
        %3899 = vmatprep.subr.bf16.mxu0 0
        %3900 = vmatpush1.bf16.msra.mxu0 0
        %3901 = vmatprep.subr.bf16.mxu0 0
        %3902 = vmatpush1.bf16.msra.mxu0 0
        %3903 = vmatprep.subr.bf16.mxu0 0
        %3904 = vmatpush1.bf16.msra.mxu0 0
        %3905 = vmatprep.mubr.bf16.mxu0 0
        %3906 = vmatmul.mubr.bf16.gmra.mrb[0].mxu0 %v3867
        %v3907 = vpop.f32.mrb[0].mxu0
        %v3908 = vadd.f32 0.0, %v3907
        %v3909 = vpop.f32.mrb[0].mxu0
        %v3910 = vadd.f32 0.0, %v3909
        %v3911 = vpop.f32.mrb[0].mxu0
        %v3912 = vadd.f32 0.0, %v3911
        %v3913 = vpop.f32.mrb[0].mxu0
        %v3914 = vadd.f32 0.0, %v3913
        %3915 = vmatprep.mubr.bf16.mxu0 0
        %3916 = vmatmul.mubr.bf16.gmra.mrb[0].mxu0 %v3868
        %v3917 = vpop.f32.mrb[0].mxu0
        %v3918 = vadd.f32 0.0, %v3917
        %v3919 = vpop.f32.mrb[0].mxu0
        %v3920 = vadd.f32 0.0, %v3919
        %v3921 = vpop.f32.mrb[0].mxu0
        %v3922 = vadd.f32 0.0, %v3921
        %v3923 = vpop.f32.mrb[0].mxu0
        %v3924 = vadd.f32 0.0, %v3923
        %3925 = vmatprep.mubr.bf16.mxu0 0
        %3926 = vmatmul.mubr.bf16.gmra.mrb[0].mxu0 %v3869
        %v3927 = vpop.f32.mrb[0].mxu0
        %v3928 = vadd.f32 0.0, %v3927
        %v3929 = vpop.f32.mrb[0].mxu0
        %v3930 = vadd.f32 0.0, %v3929
        %v3931 = vpop.f32.mrb[0].mxu0
        %v3932 = vpop.f32.mrb[0].mxu0
        %3933 = vdwg.mxu0
        %v3934 = vmax.f32 %v3825, %v3908
        %v3935 = vmax.f32 %v3827, %v3910
        %v3936 = vmax.f32 %v3829, %v3912
        %v3937 = vmax.f32 %v3831, %v3914
        %v3938 = vmax.f32 %v3835, %v3918
        %v3939 = vmax.f32 %v3837, %v3920
        %v3940 = vmax.f32 %v3839, %v3922
        %v3941 = vmax.f32 %v3841, %v3924
        %v3942 = vmax.f32 %v3845, %v3928
        %v3943 = vmax.f32 %v3847, %v3930
        %v3944 = vpack.c.bf16 %v3936, %v3934
        %v3945 = vpack.c.bf16 %v3937, %v3935
        %v3946 = vpack.c.bf16 %v3940, %v3938
        %v3947 = vpack.c.bf16 %v3941, %v3939
        %v3948 = vpack.c.bf16 %v3942, %v3942
        %v3949 = vpack.c.bf16 %v3943, %v3943
        %v3950 = vld [vmem:[#allocation7] sm:$0xf]
        %v3951 = vld [vmem:[#allocation7 + $0x4] sm:$0xf]
        %v3952 = vld [vmem:[#allocation7 + $0x8] sm:$0xf]
        %v3953 = vld [vmem:[#allocation7 + $0xc] sm:$0xf]
        %v3954 = vld [vmem:[#allocation7 + $0x10] sm:$0xf]
        %v3955 = vld [vmem:[#allocation7 + $0x14] sm:$0xf]
        %v3956 = vld [vmem:[#allocation7 + $0x18] sm:$0xf]
        %v3957 = vld [vmem:[#allocation7 + $0x1c] sm:$0xf]
        %v3958 = vld [vmem:[#allocation7 + $0x20] sm:$0xf]
        %v3959 = vld [vmem:[#allocation7 + $0x24] sm:$0xf]
        %v3960 = vld [vmem:[#allocation7 + $0x28] sm:$0xf]
        %v3961 = vld [vmem:[#allocation7 + $0x2c] sm:$0xf]
        %v3962 = vld [vmem:[#allocation7 + $0x30] sm:$0xf]
        %v3963 = vld [vmem:[#allocation7 + $0x34] sm:$0xf]
        %v3964 = vld [vmem:[#allocation7 + $0x38] sm:$0xf]
        %v3965 = vld [vmem:[#allocation7 + $0x3c] sm:$0xf]
        %v3966 = vld [vmem:[#allocation7 + $0x40] sm:$0xf]
        %v3967 = vld [vmem:[#allocation7 + $0x44] sm:$0xf]
        %v3968 = vld [vmem:[#allocation7 + $0x48] sm:$0xf]
        %v3969 = vld [vmem:[#allocation7 + $0x4c] sm:$0xf]
        %v3990 = vunpack.c.l.b16 %v3950
        %v3991 = vunpack.c.l.b16 %v3951
        %v3992 = vunpack.c.l.b16 %v3952
        %v3993 = vunpack.c.l.b16 %v3953
        %v3994 = vunpack.c.l.b16 %v3954
        %v3995 = vunpack.c.l.b16 %v3955
        %v3996 = vunpack.c.l.b16 %v3956
        %v3997 = vunpack.c.l.b16 %v3957
        %v3998 = vunpack.c.l.b16 %v3958
        %v3999 = vunpack.c.l.b16 %v3959
        %v4000 = vunpack.c.l.b16 %v3960
        %v4001 = vunpack.c.l.b16 %v3961
        %v4002 = vunpack.c.l.b16 %v3962
        %v4003 = vunpack.c.l.b16 %v3963
        %v4004 = vunpack.c.l.b16 %v3964
        %v4005 = vunpack.c.l.b16 %v3965
        %v4006 = vunpack.c.l.b16 %v3966
        %v4007 = vunpack.c.l.b16 %v3967
        %v4008 = vunpack.c.l.b16 %v3968
        %v4009 = vunpack.c.l.b16 %v3969
        %v4010 = vpack.c.b16 %v3991, %v3990
        %v4011 = vpack.c.b16 %v3993, %v3992
        %v4012 = vpack.c.b16 %v3995, %v3994
        %v4013 = vpack.c.b16 %v3997, %v3996
        %v4014 = vpack.c.b16 %v3999, %v3998
        %v4015 = vpack.c.b16 %v4001, %v4000
        %v4016 = vpack.c.b16 %v4003, %v4002
        %v4017 = vpack.c.b16 %v4005, %v4004
        %v4018 = vpack.c.b16 %v4007, %v4006
        %v4019 = vpack.c.b16 %v4009, %v4008
        %v4031 = vsel %vm1209, %v3945, 0
        %v4034 = vsel %vm1209, %v3947, 0
        %v4037 = vsel %vm1209, %v3949, 0
        %4039 = vmatprep.subr.bf16.mxu0 0
        %4040 = vmatpush1.bf16.msra.mxu0 %v4010
        %4041 = vmatprep.subr.bf16.mxu0 0
        %4042 = vmatpush1.bf16.msra.mxu0 %v4011
        %4043 = vmatprep.subr.bf16.mxu0 0
        %4044 = vmatpush1.bf16.msra.mxu0 %v4012
        %4045 = vmatprep.subr.bf16.mxu0 0
        %4046 = vmatpush1.bf16.msra.mxu0 %v4013
        %4047 = vmatprep.subr.bf16.mxu0 0
        %4048 = vmatpush1.bf16.msra.mxu0 %v4014
        %4049 = vmatprep.subr.bf16.mxu0 0
        %4050 = vmatpush1.bf16.msra.mxu0 %v4015
        %4051 = vmatprep.subr.bf16.mxu0 0
        %4052 = vmatpush1.bf16.msra.mxu0 %v4016
        %4053 = vmatprep.subr.bf16.mxu0 0
        %4054 = vmatpush1.bf16.msra.mxu0 %v4017
        %4055 = vmatprep.subr.bf16.mxu0 0
        %4056 = vmatpush1.bf16.msra.mxu0 %v4018
        %4057 = vmatprep.subr.bf16.mxu0 0
        %4058 = vmatpush1.bf16.msra.mxu0 %v4019
        %4059 = vmatprep.subr.bf16.mxu0 0
        %4060 = vmatpush1.bf16.msra.mxu0 0
        %4061 = vmatprep.subr.bf16.mxu0 0
        %4062 = vmatpush1.bf16.msra.mxu0 0
        %4063 = vmatprep.subr.bf16.mxu0 0
        %4064 = vmatpush1.bf16.msra.mxu0 0
        %4065 = vmatprep.subr.bf16.mxu0 0
        %4066 = vmatpush1.bf16.msra.mxu0 0
        %4067 = vmatprep.subr.bf16.mxu0 0
        %4068 = vmatpush1.bf16.msra.mxu0 0
        %4069 = vmatprep.subr.bf16.mxu0 0
        %4070 = vmatpush1.bf16.msra.mxu0 0
        %4071 = vmatprep.mubr.bf16.mxu0 %v4031
        %4072 = vmatmul.mubr.bf16.gmra.mrb[0].mxu0 %v3944
        %v4073 = vpop.f32.mrb[0].mxu0
        %v4074 = vadd.f32 0.0, %v4073
        %v4075 = vpop.f32.mrb[0].mxu0
        %v4076 = vpop.f32.mrb[0].mxu0
        %v4077 = vadd.f32 0.0, %v4076
        %v4078 = vpop.f32.mrb[0].mxu0
        %4079 = vmatprep.mubr.bf16.mxu0 %v4034
        %4080 = vmatmul.mubr.bf16.gmra.mrb[0].mxu0 %v3946
        %v4081 = vpop.f32.mrb[0].mxu0
        %v4082 = vadd.f32 0.0, %v4081
        %v4083 = vpop.f32.mrb[0].mxu0
        %v4084 = vpop.f32.mrb[0].mxu0
        %v4085 = vadd.f32 0.0, %v4084
        %v4086 = vpop.f32.mrb[0].mxu0
        %4087 = vmatprep.mubr.bf16.mxu0 %v4037
        %4088 = vmatmul.mubr.bf16.gmra.mrb[0].mxu0 %v3948
        %v4089 = vpop.f32.mrb[0].mxu0
        %v4090 = vadd.f32 0.0, %v4089
        %v4091 = vpop.f32.mrb[0].mxu0
        %v4092 = vpop.f32.mrb[0].mxu0
        %v4093 = vpop.f32.mrb[0].mxu0
        %4094 = vdwg.mxu0
        %s4095 = scalar_lea.vmem [#allocation7], 80
        %v4096 = vld [vmem:[%s4095] sm:$0xf]
        %v4097 = vld [vmem:[%s4095 + $0x4] sm:$0xf]
        %v4098 = vld [vmem:[%s4095 + $0x8] sm:$0xf]
        %v4099 = vld [vmem:[%s4095 + $0xc] sm:$0xf]
        %v4100 = vld [vmem:[%s4095 + $0x10] sm:$0xf]
        %v4101 = vld [vmem:[%s4095 + $0x14] sm:$0xf]
        %v4102 = vld [vmem:[%s4095 + $0x18] sm:$0xf]
        %v4103 = vld [vmem:[%s4095 + $0x1c] sm:$0xf]
        %v4104 = vld [vmem:[%s4095 + $0x20] sm:$0xf]
        %v4105 = vld [vmem:[%s4095 + $0x24] sm:$0xf]
        %v4106 = vld [vmem:[%s4095 + $0x28] sm:$0xf]
        %v4107 = vld [vmem:[%s4095 + $0x2c] sm:$0xf]
        %v4108 = vld [vmem:[%s4095 + $0x30] sm:$0xf]
        %v4109 = vld [vmem:[%s4095 + $0x34] sm:$0xf]
        %v4110 = vld [vmem:[%s4095 + $0x38] sm:$0xf]
        %v4111 = vld [vmem:[%s4095 + $0x3c] sm:$0xf]
        %v4112 = vld [vmem:[%s4095 + $0x40] sm:$0xf]
        %v4113 = vld [vmem:[%s4095 + $0x44] sm:$0xf]
        %v4114 = vld [vmem:[%s4095 + $0x48] sm:$0xf]
        %v4115 = vld [vmem:[%s4095 + $0x4c] sm:$0xf]
        %v4136 = vunpack.c.l.b16 %v4096
        %v4137 = vunpack.c.l.b16 %v4097
        %v4138 = vunpack.c.l.b16 %v4098
        %v4139 = vunpack.c.l.b16 %v4099
        %v4140 = vunpack.c.l.b16 %v4100
        %v4141 = vunpack.c.l.b16 %v4101
        %v4142 = vunpack.c.l.b16 %v4102
        %v4143 = vunpack.c.l.b16 %v4103
        %v4144 = vunpack.c.l.b16 %v4104
        %v4145 = vunpack.c.l.b16 %v4105
        %v4146 = vunpack.c.l.b16 %v4106
        %v4147 = vunpack.c.l.b16 %v4107
        %v4148 = vunpack.c.l.b16 %v4108
        %v4149 = vunpack.c.l.b16 %v4109
        %v4150 = vunpack.c.l.b16 %v4110
        %v4151 = vunpack.c.l.b16 %v4111
        %v4152 = vunpack.c.l.b16 %v4112
        %v4153 = vunpack.c.l.b16 %v4113
        %v4154 = vunpack.c.l.b16 %v4114
        %v4155 = vunpack.c.l.b16 %v4115
        %v4156 = vpack.c.b16 %v4137, %v4136
        %v4157 = vpack.c.b16 %v4139, %v4138
        %v4158 = vpack.c.b16 %v4141, %v4140
        %v4159 = vpack.c.b16 %v4143, %v4142
        %v4160 = vpack.c.b16 %v4145, %v4144
        %v4161 = vpack.c.b16 %v4147, %v4146
        %v4162 = vpack.c.b16 %v4149, %v4148
        %v4163 = vpack.c.b16 %v4151, %v4150
        %v4164 = vpack.c.b16 %v4153, %v4152
        %v4165 = vpack.c.b16 %v4155, %v4154
        %4176 = vmatprep.subr.bf16.mxu0 0
        %4177 = vmatpush1.bf16.msra.mxu0 %v4156
        %4178 = vmatprep.subr.bf16.mxu0 0
        %4179 = vmatpush1.bf16.msra.mxu0 %v4157
        %4180 = vmatprep.subr.bf16.mxu0 0
        %4181 = vmatpush1.bf16.msra.mxu0 %v4158
        %4182 = vmatprep.subr.bf16.mxu0 0
        %4183 = vmatpush1.bf16.msra.mxu0 %v4159
        %4184 = vmatprep.subr.bf16.mxu0 0
        %4185 = vmatpush1.bf16.msra.mxu0 %v4160
        %4186 = vmatprep.subr.bf16.mxu0 0
        %4187 = vmatpush1.bf16.msra.mxu0 %v4161
        %4188 = vmatprep.subr.bf16.mxu0 0
        %4189 = vmatpush1.bf16.msra.mxu0 %v4162
        %4190 = vmatprep.subr.bf16.mxu0 0
        %4191 = vmatpush1.bf16.msra.mxu0 %v4163
        %4192 = vmatprep.subr.bf16.mxu0 0
        %4193 = vmatpush1.bf16.msra.mxu0 %v4164
        %4194 = vmatprep.subr.bf16.mxu0 0
        %4195 = vmatpush1.bf16.msra.mxu0 %v4165
        %4196 = vmatprep.subr.bf16.mxu0 0
        %4197 = vmatpush1.bf16.msra.mxu0 0
        %4198 = vmatprep.subr.bf16.mxu0 0
        %4199 = vmatpush1.bf16.msra.mxu0 0
        %4200 = vmatprep.subr.bf16.mxu0 0
        %4201 = vmatpush1.bf16.msra.mxu0 0
        %4202 = vmatprep.subr.bf16.mxu0 0
        %4203 = vmatpush1.bf16.msra.mxu0 0
        %4204 = vmatprep.subr.bf16.mxu0 0
        %4205 = vmatpush1.bf16.msra.mxu0 0
        %4206 = vmatprep.subr.bf16.mxu0 0
        %4207 = vmatpush1.bf16.msra.mxu0 0
        %4208 = vmatprep.mubr.bf16.mxu0 %v4031
        %4209 = vmatmul.mubr.bf16.gmra.mrb[0].mxu0 %v3944
        %v4210 = vpop.f32.mrb[0].mxu0
        %v4211 = vadd.f32 0.0, %v4210
        %v4212 = vpop.f32.mrb[0].mxu0
        %v4213 = vpop.f32.mrb[0].mxu0
        %v4214 = vadd.f32 0.0, %v4213
        %v4215 = vpop.f32.mrb[0].mxu0
        %4216 = vmatprep.mubr.bf16.mxu0 %v4034
        %4217 = vmatmul.mubr.bf16.gmra.mrb[0].mxu0 %v3946
        %v4218 = vpop.f32.mrb[0].mxu0
        %v4219 = vadd.f32 0.0, %v4218
        %v4220 = vpop.f32.mrb[0].mxu0
        %v4221 = vpop.f32.mrb[0].mxu0
        %v4222 = vadd.f32 0.0, %v4221
        %v4223 = vpop.f32.mrb[0].mxu0
        %4224 = vmatprep.mubr.bf16.mxu0 %v4037
        %4225 = vmatmul.mubr.bf16.gmra.mrb[0].mxu0 %v3948
        %v4226 = vpop.f32.mrb[0].mxu0
        %v4227 = vadd.f32 0.0, %v4226
        %v4228 = vpop.f32.mrb[0].mxu0
        %v4229 = vpop.f32.mrb[0].mxu0
        %v4230 = vpop.f32.mrb[0].mxu0
        %4231 = vdwg.mxu0
        %v4232 = vmax.f32 %v4074, %v4211
        %v4233 = vmax.f32 %v4077, %v4214
        %v4234 = vmax.f32 %v4082, %v4219
        %v4235 = vmax.f32 %v4085, %v4222
        %v4236 = vmax.f32 %v4090, %v4227
        %v4237 = vpack.c.bf16 %v4233, %v4232
        %v4238 = vpack.c.bf16 %v4235, %v4234
        %v4239 = vpack.c.bf16 %v4236, %v4236
        %v4240 = vld [vmem:[#allocation8] sm:$0xf]
        %v4241 = vld [vmem:[#allocation8 + $0x4] sm:$0xf]
        %v4242 = vld [vmem:[#allocation8 + $0x8] sm:$0xf]
        %v4243 = vld [vmem:[#allocation8 + $0xc] sm:$0xf]
        %v4244 = vld [vmem:[#allocation8 + $0x10] sm:$0xf]
        %v4245 = vld [vmem:[#allocation8 + $0x14] sm:$0xf]
        %v4246 = vld [vmem:[#allocation8 + $0x18] sm:$0xf]
        %v4247 = vld [vmem:[#allocation8 + $0x1c] sm:$0xf]
        %v4248 = vld [vmem:[#allocation8 + $0x20] sm:$0xf]
        %v4249 = vld [vmem:[#allocation8 + $0x24] sm:$0xf]
        %s4250 = scalar_lea.vmem [#allocation8], 40
        %v4251 = vld [vmem:[%s4250] sm:$0xf]
        %v4252 = vld [vmem:[%s4250 + $0x4] sm:$0xf]
        %v4253 = vld [vmem:[%s4250 + $0x8] sm:$0xf]
        %v4254 = vld [vmem:[%s4250 + $0xc] sm:$0xf]
        %v4255 = vld [vmem:[%s4250 + $0x10] sm:$0xf]
        %v4256 = vld [vmem:[%s4250 + $0x14] sm:$0xf]
        %v4257 = vld [vmem:[%s4250 + $0x18] sm:$0xf]
        %v4258 = vld [vmem:[%s4250 + $0x1c] sm:$0xf]
        %v4259 = vld [vmem:[%s4250 + $0x20] sm:$0xf]
        %v4260 = vld [vmem:[%s4250 + $0x24] sm:$0xf]
        %v4262 = vrot.slane %v4237, 4
        %v4273 = vunpack.c.l.b16 %v4251
        %v4274 = vunpack.c.l.b16 %v4252
        %v4275 = vunpack.c.l.b16 %v4253
        %v4276 = vunpack.c.l.b16 %v4254
        %v4277 = vunpack.c.l.b16 %v4255
        %v4278 = vunpack.c.l.b16 %v4256
        %v4279 = vunpack.c.l.b16 %v4257
        %v4280 = vunpack.c.l.b16 %v4258
        %v4281 = vunpack.c.l.b16 %v4259
        %v4282 = vunpack.c.l.b16 %v4260
        %v4283 = vpack.c.b16 %v4274, %v4273
        %v4284 = vpack.c.b16 %v4276, %v4275
        %v4285 = vpack.c.b16 %v4278, %v4277
        %v4286 = vpack.c.b16 %v4280, %v4279
        %v4287 = vpack.c.b16 %v4282, %v4281
        %v4294 = vsel %vm3084, %v4262, 0
        %4296 = vmatprep.subr.bf16.mxu0 0
        %4297 = vmatpush1.bf16.msra.mxu0 %v4283
        %4298 = vmatprep.subr.bf16.mxu0 0
        %4299 = vmatpush1.bf16.msra.mxu0 %v4284
        %4300 = vmatprep.subr.bf16.mxu0 0
        %4301 = vmatpush1.bf16.msra.mxu0 %v4285
        %4302 = vmatprep.subr.bf16.mxu0 0
        %4303 = vmatpush1.bf16.msra.mxu0 %v4286
        %4304 = vmatprep.subr.bf16.mxu0 0
        %4305 = vmatpush1.bf16.msra.mxu0 %v4287
        %4306 = vmatprep.subr.bf16.mxu0 0
        %4307 = vmatpush1.bf16.msra.mxu0 0
        %4308 = vmatprep.subr.bf16.mxu0 0
        %4309 = vmatpush1.bf16.msra.mxu0 0
        %4310 = vmatprep.subr.bf16.mxu0 0
        %4311 = vmatpush1.bf16.msra.mxu0 0
        %4312 = vmatprep.subr.bf16.mxu0 0
        %4313 = vmatpush1.bf16.msra.mxu0 0
        %4314 = vmatprep.subr.bf16.mxu0 0
        %4315 = vmatpush1.bf16.msra.mxu0 0
        %4316 = vmatprep.subr.bf16.mxu0 0
        %4317 = vmatpush1.bf16.msra.mxu0 0
        %4318 = vmatprep.subr.bf16.mxu0 0
        %4319 = vmatpush1.bf16.msra.mxu0 0
        %4320 = vmatprep.subr.bf16.mxu0 0
        %4321 = vmatpush1.bf16.msra.mxu0 0
        %4322 = vmatprep.subr.bf16.mxu0 0
        %4323 = vmatpush1.bf16.msra.mxu0 0
        %4324 = vmatprep.subr.bf16.mxu0 0
        %4325 = vmatpush1.bf16.msra.mxu0 0
        %4326 = vmatprep.subr.bf16.mxu0 0
        %4327 = vmatpush1.bf16.msra.mxu0 0
        %4328 = vmatprep.mubr.bf16.mxu0 0
        %4329 = vmatmul.mubr.bf16.gmra.mrb[0].mxu0 %v4294
        %v4330 = vpop.f32.mrb[0].mxu0
        %v4331 = vadd.f32 0.0, %v4330
        %v4332 = vpop.f32.mrb[0].mxu0
        %v4333 = vpop.f32.mrb[0].mxu0
        %v4334 = vpop.f32.mrb[0].mxu0
        %4335 = vdwg.mxu0
        %v4346 = vunpack.c.l.b16 %v4240
        %v4347 = vunpack.c.l.b16 %v4241
        %v4348 = vunpack.c.l.b16 %v4242
        %v4349 = vunpack.c.l.b16 %v4243
        %v4350 = vunpack.c.l.b16 %v4244
        %v4351 = vunpack.c.l.b16 %v4245
        %v4352 = vunpack.c.l.b16 %v4246
        %v4353 = vunpack.c.l.b16 %v4247
        %v4354 = vunpack.c.l.b16 %v4248
        %v4355 = vunpack.c.l.b16 %v4249
        %v4356 = vpack.c.b16 %v4347, %v4346
        %v4357 = vpack.c.b16 %v4349, %v4348
        %v4358 = vpack.c.b16 %v4351, %v4350
        %v4359 = vpack.c.b16 %v4353, %v4352
        %v4360 = vpack.c.b16 %v4355, %v4354
        %v4367 = vsel %vm3084, %v4237, 0
        %4369 = vmatprep.subr.bf16.mxu0 0
        %4370 = vmatpush1.bf16.msra.mxu0 %v4356
        %4371 = vmatprep.subr.bf16.mxu0 0
        %4372 = vmatpush1.bf16.msra.mxu0 %v4357
        %4373 = vmatprep.subr.bf16.mxu0 0
        %4374 = vmatpush1.bf16.msra.mxu0 %v4358
        %4375 = vmatprep.subr.bf16.mxu0 0
        %4376 = vmatpush1.bf16.msra.mxu0 %v4359
        %4377 = vmatprep.subr.bf16.mxu0 0
        %4378 = vmatpush1.bf16.msra.mxu0 %v4360
        %4379 = vmatprep.subr.bf16.mxu0 0
        %4380 = vmatpush1.bf16.msra.mxu0 0
        %4381 = vmatprep.subr.bf16.mxu0 0
        %4382 = vmatpush1.bf16.msra.mxu0 0
        %4383 = vmatprep.subr.bf16.mxu0 0
        %4384 = vmatpush1.bf16.msra.mxu0 0
        %4385 = vmatprep.subr.bf16.mxu0 0
        %4386 = vmatpush1.bf16.msra.mxu0 0
        %4387 = vmatprep.subr.bf16.mxu0 0
        %4388 = vmatpush1.bf16.msra.mxu0 0
        %4389 = vmatprep.subr.bf16.mxu0 0
        %4390 = vmatpush1.bf16.msra.mxu0 0
        %4391 = vmatprep.subr.bf16.mxu0 0
        %4392 = vmatpush1.bf16.msra.mxu0 0
        %4393 = vmatprep.subr.bf16.mxu0 0
        %4394 = vmatpush1.bf16.msra.mxu0 0
        %4395 = vmatprep.subr.bf16.mxu0 0
        %4396 = vmatpush1.bf16.msra.mxu0 0
        %4397 = vmatprep.subr.bf16.mxu0 0
        %4398 = vmatpush1.bf16.msra.mxu0 0
        %4399 = vmatprep.subr.bf16.mxu0 0
        %4400 = vmatpush1.bf16.msra.mxu0 0
        %4401 = vmatprep.mubr.bf16.mxu0 0
        %4402 = vmatmul.mubr.bf16.gmra.mrb[0].mxu0 %v4367
        %v4403 = vpop.f32.mrb[0].mxu0
        %v4404 = vadd.f32 %v4331, %v4403
        %v4405 = vpop.f32.mrb[0].mxu0
        %v4406 = vpop.f32.mrb[0].mxu0
        %v4407 = vpop.f32.mrb[0].mxu0
        %4408 = vdwg.mxu0
        %s4409 = scalar_lea.vmem [#allocation8], 80
        %v4410 = vld [vmem:[%s4409] sm:$0xf]
        %v4411 = vld [vmem:[%s4409 + $0x4] sm:$0xf]
        %v4412 = vld [vmem:[%s4409 + $0x8] sm:$0xf]
        %v4413 = vld [vmem:[%s4409 + $0xc] sm:$0xf]
        %v4414 = vld [vmem:[%s4409 + $0x10] sm:$0xf]
        %v4415 = vld [vmem:[%s4409 + $0x14] sm:$0xf]
        %v4416 = vld [vmem:[%s4409 + $0x18] sm:$0xf]
        %v4417 = vld [vmem:[%s4409 + $0x1c] sm:$0xf]
        %v4418 = vld [vmem:[%s4409 + $0x20] sm:$0xf]
        %v4419 = vld [vmem:[%s4409 + $0x24] sm:$0xf]
        %v4430 = vunpack.c.l.b16 %v4410
        %v4431 = vunpack.c.l.b16 %v4411
        %v4432 = vunpack.c.l.b16 %v4412
        %v4433 = vunpack.c.l.b16 %v4413
        %v4434 = vunpack.c.l.b16 %v4414
        %v4435 = vunpack.c.l.b16 %v4415
        %v4436 = vunpack.c.l.b16 %v4416
        %v4437 = vunpack.c.l.b16 %v4417
        %v4438 = vunpack.c.l.b16 %v4418
        %v4439 = vunpack.c.l.b16 %v4419
        %v4440 = vpack.c.b16 %v4431, %v4430
        %v4441 = vpack.c.b16 %v4433, %v4432
        %v4442 = vpack.c.b16 %v4435, %v4434
        %v4443 = vpack.c.b16 %v4437, %v4436
        %v4444 = vpack.c.b16 %v4439, %v4438
        %v4451 = vsel %vm3084, %v4238, 0
        %4453 = vmatprep.subr.bf16.mxu0 0
        %4454 = vmatpush1.bf16.msra.mxu0 %v4440
        %4455 = vmatprep.subr.bf16.mxu0 0
        %4456 = vmatpush1.bf16.msra.mxu0 %v4441
        %4457 = vmatprep.subr.bf16.mxu0 0
        %4458 = vmatpush1.bf16.msra.mxu0 %v4442
        %4459 = vmatprep.subr.bf16.mxu0 0
        %4460 = vmatpush1.bf16.msra.mxu0 %v4443
        %4461 = vmatprep.subr.bf16.mxu0 0
        %4462 = vmatpush1.bf16.msra.mxu0 %v4444
        %4463 = vmatprep.subr.bf16.mxu0 0
        %4464 = vmatpush1.bf16.msra.mxu0 0
        %4465 = vmatprep.subr.bf16.mxu0 0
        %4466 = vmatpush1.bf16.msra.mxu0 0
        %4467 = vmatprep.subr.bf16.mxu0 0
        %4468 = vmatpush1.bf16.msra.mxu0 0
        %4469 = vmatprep.subr.bf16.mxu0 0
        %4470 = vmatpush1.bf16.msra.mxu0 0
        %4471 = vmatprep.subr.bf16.mxu0 0
        %4472 = vmatpush1.bf16.msra.mxu0 0
        %4473 = vmatprep.subr.bf16.mxu0 0
        %4474 = vmatpush1.bf16.msra.mxu0 0
        %4475 = vmatprep.subr.bf16.mxu0 0
        %4476 = vmatpush1.bf16.msra.mxu0 0
        %4477 = vmatprep.subr.bf16.mxu0 0
        %4478 = vmatpush1.bf16.msra.mxu0 0
        %4479 = vmatprep.subr.bf16.mxu0 0
        %4480 = vmatpush1.bf16.msra.mxu0 0
        %4481 = vmatprep.subr.bf16.mxu0 0
        %4482 = vmatpush1.bf16.msra.mxu0 0
        %4483 = vmatprep.subr.bf16.mxu0 0
        %4484 = vmatpush1.bf16.msra.mxu0 0
        %4485 = vmatprep.mubr.bf16.mxu0 0
        %4486 = vmatmul.mubr.bf16.gmra.mrb[0].mxu0 %v4451
        %v4487 = vpop.f32.mrb[0].mxu0
        %v4488 = vadd.f32 0.0, %v4487
        %v4489 = vpop.f32.mrb[0].mxu0
        %v4490 = vpop.f32.mrb[0].mxu0
        %v4491 = vpop.f32.mrb[0].mxu0
        %4492 = vdwg.mxu0
        %v4493 = vadd.f32 %v4404, %v4488
        %s4494 = scalar_lea.vmem [#allocation8], 120
        %v4495 = vld [vmem:[%s4494] sm:$0xf]
        %v4496 = vld [vmem:[%s4494 + $0x4] sm:$0xf]
        %v4497 = vld [vmem:[%s4494 + $0x8] sm:$0xf]
        %v4498 = vld [vmem:[%s4494 + $0xc] sm:$0xf]
        %v4499 = vld [vmem:[%s4494 + $0x10] sm:$0xf]
        %v4500 = vld [vmem:[%s4494 + $0x14] sm:$0xf]
        %v4501 = vld [vmem:[%s4494 + $0x18] sm:$0xf]
        %v4502 = vld [vmem:[%s4494 + $0x1c] sm:$0xf]
        %v4503 = vld [vmem:[%s4494 + $0x20] sm:$0xf]
        %v4504 = vld [vmem:[%s4494 + $0x24] sm:$0xf]
        %v4506 = vrot.slane %v4238, 4
        %v4517 = vunpack.c.l.b16 %v4495
        %v4518 = vunpack.c.l.b16 %v4496
        %v4519 = vunpack.c.l.b16 %v4497
        %v4520 = vunpack.c.l.b16 %v4498
        %v4521 = vunpack.c.l.b16 %v4499
        %v4522 = vunpack.c.l.b16 %v4500
        %v4523 = vunpack.c.l.b16 %v4501
        %v4524 = vunpack.c.l.b16 %v4502
        %v4525 = vunpack.c.l.b16 %v4503
        %v4526 = vunpack.c.l.b16 %v4504
        %v4527 = vpack.c.b16 %v4518, %v4517
        %v4528 = vpack.c.b16 %v4520, %v4519
        %v4529 = vpack.c.b16 %v4522, %v4521
        %v4530 = vpack.c.b16 %v4524, %v4523
        %v4531 = vpack.c.b16 %v4526, %v4525
        %v4538 = vsel %vm3084, %v4506, 0
        %4540 = vmatprep.subr.bf16.mxu0 0
        %4541 = vmatpush1.bf16.msra.mxu0 %v4527
        %4542 = vmatprep.subr.bf16.mxu0 0
        %4543 = vmatpush1.bf16.msra.mxu0 %v4528
        %4544 = vmatprep.subr.bf16.mxu0 0
        %4545 = vmatpush1.bf16.msra.mxu0 %v4529
        %4546 = vmatprep.subr.bf16.mxu0 0
        %4547 = vmatpush1.bf16.msra.mxu0 %v4530
        %4548 = vmatprep.subr.bf16.mxu0 0
        %4549 = vmatpush1.bf16.msra.mxu0 %v4531
        %4550 = vmatprep.subr.bf16.mxu0 0
        %4551 = vmatpush1.bf16.msra.mxu0 0
        %4552 = vmatprep.subr.bf16.mxu0 0
        %4553 = vmatpush1.bf16.msra.mxu0 0
        %4554 = vmatprep.subr.bf16.mxu0 0
        %4555 = vmatpush1.bf16.msra.mxu0 0
        %4556 = vmatprep.subr.bf16.mxu0 0
        %4557 = vmatpush1.bf16.msra.mxu0 0
        %4558 = vmatprep.subr.bf16.mxu0 0
        %4559 = vmatpush1.bf16.msra.mxu0 0
        %4560 = vmatprep.subr.bf16.mxu0 0
        %4561 = vmatpush1.bf16.msra.mxu0 0
        %4562 = vmatprep.subr.bf16.mxu0 0
        %4563 = vmatpush1.bf16.msra.mxu0 0
        %4564 = vmatprep.subr.bf16.mxu0 0
        %4565 = vmatpush1.bf16.msra.mxu0 0
        %4566 = vmatprep.subr.bf16.mxu0 0
        %4567 = vmatpush1.bf16.msra.mxu0 0
        %4568 = vmatprep.subr.bf16.mxu0 0
        %4569 = vmatpush1.bf16.msra.mxu0 0
        %4570 = vmatprep.subr.bf16.mxu0 0
        %4571 = vmatpush1.bf16.msra.mxu0 0
        %4572 = vmatprep.mubr.bf16.mxu0 0
        %4573 = vmatmul.mubr.bf16.gmra.mrb[0].mxu0 %v4538
        %v4574 = vpop.f32.mrb[0].mxu0
        %v4575 = vadd.f32 0.0, %v4574
        %v4576 = vpop.f32.mrb[0].mxu0
        %v4577 = vpop.f32.mrb[0].mxu0
        %v4578 = vpop.f32.mrb[0].mxu0
        %4579 = vdwg.mxu0
        %v4580 = vadd.f32 %v4493, %v4575
        %s4581 = scalar_lea.vmem [#allocation8], 160
        %v4582 = vld [vmem:[%s4581] sm:$0xf]
        %v4583 = vld [vmem:[%s4581 + $0x4] sm:$0xf]
        %v4584 = vld [vmem:[%s4581 + $0x8] sm:$0xf]
        %v4585 = vld [vmem:[%s4581 + $0xc] sm:$0xf]
        %v4586 = vld [vmem:[%s4581 + $0x10] sm:$0xf]
        %v4587 = vld [vmem:[%s4581 + $0x14] sm:$0xf]
        %v4588 = vld [vmem:[%s4581 + $0x18] sm:$0xf]
        %v4589 = vld [vmem:[%s4581 + $0x1c] sm:$0xf]
        %v4590 = vld [vmem:[%s4581 + $0x20] sm:$0xf]
        %v4591 = vld [vmem:[%s4581 + $0x24] sm:$0xf]
        %v4602 = vunpack.c.l.b16 %v4582
        %v4603 = vunpack.c.l.b16 %v4583
        %v4604 = vunpack.c.l.b16 %v4584
        %v4605 = vunpack.c.l.b16 %v4585
        %v4606 = vunpack.c.l.b16 %v4586
        %v4607 = vunpack.c.l.b16 %v4587
        %v4608 = vunpack.c.l.b16 %v4588
        %v4609 = vunpack.c.l.b16 %v4589
        %v4610 = vunpack.c.l.b16 %v4590
        %v4611 = vunpack.c.l.b16 %v4591
        %v4612 = vpack.c.b16 %v4603, %v4602
        %v4613 = vpack.c.b16 %v4605, %v4604
        %v4614 = vpack.c.b16 %v4607, %v4606
        %v4615 = vpack.c.b16 %v4609, %v4608
        %v4616 = vpack.c.b16 %v4611, %v4610
        %v4623 = vsel %vm3084, %v4239, 0
        %4625 = vmatprep.subr.bf16.mxu0 0
        %4626 = vmatpush1.bf16.msra.mxu0 %v4612
        %4627 = vmatprep.subr.bf16.mxu0 0
        %4628 = vmatpush1.bf16.msra.mxu0 %v4613
        %4629 = vmatprep.subr.bf16.mxu0 0
        %4630 = vmatpush1.bf16.msra.mxu0 %v4614
        %4631 = vmatprep.subr.bf16.mxu0 0
        %4632 = vmatpush1.bf16.msra.mxu0 %v4615
        %4633 = vmatprep.subr.bf16.mxu0 0
        %4634 = vmatpush1.bf16.msra.mxu0 %v4616
        %4635 = vmatprep.subr.bf16.mxu0 0
        %4636 = vmatpush1.bf16.msra.mxu0 0
        %4637 = vmatprep.subr.bf16.mxu0 0
        %4638 = vmatpush1.bf16.msra.mxu0 0
        %4639 = vmatprep.subr.bf16.mxu0 0
        %4640 = vmatpush1.bf16.msra.mxu0 0
        %4641 = vmatprep.subr.bf16.mxu0 0
        %4642 = vmatpush1.bf16.msra.mxu0 0
        %4643 = vmatprep.subr.bf16.mxu0 0
        %4644 = vmatpush1.bf16.msra.mxu0 0
        %4645 = vmatprep.subr.bf16.mxu0 0
        %4646 = vmatpush1.bf16.msra.mxu0 0
        %4647 = vmatprep.subr.bf16.mxu0 0
        %4648 = vmatpush1.bf16.msra.mxu0 0
        %4649 = vmatprep.subr.bf16.mxu0 0
        %4650 = vmatpush1.bf16.msra.mxu0 0
        %4651 = vmatprep.subr.bf16.mxu0 0
        %4652 = vmatpush1.bf16.msra.mxu0 0
        %4653 = vmatprep.subr.bf16.mxu0 0
        %4654 = vmatpush1.bf16.msra.mxu0 0
        %4655 = vmatprep.subr.bf16.mxu0 0
        %4656 = vmatpush1.bf16.msra.mxu0 0
        %4657 = vmatprep.mubr.bf16.mxu0 0
        %4658 = vmatmul.mubr.bf16.gmra.mrb[0].mxu0 %v4623
        %v4659 = vpop.f32.mrb[0].mxu0
        %v4660 = vadd.f32 0.0, %v4659
        %v4661 = vpop.f32.mrb[0].mxu0
        %v4662 = vpop.f32.mrb[0].mxu0
        %v4663 = vpop.f32.mrb[0].mxu0
        %4664 = vdwg.mxu0
        %v4665 = vadd.f32 %v4580, %v4660
        %v4666 = vld [vmem:[%s10] sm:$0x1]
        %v4668 = vlaneseq
        %v4669 = vshrl.u32 %v4668, 7
        %v4670 = vsub.s32 0, %v4669
        %v4671 = vrot.slane %v4666, %v4670
        %v4673 = vadd.f32 %v4665, %v4671
        %v4674 = vmax.f32 %v4673, 0.0
        %v4675 = vpack.c.bf16 %v4674, %v4674
        %v4676 = vld [vmem:[%s11] sm:$0xf]
        %v4677 = vld [vmem:[%s11 + $0x4] sm:$0xf]
        %v4678 = vld [vmem:[%s11 + $0x8] sm:$0xf]
        %v4679 = vld [vmem:[%s11 + $0xc] sm:$0xf]
        %v4680 = vld [vmem:[%s11 + $0x10] sm:$0xf]
        %v4681 = vld [vmem:[%s11 + $0x14] sm:$0xf]
        %v4682 = vld [vmem:[%s11 + $0x18] sm:$0xf]
        %v4683 = vld [vmem:[%s11 + $0x1c] sm:$0xf]
        %v4684 = vld [vmem:[%s11 + $0x20] sm:$0xf]
        %v4685 = vld [vmem:[%s11 + $0x24] sm:$0xf]
        %v4686 = vld [vmem:[%s11 + $0x28] sm:$0xf]
        %v4687 = vld [vmem:[%s11 + $0x2c] sm:$0xf]
        %v4688 = vld [vmem:[%s11 + $0x30] sm:$0xf]
        %v4689 = vld [vmem:[%s11 + $0x34] sm:$0xf]
        %v4690 = vld [vmem:[%s11 + $0x38] sm:$0xf]
        %v4691 = vld [vmem:[%s12] sm:$0x1]
        %v4693 = vlaneseq
        %v4694 = vshrl.u32 %v4693, 7
        %v4695 = vsub.s32 0, %v4694
        %v4696 = vrot.slane %v4691, %v4695
        %v4713 = vunpack.c.l.b16 %v4676
        %v4714 = vunpack.c.l.b16 %v4677
        %v4715 = vunpack.c.l.b16 %v4678
        %v4716 = vunpack.c.l.b16 %v4679
        %v4717 = vunpack.c.l.b16 %v4680
        %v4718 = vunpack.c.l.b16 %v4681
        %v4719 = vunpack.c.l.b16 %v4682
        %v4720 = vunpack.c.l.b16 %v4683
        %v4721 = vunpack.c.l.b16 %v4684
        %v4722 = vunpack.c.l.b16 %v4685
        %v4723 = vunpack.c.l.b16 %v4686
        %v4724 = vunpack.c.l.b16 %v4687
        %v4725 = vunpack.c.l.b16 %v4688
        %v4726 = vunpack.c.l.b16 %v4689
        %v4727 = vunpack.c.l.b16 %v4690
        %v4728 = vpack.c.b16 %v4714, %v4713
        %v4729 = vpack.c.b16 %v4716, %v4715
        %v4730 = vpack.c.b16 %v4718, %v4717
        %v4731 = vpack.c.b16 %v4720, %v4719
        %v4732 = vpack.c.b16 %v4722, %v4721
        %v4733 = vpack.c.b16 %v4724, %v4723
        %v4734 = vpack.c.b16 %v4726, %v4725
        %v4735 = vpack.c.b16 %v4727, %v4727
        %vm4743 = vcmask 982016
        %v4745 = vsel %vm4743, %v4675, 0
        %v4748 = vsel %vm820, %v4735, 0
        %4750 = vmatprep.subr.bf16.mxu0 0
        %4751 = vmatpush1.bf16.msra.mxu0 %v4728
        %4752 = vmatprep.subr.bf16.mxu0 0
        %4753 = vmatpush1.bf16.msra.mxu0 %v4729
        %4754 = vmatprep.subr.bf16.mxu0 0
        %4755 = vmatpush1.bf16.msra.mxu0 %v4730
        %4756 = vmatprep.subr.bf16.mxu0 0
        %4757 = vmatpush1.bf16.msra.mxu0 %v4731
        %4758 = vmatprep.subr.bf16.mxu0 0
        %4759 = vmatpush1.bf16.msra.mxu0 %v4732
        %4760 = vmatprep.subr.bf16.mxu0 0
        %4761 = vmatpush1.bf16.msra.mxu0 %v4733
        %4762 = vmatprep.subr.bf16.mxu0 0
        %4763 = vmatpush1.bf16.msra.mxu0 %v4734
        %4764 = vmatprep.subr.bf16.mxu0 0
        %4765 = vmatpush1.bf16.msra.mxu0 %v4748
        %4766 = vmatprep.subr.bf16.mxu0 0
        %4767 = vmatpush1.bf16.msra.mxu0 0
        %4768 = vmatprep.subr.bf16.mxu0 0
        %4769 = vmatpush1.bf16.msra.mxu0 0
        %4770 = vmatprep.subr.bf16.mxu0 0
        %4771 = vmatpush1.bf16.msra.mxu0 0
        %4772 = vmatprep.subr.bf16.mxu0 0
        %4773 = vmatpush1.bf16.msra.mxu0 0
        %4774 = vmatprep.subr.bf16.mxu0 0
        %4775 = vmatpush1.bf16.msra.mxu0 0
        %4776 = vmatprep.subr.bf16.mxu0 0
        %4777 = vmatpush1.bf16.msra.mxu0 0
        %4778 = vmatprep.subr.bf16.mxu0 0
        %4779 = vmatpush1.bf16.msra.mxu0 0
        %4780 = vmatprep.subr.bf16.mxu0 0
        %4781 = vmatpush1.bf16.msra.mxu0 0
        %4782 = vmatprep.mubr.bf16.mxu0 0
        %4783 = vmatmul.mubr.bf16.gmra.mrb[0].mxu0 %v4745
        %v4784 = vpop.f32.mrb[0].mxu0
        %v4785 = vadd.f32 %v4696, %v4784
        %v4786 = vpop.f32.mrb[0].mxu0
        %v4787 = vpop.f32.mrb[0].mxu0
        %v4788 = vpop.f32.mrb[0].mxu0
        %4789 = vdwg.mxu0
        %v4790 = vmax.f32 %v4785, 0.0
        %v4791 = vpack.c.bf16 %v4790, %v4790
        %v4792 = vld [vmem:[%s13] sm:$0xf]
        %v4793 = vld [vmem:[%s13 + $0x4] sm:$0xf]
        %v4794 = vld [vmem:[%s13 + $0x8] sm:$0xf]
        %v4795 = vld [vmem:[%s13 + $0xc] sm:$0xf]
        %v4796 = vld [vmem:[%s13 + $0x10] sm:$0xf]
        %v4797 = vld [vmem:[%s13 + $0x14] sm:$0xf]
        %v4798 = vld [vmem:[%s13 + $0x18] sm:$0xf]
        %v4799 = vld [vmem:[%s13 + $0x1c] sm:$0xf]
        %v4800 = vld [vmem:[%s13 + $0x20] sm:$0xf]
        %v4801 = vld [vmem:[%s13 + $0x24] sm:$0xf]
        %v4802 = vld [vmem:[%s13 + $0x28] sm:$0x3]
        %v4803 = vld [vmem:[%s14] sm:$0x1]
        %v4805 = vlaneseq
        %v4806 = vshrl.u32 %v4805, 7
        %v4807 = vsub.s32 0, %v4806
        %v4808 = vrot.slane %v4803, %v4807
        %v4821 = vunpack.c.l.b16 %v4792
        %v4822 = vunpack.c.l.b16 %v4793
        %v4823 = vunpack.c.l.b16 %v4794
        %v4824 = vunpack.c.l.b16 %v4795
        %v4825 = vunpack.c.l.b16 %v4796
        %v4826 = vunpack.c.l.b16 %v4797
        %v4827 = vunpack.c.l.b16 %v4798
        %v4828 = vunpack.c.l.b16 %v4799
        %v4829 = vunpack.c.l.b16 %v4800
        %v4830 = vunpack.c.l.b16 %v4801
        %v4831 = vunpack.c.l.b16 %v4802
        %v4832 = vpack.c.b16 %v4822, %v4821
        %v4833 = vpack.c.b16 %v4824, %v4823
        %v4834 = vpack.c.b16 %v4826, %v4825
        %v4835 = vpack.c.b16 %v4828, %v4827
        %v4836 = vpack.c.b16 %v4830, %v4829
        %v4837 = vpack.c.b16 %v4831, %v4831
        %v4844 = vsel %vm3034, %v4791, 0
        %v4847 = vsel %vm3488, %v4837, 0
        %4849 = vmatprep.subr.bf16.mxu0 0
        %4850 = vmatpush1.bf16.msra.mxu0 %v4832
        %4851 = vmatprep.subr.bf16.mxu0 0
        %4852 = vmatpush1.bf16.msra.mxu0 %v4833
        %4853 = vmatprep.subr.bf16.mxu0 0
        %4854 = vmatpush1.bf16.msra.mxu0 %v4834
        %4855 = vmatprep.subr.bf16.mxu0 0
        %4856 = vmatpush1.bf16.msra.mxu0 %v4835
        %4857 = vmatprep.subr.bf16.mxu0 0
        %4858 = vmatpush1.bf16.msra.mxu0 %v4836
        %4859 = vmatprep.subr.bf16.mxu0 0
        %4860 = vmatpush1.bf16.msra.mxu0 %v4847
        %4861 = vmatprep.subr.bf16.mxu0 0
        %4862 = vmatpush1.bf16.msra.mxu0 0
        %4863 = vmatprep.subr.bf16.mxu0 0
        %4864 = vmatpush1.bf16.msra.mxu0 0
        %4865 = vmatprep.subr.bf16.mxu0 0
        %4866 = vmatpush1.bf16.msra.mxu0 0
        %4867 = vmatprep.subr.bf16.mxu0 0
        %4868 = vmatpush1.bf16.msra.mxu0 0
        %4869 = vmatprep.subr.bf16.mxu0 0
        %4870 = vmatpush1.bf16.msra.mxu0 0
        %4871 = vmatprep.subr.bf16.mxu0 0
        %4872 = vmatpush1.bf16.msra.mxu0 0
        %4873 = vmatprep.subr.bf16.mxu0 0
        %4874 = vmatpush1.bf16.msra.mxu0 0
        %4875 = vmatprep.subr.bf16.mxu0 0
        %4876 = vmatpush1.bf16.msra.mxu0 0
        %4877 = vmatprep.subr.bf16.mxu0 0
        %4878 = vmatpush1.bf16.msra.mxu0 0
        %4879 = vmatprep.subr.bf16.mxu0 0
        %4880 = vmatpush1.bf16.msra.mxu0 0
        %4881 = vmatprep.mubr.bf16.mxu0 0
        %4882 = vmatmul.mubr.bf16.gmra.mrb[0].mxu0 %v4844
        %v4883 = vpop.f32.mrb[0].mxu0
        %v4884 = vadd.f32 %v4808, %v4883
        %v4885 = vpop.f32.mrb[0].mxu0
        %v4886 = vpop.f32.mrb[0].mxu0
        %v4887 = vpop.f32.mrb[0].mxu0
        %4888 = vdwg.mxu0
        %vm4889 = vcmask 80896
        %v4890 = vsel %vm4889, %v4884, -inf
        %4891 = vmax.xlane.f32.xlu0 %v4890
        %v4892 = vpop.xlane.xlu0 %4891
        %v4893 = vsub.f32 %v4884, %v4892
        %v4894 = vmul.f32 %v4893, 1.442695
        %v4895 = vpow.pop %v4894
        %v4896 = vsel %vm4889, %v4895, 0.0
        %4897 = vadd.xlane.f32.xlu0 %v4896
        %v4898 = vpop.xlane.xlu0 %4897
        %v4899 = vrcp.pop %v4898
        %v4900 = vmul.f32 %v4895, %v4899
        %4901 = vst.msk [vmem:[%s547] sm:$0xff] %vm4889, %v4900
        %s4902 = sand.u32 %s360, 1
        %s4903 = scalar_lea.sflag [#allocation4], %s4902
        %s4904 = sand.u32 %s360, 1
        %s4905 = smul.addr %s4904, 8
        %s4906 = scalar_lea.vmem [#allocation10], %s4905
        // Predicated region
        $region97: #{lenet_forward.1} parent=79 // pred_check
          %p4907 = pneg %p370
        $region98: #{lenet_forward.1} parent=79 // pred_check_branch
          %4909 = sbr.rel (%p4907) target = $region100
        $region99: #{lenet_forward.1} parent=79 // pred_region
          %s4911 = ssub.s32 128, 128
          %4912 = vsyncadd %s4903, %s4911
          %s4913 = smul.addr %s32, 128
          %s4914 = scalar_lea.hbm %s15, %s4913
          %s4916 = sshll.u32 %s4906, 4
          %s4917 = int_to_ptr.vmem [resolvable:$true] %s4916
          %4919 = dma.vmem_to_hbm [thread:$0]  %s4917, 128, %s4914, %s4903
        $region100: #{lenet_forward.1} parent=79 // pred_fallthru
          _
      $region80: #{lenet_forward.1} parent=5 // pred_fallthru
        _
      %p4920 = scmp.le.s32.totalorder 2, %s27
      // Predicated region
      $region101: #{lenet_forward.1} parent=5 // pred_check
        %p4921 = pneg %p4920
      $region102: #{lenet_forward.1} parent=5 // pred_check_branch
        %4923 = sbr.rel (%p4921) target = $region104
      $region103: #{lenet_forward.1} parent=5 // pred_region
        %s4924 = ssub.s32 %s27, 2
        // Predicated region
        $region105: #{lenet_forward.1} parent=103 // pred_check
          %p4925 = pneg %p376
        $region106: #{lenet_forward.1} parent=103 // pred_check_branch
          %4927 = sbr.rel (%p4925) target = $region108
        $region107: #{lenet_forward.1} parent=103 // pred_region
          %s4928 = sand.u32 %s361, 1
          %s4929 = scalar_lea.sflag [#allocation4], %s4928
          %s4930 = sand.u32 %s361, 1
          %s4931 = smul.addr %s4930, 8
          %s4932 = scalar_lea.vmem [#allocation10], %s4931
          %4933 = dma.done %s4929, 128
        $region108: #{lenet_forward.1} parent=103 // pred_fallthru
          _
      $region104: #{lenet_forward.1} parent=5 // pred_fallthru
        _
    $region6: #{lenet_forward.1} parent=1 // loop_footer
      %s31 = sadd.s32 1, %s27
    $region7: #{lenet_forward.1} parent=1 // loop_footer_branch
      %26 = sbr.rel target = $region3
    $region8: #{lenet_forward.1} parent=1 // loop_exit
      _
    %4934 = vsyncpa [#allocation3], 1
    %s4935 = scalar_lea.sflag [#allocation3], 1
    %4936 = vsyncpa %s4935, 1
    %4937 = vsyncpa [#allocation6], 1
    %4938 = vsyncpa [#allocation9], 1
    %4939 = vsyncpa [#allocation4], 1
    %s4940 = scalar_lea.sflag [#allocation4], 1
    %4941 = vsyncpa %s4940, 1

</llo_original>
